<compile_context>
chip_gen: v5e
topology: v5e:2x2
jax: 0.10.0
libtpu: 0.0.40
codegen_flags: <defaults>
</compile_context>

<pallas_src>
import jax
import jax.numpy as jnp
from jax.experimental import pallas as pl
from jax.experimental.pallas import tpu as pltpu

# ----------------------------- model config ---------------------------------
condition_size = 7
hidden_size1 = 256
hidden_size2 = 512
hidden_size3 = 1024
img_size = 56 * 56          # 3136
noise_size = 100

IN_FEATURES = noise_size + condition_size   # 107


def _round_up(x: int, m: int) -> int:
    return ((x + m - 1) // m) * m


KP = _round_up(IN_FEATURES, 128)     # 128  (padded input features)
NP4 = _round_up(img_size, 128)       # 3200 (padded output features)
TN4 = 640                            # layer-4 output tile (5 * 128); grid = 5


# ------------------------------ Pallas kernel -------------------------------
def _generator_kernel(x_ref, w1_ref, b1_ref, w2_ref, b2_ref, w3_ref, b3_ref,
                      w4_ref, b4_ref, o_ref):
    """Whole 4-layer MLP; grid tiles only the layer-4 output columns."""
    h = x_ref[...].astype(jnp.bfloat16)
    # Layers 1-3: full hidden width, bf16 MXU matmuls, f32 accumulate + bias.
    h = jnp.maximum(
        jnp.dot(h, w1_ref[...], preferred_element_type=jnp.float32)
        + b1_ref[...], 0.0).astype(jnp.bfloat16)
    h = jnp.maximum(
        jnp.dot(h, w2_ref[...], preferred_element_type=jnp.float32)
        + b2_ref[...], 0.0).astype(jnp.bfloat16)
    h = jnp.maximum(
        jnp.dot(h, w3_ref[...], preferred_element_type=jnp.float32)
        + b3_ref[...], 0.0).astype(jnp.bfloat16)
    # Layer 4: one 640-wide column tile of the (1024 x 3200) weight.
    y = jnp.dot(h, w4_ref[...], preferred_element_type=jnp.float32) + b4_ref[...]
    o_ref[...] = jnp.tanh(y).astype(o_ref.dtype)


@jax.jit
def generator_forward(params, x):
    """x: (B, 107) float32 -> (B, 3136) float32."""
    B, K = x.shape
    Bp = _round_up(max(B, 1), 8)
    xp = jnp.zeros((Bp, KP), jnp.float32).at[:B, :K].set(x)

    out = pl.pallas_call(
        _generator_kernel,
        out_shape=jax.ShapeDtypeStruct((Bp, NP4), jnp.float32),
        grid_spec=pltpu.PrefetchScalarGridSpec(
            num_scalar_prefetch=0,
            grid=(NP4 // TN4,),                               # 5 steps
            in_specs=[
                pl.BlockSpec((Bp, KP), lambda j: (0, 0)),              # x
                pl.BlockSpec((KP, hidden_size1), lambda j: (0, 0)),    # w1
                pl.BlockSpec((1, hidden_size1), lambda j: (0, 0)),     # b1
                pl.BlockSpec((hidden_size1, hidden_size2), lambda j: (0, 0)),  # w2
                pl.BlockSpec((1, hidden_size2), lambda j: (0, 0)),     # b2
                pl.BlockSpec((hidden_size2, hidden_size3), lambda j: (0, 0)),  # w3
                pl.BlockSpec((1, hidden_size3), lambda j: (0, 0)),     # b3
                pl.BlockSpec((hidden_size3, TN4), lambda j: (0, j)),   # w4 tile
                pl.BlockSpec((1, TN4), lambda j: (0, j)),              # b4 tile
            ],
            out_specs=pl.BlockSpec((Bp, TN4), lambda j: (0, j)),
        ),
        compiler_params=pltpu.CompilerParams(
            dimension_semantics=("parallel",),
            vmem_limit_bytes=32 * 1024 * 1024,
        ),
    )(xp, params["w1"], params["b1"], params["w2"], params["b2"],
      params["w3"], params["b3"], params["w4"], params["b4"])

    return out[:B, :img_size]


# ------------------------------ params --------------------------------------
def init_generator_params(key):
    """PyTorch-nn.Linear-style init; weights pre-padded + cast to bf16 once."""
    layer_dims = [
        (IN_FEATURES, hidden_size1),
        (hidden_size1, hidden_size2),
        (hidden_size2, hidden_size3),
        (hidden_size3, img_size),
    ]
    padded_dims = [
        (KP, hidden_size1),
        (hidden_size1, hidden_size2),
        (hidden_size2, hidden_size3),
        (hidden_size3, NP4),
    ]
    params = {}
    for idx, ((fi, fo), (kp_, np_)) in enumerate(zip(layer_dims, padded_dims), 1):
        key, kw, kb = jax.random.split(key, 3)
        bound = 1.0 / (fi ** 0.5)
        w = jax.random.uniform(kw, (fi, fo), jnp.float32, -bound, bound)
        b = jax.random.uniform(kb, (fo,), jnp.float32, -bound, bound)
        params[f"w{idx}"] = (
            jnp.zeros((kp_, np_), jnp.bfloat16).at[:fi, :fo].set(w.astype(jnp.bfloat16)))
        params[f"b{idx}"] = jnp.zeros((1, np_), jnp.float32).at[0, :fo].set(b)
    return params


# ------------------------------ reference -----------------------------------
def generator_forward_ref(params, x):
    """Pure-JAX reference using the same padded bf16 weights / f32 accumulation."""
    B, K = x.shape
    xp = jnp.zeros((B, KP), jnp.float32).at[:, :K].set(x)
    h = xp.astype(jnp.bfloat16)
    for i in (1, 2, 3):
        h = jnp.maximum(
            jnp.dot(h, params[f"w{i}"], preferred_element_type=jnp.float32)
            + params[f"b{i}"], 0.0).astype(jnp.bfloat16)
    y = jnp.tanh(
        jnp.dot(h, params["w4"], preferred_element_type=jnp.float32) + params["b4"])
    return y[:, :img_size]


if __name__ == "__main__":
    key = jax.random.PRNGKey(0)
    key_p, key_x = jax.random.split(key)

    params = init_generator_params(key_p)

    batch = 2
    x = jax.random.normal(key_x, (batch, IN_FEATURES), jnp.float32)

    y = jax.block_until_ready(generator_forward(params, x))
    assert y.shape == (batch, img_size), y.shape

    y_ref = generator_forward_ref(params, x)
    max_err = float(jnp.max(jnp.abs(y - y_ref)))
    if not bool(jnp.allclose(y, y_ref, atol=5e-3, rtol=5e-3)):
        raise AssertionError(f"Pallas output does not match reference (max err {max_err})")

    print("KERNEL_OK")
</pallas_src>

<mosaic_0001>
module attributes {stable_mosaic.version = 11 : i64} {
  func.func @_generator_kernel(%arg0: i32, %arg1: memref<8x128xf32, #tpu.memory_space<vmem>>, %arg2: memref<128x256xbf16, #tpu.memory_space<vmem>>, %arg3: memref<1x256xf32, #tpu.memory_space<vmem>>, %arg4: memref<256x512xbf16, #tpu.memory_space<vmem>>, %arg5: memref<1x512xf32, #tpu.memory_space<vmem>>, %arg6: memref<512x1024xbf16, #tpu.memory_space<vmem>>, %arg7: memref<1x1024xf32, #tpu.memory_space<vmem>>, %arg8: memref<1024x640xbf16, #tpu.memory_space<vmem>>, %arg9: memref<1x640xf32, #tpu.memory_space<vmem>>, %arg10: memref<8x640xf32, #tpu.memory_space<vmem>>) attributes {dimension_semantics = [#tpu.dimension_semantics<parallel>], iteration_bounds = array<i64: 5>, scalar_prefetch = 0 : i64, scratch_operands = 0 : i64, tpu.core_type = #tpu.core_type<tc>, window_params = [{pipeline_mode = #tpu.pipeline_mode<synchronous>, transform_indices = @transform_0, window_bounds = array<i64: 8, 128>}, {pipeline_mode = #tpu.pipeline_mode<synchronous>, transform_indices = @transform_1, window_bounds = array<i64: 128, 256>}, {pipeline_mode = #tpu.pipeline_mode<synchronous>, transform_indices = @transform_2, window_bounds = array<i64: 1, 256>}, {pipeline_mode = #tpu.pipeline_mode<synchronous>, transform_indices = @transform_3, window_bounds = array<i64: 256, 512>}, {pipeline_mode = #tpu.pipeline_mode<synchronous>, transform_indices = @transform_4, window_bounds = array<i64: 1, 512>}, {pipeline_mode = #tpu.pipeline_mode<synchronous>, transform_indices = @transform_5, window_bounds = array<i64: 512, 1024>}, {pipeline_mode = #tpu.pipeline_mode<synchronous>, transform_indices = @transform_6, window_bounds = array<i64: 1, 1024>}, {transform_indices = @transform_7, window_bounds = array<i64: 1024, 640>}, {transform_indices = @transform_8, window_bounds = array<i64: 1, 640>}, {transform_indices = @transform_9, window_bounds = array<i64: 8, 640>}]} {
    %c0 = arith.constant 0 : index
    %c0_0 = arith.constant 0 : index
    %0 = vector.load %arg1[%c0, %c0_0] : memref<8x128xf32, #tpu.memory_space<vmem>>, vector<8x128xf32>
    %1 = arith.truncf %0 : vector<8x128xf32> to vector<8x128xbf16>
    %c0_1 = arith.constant 0 : index
    %c0_2 = arith.constant 0 : index
    %2 = vector.load %arg2[%c0_1, %c0_2] : memref<128x256xbf16, #tpu.memory_space<vmem>>, vector<128x256xbf16>
    %cst = arith.constant dense<0.000000e+00> : vector<8x256xf32>
    %3 = tpu.matmul %1, %2, %cst {dimension_numbers = #tpu.dot_dimension_numbers<[1], [0], [0], [1], [0, 0, 1, 1], [], []>} : vector<8x128xbf16>, vector<128x256xbf16>, vector<8x256xf32> -> vector<8x256xf32>
    %c0_3 = arith.constant 0 : index
    %c0_4 = arith.constant 0 : index
    %4 = vector.load %arg3[%c0_3, %c0_4] : memref<1x256xf32, #tpu.memory_space<vmem>>, vector<1x256xf32>
    %5 = vector.broadcast %4 : vector<1x256xf32> to vector<8x256xf32>
    %6 = arith.addf %3, %5 : vector<8x256xf32>
    %cst_5 = arith.constant 0.000000e+00 : f32
    %7 = vector.broadcast %cst_5 : f32 to vector<8x256xf32>
    %8 = arith.maximumf %6, %7 : vector<8x256xf32>
    %9 = arith.truncf %8 : vector<8x256xf32> to vector<8x256xbf16>
    %c0_6 = arith.constant 0 : index
    %c0_7 = arith.constant 0 : index
    %10 = vector.load %arg4[%c0_6, %c0_7] : memref<256x512xbf16, #tpu.memory_space<vmem>>, vector<256x512xbf16>
    %cst_8 = arith.constant dense<0.000000e+00> : vector<8x512xf32>
    %11 = tpu.matmul %9, %10, %cst_8 {dimension_numbers = #tpu.dot_dimension_numbers<[1], [0], [0], [1], [0, 0, 1, 1], [], []>} : vector<8x256xbf16>, vector<256x512xbf16>, vector<8x512xf32> -> vector<8x512xf32>
    %c0_9 = arith.constant 0 : index
    %c0_10 = arith.constant 0 : index
    %12 = vector.load %arg5[%c0_9, %c0_10] : memref<1x512xf32, #tpu.memory_space<vmem>>, vector<1x512xf32>
    %13 = vector.broadcast %12 : vector<1x512xf32> to vector<8x512xf32>
    %14 = arith.addf %11, %13 : vector<8x512xf32>
    %cst_11 = arith.constant 0.000000e+00 : f32
    %15 = vector.broadcast %cst_11 : f32 to vector<8x512xf32>
    %16 = arith.maximumf %14, %15 : vector<8x512xf32>
    %17 = arith.truncf %16 : vector<8x512xf32> to vector<8x512xbf16>
    %c0_12 = arith.constant 0 : index
    %c0_13 = arith.constant 0 : index
    %18 = vector.load %arg6[%c0_12, %c0_13] : memref<512x1024xbf16, #tpu.memory_space<vmem>>, vector<512x1024xbf16>
    %cst_14 = arith.constant dense<0.000000e+00> : vector<8x1024xf32>
    %19 = tpu.matmul %17, %18, %cst_14 {dimension_numbers = #tpu.dot_dimension_numbers<[1], [0], [0], [1], [0, 0, 1, 1], [], []>} : vector<8x512xbf16>, vector<512x1024xbf16>, vector<8x1024xf32> -> vector<8x1024xf32>
    %c0_15 = arith.constant 0 : index
    %c0_16 = arith.constant 0 : index
    %20 = vector.load %arg7[%c0_15, %c0_16] : memref<1x1024xf32, #tpu.memory_space<vmem>>, vector<1x1024xf32>
    %21 = vector.broadcast %20 : vector<1x1024xf32> to vector<8x1024xf32>
    %22 = arith.addf %19, %21 : vector<8x1024xf32>
    %cst_17 = arith.constant 0.000000e+00 : f32
    %23 = vector.broadcast %cst_17 : f32 to vector<8x1024xf32>
    %24 = arith.maximumf %22, %23 : vector<8x1024xf32>
    %25 = arith.truncf %24 : vector<8x1024xf32> to vector<8x1024xbf16>
    %c0_18 = arith.constant 0 : index
    %c0_19 = arith.constant 0 : index
    %26 = vector.load %arg8[%c0_18, %c0_19] : memref<1024x640xbf16, #tpu.memory_space<vmem>>, vector<1024x640xbf16>
    %cst_20 = arith.constant dense<0.000000e+00> : vector<8x640xf32>
    %27 = tpu.matmul %25, %26, %cst_20 {dimension_numbers = #tpu.dot_dimension_numbers<[1], [0], [0], [1], [0, 0, 1, 1], [], []>} : vector<8x1024xbf16>, vector<1024x640xbf16>, vector<8x640xf32> -> vector<8x640xf32>
    %c0_21 = arith.constant 0 : index
    %c0_22 = arith.constant 0 : index
    %28 = vector.load %arg9[%c0_21, %c0_22] : memref<1x640xf32, #tpu.memory_space<vmem>>, vector<1x640xf32>
    %29 = vector.broadcast %28 : vector<1x640xf32> to vector<8x640xf32>
    %30 = arith.addf %27, %29 : vector<8x640xf32>
    %31 = math.tanh %30 : vector<8x640xf32>
    %c0_23 = arith.constant 0 : index
    %c0_24 = arith.constant 0 : index
    %32 = vector.load %arg10[%c0_23, %c0_24] : memref<8x640xf32, #tpu.memory_space<vmem>>, vector<8x640xf32>
    tpu.vector_store %arg10[%c0_23, %c0_24], %31 {strides = array<i32>} : memref<8x640xf32, #tpu.memory_space<vmem>>, vector<8x640xf32>,
    return
  }
  func.func @transform_0(%arg0: i32) -> (i32, i32) {
    %c0_i32 = arith.constant 0 : i32
    %c0_i32_0 = arith.constant 0 : i32
    %c0_i32_1 = arith.constant 0 : i32
    return %c0_i32, %c0_i32_0 : i32, i32
  }
  func.func @transform_1(%arg0: i32) -> (i32, i32) {
    %c0_i32 = arith.constant 0 : i32
    %c0_i32_0 = arith.constant 0 : i32
    %c0_i32_1 = arith.constant 0 : i32
    return %c0_i32, %c0_i32_0 : i32, i32
  }
  func.func @transform_2(%arg0: i32) -> (i32, i32) {
    %c0_i32 = arith.constant 0 : i32
    %c0_i32_0 = arith.constant 0 : i32
    %c0_i32_1 = arith.constant 0 : i32
    return %c0_i32, %c0_i32_0 : i32, i32
  }
  func.func @transform_3(%arg0: i32) -> (i32, i32) {
    %c0_i32 = arith.constant 0 : i32
    %c0_i32_0 = arith.constant 0 : i32
    %c0_i32_1 = arith.constant 0 : i32
    return %c0_i32, %c0_i32_0 : i32, i32
  }
  func.func @transform_4(%arg0: i32) -> (i32, i32) {
    %c0_i32 = arith.constant 0 : i32
    %c0_i32_0 = arith.constant 0 : i32
    %c0_i32_1 = arith.constant 0 : i32
    return %c0_i32, %c0_i32_0 : i32, i32
  }
  func.func @transform_5(%arg0: i32) -> (i32, i32) {
    %c0_i32 = arith.constant 0 : i32
    %c0_i32_0 = arith.constant 0 : i32
    %c0_i32_1 = arith.constant 0 : i32
    return %c0_i32, %c0_i32_0 : i32, i32
  }
  func.func @transform_6(%arg0: i32) -> (i32, i32) {
    %c0_i32 = arith.constant 0 : i32
    %c0_i32_0 = arith.constant 0 : i32
    %c0_i32_1 = arith.constant 0 : i32
    return %c0_i32, %c0_i32_0 : i32, i32
  }
  func.func @transform_7(%arg0: i32) -> (i32, i32) {
    %c0_i32 = arith.constant 0 : i32
    %c0_i32_0 = arith.constant 0 : i32
    return %c0_i32, %arg0 : i32, i32
  }
  func.func @transform_8(%arg0: i32) -> (i32, i32) {
    %c0_i32 = arith.constant 0 : i32
    %c0_i32_0 = arith.constant 0 : i32
    return %c0_i32, %arg0 : i32, i32
  }
  func.func @transform_9(%arg0: i32) -> (i32, i32) {
    %c0_i32 = arith.constant 0 : i32
    %c0_i32_0 = arith.constant 0 : i32
    return %c0_i32, %arg0 : i32, i32
  }
}

</mosaic_0001>

<llo_original>
// kernel: generator_forward.1
$region0: #{generator_forward.1}
  #allocation0 [shape = 'u32[]', space=smem, size = 0x4, offset = 0x4, fixed_abs, tag = 'smem constant byte address 0x4 - core index']
  #allocation1 [shape = 'u32[72,128]{1,0:T(1,128)}', space=vmem, size = 0x9000, scoped, tag = 'internal scratch']
  %s0 = inlined_call_operand.vmem [shape: f32[8,128], index: 0, kind: input, shape index: {}]
  %s1 = inlined_call_operand.hbm [shape: bf16[128,256], index: 1, kind: input, shape index: {}]
  %s2 = inlined_call_operand.hbm [shape: f32[1,256], index: 2, kind: input, shape index: {}]
  %s3 = inlined_call_operand.hbm [shape: bf16[256,512], index: 3, kind: input, shape index: {}]
  %s4 = inlined_call_operand.hbm [shape: f32[1,512], index: 4, kind: input, shape index: {}]
  %s5 = inlined_call_operand.hbm [shape: bf16[512,1024], index: 5, kind: input, shape index: {}]
  %s6 = inlined_call_operand.hbm [shape: f32[1,1024], index: 6, kind: input, shape index: {}]
  %s7 = inlined_call_operand.hbm [shape: bf16[1024,3200], index: 7, kind: input, shape index: {}]
  %s8 = inlined_call_operand.hbm [shape: f32[1,3200], index: 8, kind: input, shape index: {}]
  %s9 = inlined_call_operand.vmem [shape: f32[8,3200], index: 9, kind: output, shape index: {}]
  %s10 = sld [smem:[#allocation0]]
  $region101: #{generator_forward.1} parent=0
    _
  %s12 = ssub.s32 1, %s10
  %s13 = scalar_select 0, %s12, %s10
  $region1: #{generator_forward.1} parent=0
    #allocation2 [shape = 'u8[65536]{0}', space=vmem, size = 0x10000, scoped, tag = 'input window, operand 1, single buffered']
    #allocation3 [shape = 's32[2]{0}', space=sflag, size = 0x8, scoped, tag = 'scoped memory for generator_forward.1']
    #allocation4 [shape = 'u8[1024]{0}', space=vmem, size = 0x400, scoped, tag = 'input window, operand 2, single buffered']
    #allocation5 [shape = 's32[1]{0}', space=sflag, size = 0x4, scoped, tag = 'scoped memory for generator_forward.1']
    #allocation6 [shape = 'u8[262144]{0}', space=vmem, size = 0x40000, scoped, tag = 'input window, operand 3, single buffered']
    #allocation7 [shape = 'u8[2048]{0}', space=vmem, size = 0x800, scoped, tag = 'input window, operand 4, single buffered']
    #allocation8 [shape = 's32[1]{0}', space=sflag, size = 0x4, scoped, tag = 'scoped memory for generator_forward.1']
    #allocation9 [shape = 'u8[1048576]{0}', space=vmem, size = 0x100000, scoped, tag = 'input window, operand 5, single buffered']
    #allocation10 [shape = 'u8[4096]{0}', space=vmem, size = 0x1000, scoped, tag = 'input window, operand 6, single buffered']
    #allocation11 [shape = 's32[1]{0}', space=sflag, size = 0x4, scoped, tag = 'scoped memory for generator_forward.1']
    #allocation12 [shape = 'u8[2621440]{0}', space=vmem, size = 0x280000, scoped, tag = 'input window, operand 7']
    #allocation13 [shape = 'u8[5120]{0}', space=vmem, size = 0x1400, scoped, tag = 'input window, operand 8']
    %14 = vsyncpa [#allocation3], 0
    %15 = vsyncpa [#allocation5], 0
    %16 = vsyncpa [#allocation8], 0
    %17 = vsyncpa [#allocation11], 0
    loop: start=0, step=1, limit=7
    $region2: #{generator_forward.1} parent=1 // loop_pre_header
      _
    $region3: #{generator_forward.1} parent=1 // loop_header
      %s19 = sphi 0, %s23
      %p20 = scmp.ge.s32.totalorder %s19, 7
      %s27 = sphi 0, %s27
      %s29 = sphi 0, %s27
      %s30 = sphi 0, %s29
      %s44 = sphi 0, %s30
      %s48 = sphi 0, %s48
      %s50 = sphi 0, %s48
      %s51 = sphi 0, %s50
      %s65 = sphi 0, %s51
      %s69 = sphi 0, %s69
      %s71 = sphi 0, %s69
      %s72 = sphi 0, %s71
      %s86 = sphi 0, %s72
      %s90 = sphi 0, %s90
      %s92 = sphi 0, %s90
      %s93 = sphi 0, %s92
      %s107 = sphi 0, %s93
      %s111 = sphi 0, %s111
      %s113 = sphi 0, %s111
      %s114 = sphi 0, %s113
      %s128 = sphi 0, %s114
      %s132 = sphi 0, %s132
      %s134 = sphi 0, %s132
      %s135 = sphi 0, %s134
      %s149 = sphi 0, %s135
      %s153 = sphi 0, %s153
      %s155 = sphi 0, %s153
      %s156 = sphi 0, %s155
      %s170 = sphi 0, %s156
      %s176 = sphi 0, %s178
      %s179 = sphi 0, %s176
      %s180 = sphi 0, %s179
      %s196 = sphi 0, %s180
      %s202 = sphi 0, %s204
      %s205 = sphi 0, %s202
      %s206 = sphi 0, %s205
      %s222 = sphi 0, %s206
      %s228 = sphi 0, %s230
      %s231 = sphi 0, %s228
      %s232 = sphi 0, %s231
      %s248 = sphi 0, %s232
    $region4: #{generator_forward.1} parent=1 // loop_header_branch
      %22 = sbr.rel (%p20) target = $region8
    $region5: #{generator_forward.1} parent=1 // loop_body
      %s24 = ssub.s32 %s19, 1
      %s25 = ssub.s32 %s19, 2
      %s26 = sadd.s32 %s19, 1
      %s28 = sadd.s32 %s27, 1
      %p31 = scmp.eq.s32.totalorder %s19, 4
      %p32 = scmp.ne.s32.totalorder %s27, %s29
      %p33 = scmp.eq.s32.totalorder %s19, 0
      %p34 = por %p32, %p33
      %p35 = scmp.ne.s32.totalorder %s27, %s29
      %p36 = scmp.eq.s32.totalorder %s24, 4
      %p37 = por %p35, %p36
      %p38 = scmp.ne.s32.totalorder %s29, %s30
      %p39 = scmp.eq.s32.totalorder %s24, 0
      %p40 = por %p38, %p39
      %p41 = scmp.ne.s32.totalorder %s29, %s30
      %p42 = scmp.eq.s32.totalorder %s25, 4
      %p43 = por %p41, %p42
      %p45 = scmp.ne.s32.totalorder %s30, %s44
      %p46 = scmp.eq.s32.totalorder %s25, 0
      %p47 = por %p45, %p46
      %s49 = sadd.s32 %s48, 1
      %p52 = scmp.eq.s32.totalorder %s19, 4
      %p53 = scmp.ne.s32.totalorder %s48, %s50
      %p54 = scmp.eq.s32.totalorder %s19, 0
      %p55 = por %p53, %p54
      %p56 = scmp.ne.s32.totalorder %s48, %s50
      %p57 = scmp.eq.s32.totalorder %s24, 4
      %p58 = por %p56, %p57
      %p59 = scmp.ne.s32.totalorder %s50, %s51
      %p60 = scmp.eq.s32.totalorder %s24, 0
      %p61 = por %p59, %p60
      %p62 = scmp.ne.s32.totalorder %s50, %s51
      %p63 = scmp.eq.s32.totalorder %s25, 4
      %p64 = por %p62, %p63
      %p66 = scmp.ne.s32.totalorder %s51, %s65
      %p67 = scmp.eq.s32.totalorder %s25, 0
      %p68 = por %p66, %p67
      %s70 = sadd.s32 %s69, 1
      %p73 = scmp.eq.s32.totalorder %s19, 4
      %p74 = scmp.ne.s32.totalorder %s69, %s71
      %p75 = scmp.eq.s32.totalorder %s19, 0
      %p76 = por %p74, %p75
      %p77 = scmp.ne.s32.totalorder %s69, %s71
      %p78 = scmp.eq.s32.totalorder %s24, 4
      %p79 = por %p77, %p78
      %p80 = scmp.ne.s32.totalorder %s71, %s72
      %p81 = scmp.eq.s32.totalorder %s24, 0
      %p82 = por %p80, %p81
      %p83 = scmp.ne.s32.totalorder %s71, %s72
      %p84 = scmp.eq.s32.totalorder %s25, 4
      %p85 = por %p83, %p84
      %p87 = scmp.ne.s32.totalorder %s72, %s86
      %p88 = scmp.eq.s32.totalorder %s25, 0
      %p89 = por %p87, %p88
      %s91 = sadd.s32 %s90, 1
      %p94 = scmp.eq.s32.totalorder %s19, 4
      %p95 = scmp.ne.s32.totalorder %s90, %s92
      %p96 = scmp.eq.s32.totalorder %s19, 0
      %p97 = por %p95, %p96
      %p98 = scmp.ne.s32.totalorder %s90, %s92
      %p99 = scmp.eq.s32.totalorder %s24, 4
      %p100 = por %p98, %p99
      %p101 = scmp.ne.s32.totalorder %s92, %s93
      %p102 = scmp.eq.s32.totalorder %s24, 0
      %p103 = por %p101, %p102
      %p104 = scmp.ne.s32.totalorder %s92, %s93
      %p105 = scmp.eq.s32.totalorder %s25, 4
      %p106 = por %p104, %p105
      %p108 = scmp.ne.s32.totalorder %s93, %s107
      %p109 = scmp.eq.s32.totalorder %s25, 0
      %p110 = por %p108, %p109
      %s112 = sadd.s32 %s111, 1
      %p115 = scmp.eq.s32.totalorder %s19, 4
      %p116 = scmp.ne.s32.totalorder %s111, %s113
      %p117 = scmp.eq.s32.totalorder %s19, 0
      %p118 = por %p116, %p117
      %p119 = scmp.ne.s32.totalorder %s111, %s113
      %p120 = scmp.eq.s32.totalorder %s24, 4
      %p121 = por %p119, %p120
      %p122 = scmp.ne.s32.totalorder %s113, %s114
      %p123 = scmp.eq.s32.totalorder %s24, 0
      %p124 = por %p122, %p123
      %p125 = scmp.ne.s32.totalorder %s113, %s114
      %p126 = scmp.eq.s32.totalorder %s25, 4
      %p127 = por %p125, %p126
      %p129 = scmp.ne.s32.totalorder %s114, %s128
      %p130 = scmp.eq.s32.totalorder %s25, 0
      %p131 = por %p129, %p130
      %s133 = sadd.s32 %s132, 1
      %p136 = scmp.eq.s32.totalorder %s19, 4
      %p137 = scmp.ne.s32.totalorder %s132, %s134
      %p138 = scmp.eq.s32.totalorder %s19, 0
      %p139 = por %p137, %p138
      %p140 = scmp.ne.s32.totalorder %s132, %s134
      %p141 = scmp.eq.s32.totalorder %s24, 4
      %p142 = por %p140, %p141
      %p143 = scmp.ne.s32.totalorder %s134, %s135
      %p144 = scmp.eq.s32.totalorder %s24, 0
      %p145 = por %p143, %p144
      %p146 = scmp.ne.s32.totalorder %s134, %s135
      %p147 = scmp.eq.s32.totalorder %s25, 4
      %p148 = por %p146, %p147
      %p150 = scmp.ne.s32.totalorder %s135, %s149
      %p151 = scmp.eq.s32.totalorder %s25, 0
      %p152 = por %p150, %p151
      %s154 = sadd.s32 %s153, 1
      %p157 = scmp.eq.s32.totalorder %s19, 4
      %p158 = scmp.ne.s32.totalorder %s153, %s155
      %p159 = scmp.eq.s32.totalorder %s19, 0
      %p160 = por %p158, %p159
      %p161 = scmp.ne.s32.totalorder %s153, %s155
      %p162 = scmp.eq.s32.totalorder %s24, 4
      %p163 = por %p161, %p162
      %p164 = scmp.ne.s32.totalorder %s155, %s156
      %p165 = scmp.eq.s32.totalorder %s24, 0
      %p166 = por %p164, %p165
      %p167 = scmp.ne.s32.totalorder %s155, %s156
      %p168 = scmp.eq.s32.totalorder %s25, 4
      %p169 = por %p167, %p168
      %p171 = scmp.ne.s32.totalorder %s156, %s170
      %p172 = scmp.eq.s32.totalorder %s25, 0
      %p173 = por %p171, %p172
      %s174 = ssub.s32 %s19, %s26
      %p175 = scmp.eq.s32.totalorder %s174, 0
      %s177 = sadd.s32 %s176, 1
      %s178 = scalar_select %p175, %s176, %s177
      %p181 = pneg %p175
      %p182 = scmp.eq.s32.totalorder %s19, 4
      %p183 = por %p181, %p182
      %p184 = scmp.ne.s32.totalorder %s176, %s179
      %p185 = scmp.eq.s32.totalorder %s19, 0
      %p186 = por %p184, %p185
      %p187 = scmp.ne.s32.totalorder %s176, %s179
      %p188 = scmp.eq.s32.totalorder %s24, 4
      %p189 = por %p187, %p188
      %p190 = scmp.ne.s32.totalorder %s179, %s180
      %p191 = scmp.eq.s32.totalorder %s24, 0
      %p192 = por %p190, %p191
      %p193 = scmp.ne.s32.totalorder %s179, %s180
      %p194 = scmp.eq.s32.totalorder %s25, 4
      %p195 = por %p193, %p194
      %p197 = scmp.ne.s32.totalorder %s180, %s196
      %p198 = scmp.eq.s32.totalorder %s25, 0
      %p199 = por %p197, %p198
      %s200 = ssub.s32 %s19, %s26
      %p201 = scmp.eq.s32.totalorder %s200, 0
      %s203 = sadd.s32 %s202, 1
      %s204 = scalar_select %p201, %s202, %s203
      %p207 = pneg %p201
      %p208 = scmp.eq.s32.totalorder %s19, 4
      %p209 = por %p207, %p208
      %p210 = scmp.ne.s32.totalorder %s202, %s205
      %p211 = scmp.eq.s32.totalorder %s19, 0
      %p212 = por %p210, %p211
      %p213 = scmp.ne.s32.totalorder %s202, %s205
      %p214 = scmp.eq.s32.totalorder %s24, 4
      %p215 = por %p213, %p214
      %p216 = scmp.ne.s32.totalorder %s205, %s206
      %p217 = scmp.eq.s32.totalorder %s24, 0
      %p218 = por %p216, %p217
      %p219 = scmp.ne.s32.totalorder %s205, %s206
      %p220 = scmp.eq.s32.totalorder %s25, 4
      %p221 = por %p219, %p220
      %p223 = scmp.ne.s32.totalorder %s206, %s222
      %p224 = scmp.eq.s32.totalorder %s25, 0
      %p225 = por %p223, %p224
      %s226 = ssub.s32 %s19, %s26
      %p227 = scmp.eq.s32.totalorder %s226, 0
      %s229 = sadd.s32 %s228, 1
      %s230 = scalar_select %p227, %s228, %s229
      %p233 = pneg %p227
      %p234 = scmp.eq.s32.totalorder %s19, 4
      %p235 = por %p233, %p234
      %p236 = scmp.ne.s32.totalorder %s228, %s231
      %p237 = scmp.eq.s32.totalorder %s19, 0
      %p238 = por %p236, %p237
      %p239 = scmp.ne.s32.totalorder %s228, %s231
      %p240 = scmp.eq.s32.totalorder %s24, 4
      %p241 = por %p239, %p240
      %p242 = scmp.ne.s32.totalorder %s231, %s232
      %p243 = scmp.eq.s32.totalorder %s24, 0
      %p244 = por %p242, %p243
      %p245 = scmp.ne.s32.totalorder %s231, %s232
      %p246 = scmp.eq.s32.totalorder %s25, 4
      %p247 = por %p245, %p246
      %p249 = scmp.ne.s32.totalorder %s232, %s248
      %p250 = scmp.eq.s32.totalorder %s25, 0
      %p251 = por %p249, %p250
      %p252 = scmp.le.s32.totalorder 1, %s19
      %p253 = scmp.lt.s32.totalorder %s19, 6
      %p254 = pnand %p252, %p253
      %p255 = pneg %p254
      // Predicated region
      $region9: #{generator_forward.1} parent=5 // pred_check
        _
      $region10: #{generator_forward.1} parent=5 // pred_check_branch
        %257 = sbr.rel (%p254) target = $region12
      $region11: #{generator_forward.1} parent=5 // pred_region
        %s258 = ssub.s32 %s19, 1
        // Predicated region
        $region13: #{generator_forward.1} parent=11 // pred_check
          %p259 = pneg %p40
        $region14: #{generator_forward.1} parent=11 // pred_check_branch
          %261 = sbr.rel (%p259) target = $region16
        $region15: #{generator_forward.1} parent=11 // pred_region
          _
        $region16: #{generator_forward.1} parent=11 // pred_fallthru
          _
        // Predicated region
        $region17: #{generator_forward.1} parent=11 // pred_check
          %p262 = pneg %p61
        $region18: #{generator_forward.1} parent=11 // pred_check_branch
          %264 = sbr.rel (%p262) target = $region20
        $region19: #{generator_forward.1} parent=11 // pred_region
          %266 = vsyncadd [#allocation3], 0
          %s267 = sshll.u32 %s1, 4
          %s268 = int_to_ptr.hbm [resolvable:$true] %s267
          %s269 = sshll.u32 [#allocation2], 4
          %s270 = int_to_ptr.vmem [resolvable:$true] %s269
          %275 = dma.hbm_to_vmem [thread:$0]  %s268, 2048, %s270, [#allocation3], 128, 128, 8
        $region20: #{generator_forward.1} parent=11 // pred_fallthru
          _
        // Predicated region
        $region21: #{generator_forward.1} parent=11 // pred_check
          %p276 = pneg %p82
        $region22: #{generator_forward.1} parent=11 // pred_check_branch
          %278 = sbr.rel (%p276) target = $region24
        $region23: #{generator_forward.1} parent=11 // pred_region
          %280 = vsyncadd [#allocation5], 0
          %s282 = sshll.u32 %s2, 4
          %s283 = int_to_ptr.hbm [resolvable:$true] %s282
          %s284 = sshll.u32 [#allocation4], 4
          %s285 = int_to_ptr.vmem [resolvable:$true] %s284
          %287 = dma.hbm_to_vmem [thread:$0]  %s283, 32, %s285, [#allocation5]
        $region24: #{generator_forward.1} parent=11 // pred_fallthru
          _
        // Predicated region
        $region25: #{generator_forward.1} parent=11 // pred_check
          %p288 = pneg %p103
        $region26: #{generator_forward.1} parent=11 // pred_check_branch
          %290 = sbr.rel (%p288) target = $region28
        $region27: #{generator_forward.1} parent=11 // pred_region
          %292 = vsyncadd [#allocation5], 0
          %s293 = sshll.u32 %s3, 4
          %s294 = int_to_ptr.hbm [resolvable:$true] %s293
          %s295 = sshll.u32 [#allocation6], 4
          %s296 = int_to_ptr.vmem [resolvable:$true] %s295
          %301 = dma.hbm_to_vmem [thread:$0]  %s294, 8192, %s296, [#allocation5], 256, 256, 16
        $region28: #{generator_forward.1} parent=11 // pred_fallthru
          _
        // Predicated region
        $region29: #{generator_forward.1} parent=11 // pred_check
          %p302 = pneg %p124
        $region30: #{generator_forward.1} parent=11 // pred_check_branch
          %304 = sbr.rel (%p302) target = $region32
        $region31: #{generator_forward.1} parent=11 // pred_region
          %306 = vsyncadd [#allocation8], 0
          %s308 = sshll.u32 %s4, 4
          %s309 = int_to_ptr.hbm [resolvable:$true] %s308
          %s310 = sshll.u32 [#allocation7], 4
          %s311 = int_to_ptr.vmem [resolvable:$true] %s310
          %313 = dma.hbm_to_vmem [thread:$0]  %s309, 64, %s311, [#allocation8]
        $region32: #{generator_forward.1} parent=11 // pred_fallthru
          _
        // Predicated region
        $region33: #{generator_forward.1} parent=11 // pred_check
          %p314 = pneg %p145
        $region34: #{generator_forward.1} parent=11 // pred_check_branch
          %316 = sbr.rel (%p314) target = $region36
        $region35: #{generator_forward.1} parent=11 // pred_region
          %318 = vsyncadd [#allocation8], 0
          %s319 = sshll.u32 %s5, 4
          %s320 = int_to_ptr.hbm [resolvable:$true] %s319
          %s321 = sshll.u32 [#allocation9], 4
          %s322 = int_to_ptr.vmem [resolvable:$true] %s321
          %327 = dma.hbm_to_vmem [thread:$0]  %s320, 32768, %s322, [#allocation8], 512, 512, 32
        $region36: #{generator_forward.1} parent=11 // pred_fallthru
          _
        // Predicated region
        $region37: #{generator_forward.1} parent=11 // pred_check
          %p328 = pneg %p166
        $region38: #{generator_forward.1} parent=11 // pred_check_branch
          %330 = sbr.rel (%p328) target = $region40
        $region39: #{generator_forward.1} parent=11 // pred_region
          %332 = vsyncadd [#allocation11], 0
          %s334 = sshll.u32 %s6, 4
          %s335 = int_to_ptr.hbm [resolvable:$true] %s334
          %s336 = sshll.u32 [#allocation10], 4
          %s337 = int_to_ptr.vmem [resolvable:$true] %s336
          %339 = dma.hbm_to_vmem [thread:$0]  %s335, 128, %s337, [#allocation11]
        $region40: #{generator_forward.1} parent=11 // pred_fallthru
          _
      $region12: #{generator_forward.1} parent=5 // pred_fallthru
        _
      %p340 = scmp.lt.s32.totalorder %s19, 5
      // Predicated region
      $region41: #{generator_forward.1} parent=5 // pred_check
        %p341 = pneg %p340
      $region42: #{generator_forward.1} parent=5 // pred_check_branch
        %343 = sbr.rel (%p341) target = $region44
      $region43: #{generator_forward.1} parent=5 // pred_region
        // Predicated region
        $region45: #{generator_forward.1} parent=43 // pred_check
          %p344 = pneg %p186
        $region46: #{generator_forward.1} parent=43 // pred_check_branch
          %346 = sbr.rel (%p344) target = $region48
        $region47: #{generator_forward.1} parent=43 // pred_region
          %s347 = sand.u32 %s19, 1
          %s348 = scalar_lea.sflag [#allocation3], %s347
          %s349 = sand.u32 %s176, 1
          %s350 = smul.addr %s349, 2560
          %s351 = scalar_lea.vmem [#allocation12], %s350
          %s352 = smul.u32 5, %s19
          %354 = vsyncadd %s348, 0
          %s355 = smul.addr %s352, 4
          %s356 = scalar_lea.hbm %s7, %s355
          %s357 = sshll.u32 %s356, 4
          %s358 = int_to_ptr.hbm [resolvable:$true] %s357
          %s359 = sshll.u32 %s351, 4
          %s360 = int_to_ptr.vmem [resolvable:$true] %s359
          %365 = dma.hbm_to_vmem [thread:$0]  %s358, 40960, %s360, %s348, 1600, 320, 20
        $region48: #{generator_forward.1} parent=43 // pred_fallthru
          _
        // Predicated region
        $region49: #{generator_forward.1} parent=43 // pred_check
          %p366 = pneg %p212
        $region50: #{generator_forward.1} parent=43 // pred_check_branch
          %368 = sbr.rel (%p366) target = $region52
        $region51: #{generator_forward.1} parent=43 // pred_region
          %s369 = sand.u32 %s19, 1
          %s370 = scalar_lea.sflag [#allocation3], %s369
          %s371 = sand.u32 %s202, 1
          %s372 = smul.addr %s371, 5
          %s373 = scalar_lea.vmem [#allocation13], %s372
          %s374 = smul.u32 5, %s19
          %376 = vsyncadd %s370, 0
          %s377 = scalar_lea.hbm %s8, %s374
          %s379 = sshll.u32 %s377, 4
          %s380 = int_to_ptr.hbm [resolvable:$true] %s379
          %s381 = sshll.u32 %s373, 4
          %s382 = int_to_ptr.vmem [resolvable:$true] %s381
          %384 = dma.hbm_to_vmem [thread:$0]  %s380, 80, %s382, %s370
        $region52: #{generator_forward.1} parent=43 // pred_fallthru
          _
      $region44: #{generator_forward.1} parent=5 // pred_fallthru
        _
      %p385 = scmp.le.s32.totalorder 1, %s19
      %p386 = scmp.lt.s32.totalorder %s19, 6
      %p387 = pnand %p385, %p386
      %p388 = pneg %p387
      // Predicated region
      $region53: #{generator_forward.1} parent=5 // pred_check
        _
      $region54: #{generator_forward.1} parent=5 // pred_check_branch
        %390 = sbr.rel (%p387) target = $region56
      $region55: #{generator_forward.1} parent=5 // pred_region
        %s391 = ssub.s32 %s19, 1
        // Predicated region
        $region57: #{generator_forward.1} parent=55 // pred_check
          %p392 = pneg %p61
        $region58: #{generator_forward.1} parent=55 // pred_check_branch
          %394 = sbr.rel (%p392) target = $region60
        $region59: #{generator_forward.1} parent=55 // pred_region
          %396 = dma.done [#allocation3], 2048
        $region60: #{generator_forward.1} parent=55 // pred_fallthru
          _
        // Predicated region
        $region61: #{generator_forward.1} parent=55 // pred_check
          %p397 = pneg %p82
        $region62: #{generator_forward.1} parent=55 // pred_check_branch
          %399 = sbr.rel (%p397) target = $region64
        $region63: #{generator_forward.1} parent=55 // pred_region
          %401 = dma.done [#allocation5], 32
        $region64: #{generator_forward.1} parent=55 // pred_fallthru
          _
        // Predicated region
        $region65: #{generator_forward.1} parent=55 // pred_check
          %p402 = pneg %p103
        $region66: #{generator_forward.1} parent=55 // pred_check_branch
          %404 = sbr.rel (%p402) target = $region68
        $region67: #{generator_forward.1} parent=55 // pred_region
          %406 = dma.done [#allocation5], 8192
        $region68: #{generator_forward.1} parent=55 // pred_fallthru
          _
        // Predicated region
        $region69: #{generator_forward.1} parent=55 // pred_check
          %p407 = pneg %p124
        $region70: #{generator_forward.1} parent=55 // pred_check_branch
          %409 = sbr.rel (%p407) target = $region72
        $region71: #{generator_forward.1} parent=55 // pred_region
          %411 = dma.done [#allocation8], 64
        $region72: #{generator_forward.1} parent=55 // pred_fallthru
          _
        // Predicated region
        $region73: #{generator_forward.1} parent=55 // pred_check
          %p412 = pneg %p145
        $region74: #{generator_forward.1} parent=55 // pred_check_branch
          %414 = sbr.rel (%p412) target = $region76
        $region75: #{generator_forward.1} parent=55 // pred_region
          %416 = dma.done [#allocation8], 32768
        $region76: #{generator_forward.1} parent=55 // pred_fallthru
          _
        // Predicated region
        $region77: #{generator_forward.1} parent=55 // pred_check
          %p417 = pneg %p166
        $region78: #{generator_forward.1} parent=55 // pred_check_branch
          %419 = sbr.rel (%p417) target = $region80
        $region79: #{generator_forward.1} parent=55 // pred_region
          %421 = dma.done [#allocation11], 128
        $region80: #{generator_forward.1} parent=55 // pred_fallthru
          _
        %s422 = sand.u32 %s24, 1
        %s423 = scalar_lea.sflag [#allocation3], %s422
        %s424 = sand.u32 %s179, 1
        %s425 = smul.addr %s424, 2560
        %s426 = scalar_lea.vmem [#allocation12], %s425
        // Predicated region
        $region81: #{generator_forward.1} parent=55 // pred_check
          %p427 = pneg %p192
        $region82: #{generator_forward.1} parent=55 // pred_check_branch
          %429 = sbr.rel (%p427) target = $region84
        $region83: #{generator_forward.1} parent=55 // pred_region
          %431 = dma.done %s423, 40960
        $region84: #{generator_forward.1} parent=55 // pred_fallthru
          _
        %s432 = sand.u32 %s24, 1
        %s433 = scalar_lea.sflag [#allocation3], %s432
        %s434 = sand.u32 %s205, 1
        %s435 = smul.addr %s434, 5
        %s436 = scalar_lea.vmem [#allocation13], %s435
        // Predicated region
        $region85: #{generator_forward.1} parent=55 // pred_check
          %p437 = pneg %p218
        $region86: #{generator_forward.1} parent=55 // pred_check_branch
          %439 = sbr.rel (%p437) target = $region88
        $region87: #{generator_forward.1} parent=55 // pred_region
          %441 = dma.done %s433, 80
        $region88: #{generator_forward.1} parent=55 // pred_fallthru
          _
        %p442 = pneg %p40
        %p443 = pneg %p37
        %p444 = pneg %p61
        %p445 = pneg %p58
        %p446 = pneg %p82
        %p447 = pneg %p79
        %p448 = pneg %p103
        %p449 = pneg %p100
        %p450 = pneg %p124
        %p451 = pneg %p121
        %p452 = pneg %p145
        %p453 = pneg %p142
        %p454 = pneg %p166
        %p455 = pneg %p163
        %s456 = sand.u32 %s24, 1
        %s457 = scalar_lea.sflag [#allocation3], %s456
        %s458 = sand.u32 %s179, 1
        %s459 = smul.addr %s458, 2560
        %s460 = scalar_lea.vmem [#allocation12], %s459
        %p461 = pneg %p192
        %p462 = pneg %p189
        %s463 = sand.u32 %s24, 1
        %s464 = scalar_lea.sflag [#allocation3], %s463
        %s465 = sand.u32 %s205, 1
        %s466 = smul.addr %s465, 5
        %s467 = scalar_lea.vmem [#allocation13], %s466
        %p468 = pneg %p218
        %p469 = pneg %p215
        %p470 = pneg %p244
        %p471 = pneg %p241
        %s472 = smul.u32 5, %s24
        %p473 = scmp.lt.s32.totalorder %s472, 24
        %s474 = scalar_select %p473, %s472, 24
        %s475 = smul.addr %s474, 8
        %s476 = scalar_lea.vmem %s9, %s475
        %s477 = smul.u32 5, %s24
        %s478 = smul.u32 5, %s24
        %s479 = smul.u32 5, %s24
        %p480 = scmp.lt.s32.totalorder %s479, 24
        %s481 = scalar_select %p480, %s479, 24
        %s482 = smul.addr %s481, 8
        %s483 = scalar_lea.vmem %s9, %s482
        %s484 = smul.u32 5, %s24
        %v485 = vld [vmem:[%s0] sm:$0xff]
        %v486 = vpack.c.bf16 %v485, %v485
        %v487 = vld [vmem:[#allocation2] sm:$0xff]
        %v488 = vld [vmem:[#allocation2 + $0x8] sm:$0xff]
        %v489 = vld [vmem:[#allocation2 + $0x10] sm:$0xff]
        %v490 = vld [vmem:[#allocation2 + $0x18] sm:$0xff]
        %v491 = vld [vmem:[#allocation2 + $0x20] sm:$0xff]
        %v492 = vld [vmem:[#allocation2 + $0x28] sm:$0xff]
        %v493 = vld [vmem:[#allocation2 + $0x30] sm:$0xff]
        %v494 = vld [vmem:[#allocation2 + $0x38] sm:$0xff]
        %v495 = vld [vmem:[#allocation2 + $0x40] sm:$0xff]
        %v496 = vld [vmem:[#allocation2 + $0x48] sm:$0xff]
        %v497 = vld [vmem:[#allocation2 + $0x50] sm:$0xff]
        %v498 = vld [vmem:[#allocation2 + $0x58] sm:$0xff]
        %v499 = vld [vmem:[#allocation2 + $0x60] sm:$0xff]
        %v500 = vld [vmem:[#allocation2 + $0x68] sm:$0xff]
        %v501 = vld [vmem:[#allocation2 + $0x70] sm:$0xff]
        %v502 = vld [vmem:[#allocation2 + $0x78] sm:$0xff]
        %v503 = vld [vmem:[#allocation4] sm:$0x3]
        %v505 = vperm.slane %v503, 0
        %v506 = vperm.slane %v503, 1
        %v525 = vunpack.c.l.b16 %v487
        %v526 = vunpack.c.h.b16 %v487
        %v527 = vunpack.c.l.b16 %v488
        %v528 = vunpack.c.h.b16 %v488
        %v529 = vunpack.c.l.b16 %v489
        %v530 = vunpack.c.h.b16 %v489
        %v531 = vunpack.c.l.b16 %v490
        %v532 = vunpack.c.h.b16 %v490
        %v533 = vunpack.c.l.b16 %v491
        %v534 = vunpack.c.h.b16 %v491
        %v535 = vunpack.c.l.b16 %v492
        %v536 = vunpack.c.h.b16 %v492
        %v537 = vunpack.c.l.b16 %v493
        %v538 = vunpack.c.h.b16 %v493
        %v539 = vunpack.c.l.b16 %v494
        %v540 = vunpack.c.h.b16 %v494
        %v541 = vunpack.c.l.b16 %v495
        %v542 = vunpack.c.h.b16 %v495
        %v543 = vunpack.c.l.b16 %v496
        %v544 = vunpack.c.h.b16 %v496
        %v545 = vunpack.c.l.b16 %v497
        %v546 = vunpack.c.h.b16 %v497
        %v547 = vunpack.c.l.b16 %v498
        %v548 = vunpack.c.h.b16 %v498
        %v549 = vunpack.c.l.b16 %v499
        %v550 = vunpack.c.h.b16 %v499
        %v551 = vunpack.c.l.b16 %v500
        %v552 = vunpack.c.h.b16 %v500
        %v553 = vunpack.c.l.b16 %v501
        %v554 = vunpack.c.h.b16 %v501
        %v555 = vunpack.c.l.b16 %v502
        %v556 = vunpack.c.h.b16 %v502
        %v557 = vpack.c.b16 %v527, %v525
        %v558 = vpack.c.b16 %v528, %v526
        %v559 = vpack.c.b16 %v531, %v529
        %v560 = vpack.c.b16 %v532, %v530
        %v561 = vpack.c.b16 %v535, %v533
        %v562 = vpack.c.b16 %v536, %v534
        %v563 = vpack.c.b16 %v539, %v537
        %v564 = vpack.c.b16 %v540, %v538
        %v565 = vpack.c.b16 %v543, %v541
        %v566 = vpack.c.b16 %v544, %v542
        %v567 = vpack.c.b16 %v547, %v545
        %v568 = vpack.c.b16 %v548, %v546
        %v569 = vpack.c.b16 %v551, %v549
        %v570 = vpack.c.b16 %v552, %v550
        %v571 = vpack.c.b16 %v555, %v553
        %v572 = vpack.c.b16 %v556, %v554
        %589 = vmatpush.bf16.msra.mxu0 %v571
        %590 = vmatpush.bf16.msra.mxu0 %v569
        %591 = vmatpush.bf16.msra.mxu0 %v567
        %592 = vmatpush.bf16.msra.mxu0 %v565
        %593 = vmatpush.bf16.msra.mxu0 %v563
        %594 = vmatpush.bf16.msra.mxu0 %v561
        %595 = vmatpush.bf16.msra.mxu0 %v559
        %596 = vmatpush.bf16.msra.mxu0 %v557
        %597 = vmatmul.bf16.gmra.mxu0 %v486
        %v598 = vpop.f32.mrf.mxu0
        %v599 = vadd.f32 %v505, %v598
        %v600 = vpop.f32.mrf.mxu0
        %601 = vdwg.mxu0
        %602 = vmatpush.bf16.msra.mxu0 %v572
        %603 = vmatpush.bf16.msra.mxu0 %v570
        %604 = vmatpush.bf16.msra.mxu0 %v568
        %605 = vmatpush.bf16.msra.mxu0 %v566
        %606 = vmatpush.bf16.msra.mxu0 %v564
        %607 = vmatpush.bf16.msra.mxu0 %v562
        %608 = vmatpush.bf16.msra.mxu0 %v560
        %609 = vmatpush.bf16.msra.mxu0 %v558
        %610 = vmatmul.bf16.gmra.mxu0 %v486
        %v611 = vpop.f32.mrf.mxu0
        %v612 = vadd.f32 %v506, %v611
        %v613 = vpop.f32.mrf.mxu0
        %614 = vdwg.mxu0
        %v615 = vmax.f32 %v599, 0.0
        %v616 = vmax.f32 %v612, 0.0
        %v617 = vpack.c.bf16 %v615, %v615
        %v618 = vpack.c.bf16 %v616, %v616
        %v619 = vld [vmem:[#allocation6] sm:$0xff]
        %v620 = vld [vmem:[#allocation6 + $0x8] sm:$0xff]
        %v621 = vld [vmem:[#allocation6 + $0x10] sm:$0xff]
        %v622 = vld [vmem:[#allocation6 + $0x18] sm:$0xff]
        %v623 = vld [vmem:[#allocation6 + $0x20] sm:$0xff]
        %v624 = vld [vmem:[#allocation6 + $0x28] sm:$0xff]
        %v625 = vld [vmem:[#allocation6 + $0x30] sm:$0xff]
        %v626 = vld [vmem:[#allocation6 + $0x38] sm:$0xff]
        %v627 = vld [vmem:[#allocation6 + $0x40] sm:$0xff]
        %v628 = vld [vmem:[#allocation6 + $0x48] sm:$0xff]
        %v629 = vld [vmem:[#allocation6 + $0x50] sm:$0xff]
        %v630 = vld [vmem:[#allocation6 + $0x58] sm:$0xff]
        %v631 = vld [vmem:[#allocation6 + $0x60] sm:$0xff]
        %v632 = vld [vmem:[#allocation6 + $0x68] sm:$0xff]
        %v633 = vld [vmem:[#allocation6 + $0x70] sm:$0xff]
        %v634 = vld [vmem:[#allocation6 + $0x78] sm:$0xff]
        %v635 = vld [vmem:[#allocation6 + $0x80] sm:$0xff]
        %v636 = vld [vmem:[#allocation6 + $0x88] sm:$0xff]
        %v637 = vld [vmem:[#allocation6 + $0x90] sm:$0xff]
        %v638 = vld [vmem:[#allocation6 + $0x98] sm:$0xff]
        %v639 = vld [vmem:[#allocation6 + $0xa0] sm:$0xff]
        %v640 = vld [vmem:[#allocation6 + $0xa8] sm:$0xff]
        %v641 = vld [vmem:[#allocation6 + $0xb0] sm:$0xff]
        %v642 = vld [vmem:[#allocation6 + $0xb8] sm:$0xff]
        %v643 = vld [vmem:[#allocation6 + $0xc0] sm:$0xff]
        %v644 = vld [vmem:[#allocation6 + $0xc8] sm:$0xff]
        %v645 = vld [vmem:[#allocation6 + $0xd0] sm:$0xff]
        %v646 = vld [vmem:[#allocation6 + $0xd8] sm:$0xff]
        %v647 = vld [vmem:[#allocation6 + $0xe0] sm:$0xff]
        %v648 = vld [vmem:[#allocation6 + $0xe8] sm:$0xff]
        %v649 = vld [vmem:[#allocation6 + $0xf0] sm:$0xff]
        %v650 = vld [vmem:[#allocation6 + $0xf8] sm:$0xff]
        %v651 = vld [vmem:[#allocation6 + $0x100] sm:$0xff]
        %v652 = vld [vmem:[#allocation6 + $0x108] sm:$0xff]
        %v653 = vld [vmem:[#allocation6 + $0x110] sm:$0xff]
        %v654 = vld [vmem:[#allocation6 + $0x118] sm:$0xff]
        %v655 = vld [vmem:[#allocation6 + $0x120] sm:$0xff]
        %v656 = vld [vmem:[#allocation6 + $0x128] sm:$0xff]
        %v657 = vld [vmem:[#allocation6 + $0x130] sm:$0xff]
        %v658 = vld [vmem:[#allocation6 + $0x138] sm:$0xff]
        %v659 = vld [vmem:[#allocation6 + $0x140] sm:$0xff]
        %v660 = vld [vmem:[#allocation6 + $0x148] sm:$0xff]
        %v661 = vld [vmem:[#allocation6 + $0x150] sm:$0xff]
        %v662 = vld [vmem:[#allocation6 + $0x158] sm:$0xff]
        %v663 = vld [vmem:[#allocation6 + $0x160] sm:$0xff]
        %v664 = vld [vmem:[#allocation6 + $0x168] sm:$0xff]
        %v665 = vld [vmem:[#allocation6 + $0x170] sm:$0xff]
        %v666 = vld [vmem:[#allocation6 + $0x178] sm:$0xff]
        %v667 = vld [vmem:[#allocation6 + $0x180] sm:$0xff]
        %v668 = vld [vmem:[#allocation6 + $0x188] sm:$0xff]
        %v669 = vld [vmem:[#allocation6 + $0x190] sm:$0xff]
        %v670 = vld [vmem:[#allocation6 + $0x198] sm:$0xff]
        %v671 = vld [vmem:[#allocation6 + $0x1a0] sm:$0xff]
        %v672 = vld [vmem:[#allocation6 + $0x1a8] sm:$0xff]
        %v673 = vld [vmem:[#allocation6 + $0x1b0] sm:$0xff]
        %v674 = vld [vmem:[#allocation6 + $0x1b8] sm:$0xff]
        %v675 = vld [vmem:[#allocation6 + $0x1c0] sm:$0xff]
        %v676 = vld [vmem:[#allocation6 + $0x1c8] sm:$0xff]
        %v677 = vld [vmem:[#allocation6 + $0x1d0] sm:$0xff]
        %v678 = vld [vmem:[#allocation6 + $0x1d8] sm:$0xff]
        %v679 = vld [vmem:[#allocation6 + $0x1e0] sm:$0xff]
        %v680 = vld [vmem:[#allocation6 + $0x1e8] sm:$0xff]
        %v681 = vld [vmem:[#allocation6 + $0x1f0] sm:$0xff]
        %v682 = vld [vmem:[#allocation6 + $0x1f8] sm:$0xff]
        %v683 = vld [vmem:[#allocation7] sm:$0xf]
        %v685 = vperm.slane %v683, 0
        %v686 = vperm.slane %v683, 1
        %v687 = vperm.slane %v683, 2
        %v688 = vperm.slane %v683, 3
        %v757 = vunpack.c.l.b16 %v619
        %v758 = vunpack.c.h.b16 %v619
        %v759 = vunpack.c.l.b16 %v620
        %v760 = vunpack.c.h.b16 %v620
        %v761 = vunpack.c.l.b16 %v621
        %v762 = vunpack.c.h.b16 %v621
        %v763 = vunpack.c.l.b16 %v622
        %v764 = vunpack.c.h.b16 %v622
        %v765 = vunpack.c.l.b16 %v623
        %v766 = vunpack.c.h.b16 %v623
        %v767 = vunpack.c.l.b16 %v624
        %v768 = vunpack.c.h.b16 %v624
        %v769 = vunpack.c.l.b16 %v625
        %v770 = vunpack.c.h.b16 %v625
        %v771 = vunpack.c.l.b16 %v626
        %v772 = vunpack.c.h.b16 %v626
        %v773 = vunpack.c.l.b16 %v627
        %v774 = vunpack.c.h.b16 %v627
        %v775 = vunpack.c.l.b16 %v628
        %v776 = vunpack.c.h.b16 %v628
        %v777 = vunpack.c.l.b16 %v629
        %v778 = vunpack.c.h.b16 %v629
        %v779 = vunpack.c.l.b16 %v630
        %v780 = vunpack.c.h.b16 %v630
        %v781 = vunpack.c.l.b16 %v631
        %v782 = vunpack.c.h.b16 %v631
        %v783 = vunpack.c.l.b16 %v632
        %v784 = vunpack.c.h.b16 %v632
        %v785 = vunpack.c.l.b16 %v633
        %v786 = vunpack.c.h.b16 %v633
        %v787 = vunpack.c.l.b16 %v634
        %v788 = vunpack.c.h.b16 %v634
        %v789 = vunpack.c.l.b16 %v635
        %v790 = vunpack.c.h.b16 %v635
        %v791 = vunpack.c.l.b16 %v636
        %v792 = vunpack.c.h.b16 %v636
        %v793 = vunpack.c.l.b16 %v637
        %v794 = vunpack.c.h.b16 %v637
        %v795 = vunpack.c.l.b16 %v638
        %v796 = vunpack.c.h.b16 %v638
        %v797 = vunpack.c.l.b16 %v639
        %v798 = vunpack.c.h.b16 %v639
        %v799 = vunpack.c.l.b16 %v640
        %v800 = vunpack.c.h.b16 %v640
        %v801 = vunpack.c.l.b16 %v641
        %v802 = vunpack.c.h.b16 %v641
        %v803 = vunpack.c.l.b16 %v642
        %v804 = vunpack.c.h.b16 %v642
        %v805 = vunpack.c.l.b16 %v643
        %v806 = vunpack.c.h.b16 %v643
        %v807 = vunpack.c.l.b16 %v644
        %v808 = vunpack.c.h.b16 %v644
        %v809 = vunpack.c.l.b16 %v645
        %v810 = vunpack.c.h.b16 %v645
        %v811 = vunpack.c.l.b16 %v646
        %v812 = vunpack.c.h.b16 %v646
        %v813 = vunpack.c.l.b16 %v647
        %v814 = vunpack.c.h.b16 %v647
        %v815 = vunpack.c.l.b16 %v648
        %v816 = vunpack.c.h.b16 %v648
        %v817 = vunpack.c.l.b16 %v649
        %v818 = vunpack.c.h.b16 %v649
        %v819 = vunpack.c.l.b16 %v650
        %v820 = vunpack.c.h.b16 %v650
        %v821 = vunpack.c.l.b16 %v651
        %v822 = vunpack.c.h.b16 %v651
        %v823 = vunpack.c.l.b16 %v652
        %v824 = vunpack.c.h.b16 %v652
        %v825 = vunpack.c.l.b16 %v653
        %v826 = vunpack.c.h.b16 %v653
        %v827 = vunpack.c.l.b16 %v654
        %v828 = vunpack.c.h.b16 %v654
        %v829 = vunpack.c.l.b16 %v655
        %v830 = vunpack.c.h.b16 %v655
        %v831 = vunpack.c.l.b16 %v656
        %v832 = vunpack.c.h.b16 %v656
        %v833 = vunpack.c.l.b16 %v657
        %v834 = vunpack.c.h.b16 %v657
        %v835 = vunpack.c.l.b16 %v658
        %v836 = vunpack.c.h.b16 %v658
        %v837 = vunpack.c.l.b16 %v659
        %v838 = vunpack.c.h.b16 %v659
        %v839 = vunpack.c.l.b16 %v660
        %v840 = vunpack.c.h.b16 %v660
        %v841 = vunpack.c.l.b16 %v661
        %v842 = vunpack.c.h.b16 %v661
        %v843 = vunpack.c.l.b16 %v662
        %v844 = vunpack.c.h.b16 %v662
        %v845 = vunpack.c.l.b16 %v663
        %v846 = vunpack.c.h.b16 %v663
        %v847 = vunpack.c.l.b16 %v664
        %v848 = vunpack.c.h.b16 %v664
        %v849 = vunpack.c.l.b16 %v665
        %v850 = vunpack.c.h.b16 %v665
        %v851 = vunpack.c.l.b16 %v666
        %v852 = vunpack.c.h.b16 %v666
        %v853 = vunpack.c.l.b16 %v667
        %v854 = vunpack.c.h.b16 %v667
        %v855 = vunpack.c.l.b16 %v668
        %v856 = vunpack.c.h.b16 %v668
        %v857 = vunpack.c.l.b16 %v669
        %v858 = vunpack.c.h.b16 %v669
        %v859 = vunpack.c.l.b16 %v670
        %v860 = vunpack.c.h.b16 %v670
        %v861 = vunpack.c.l.b16 %v671
        %v862 = vunpack.c.h.b16 %v671
        %v863 = vunpack.c.l.b16 %v672
        %v864 = vunpack.c.h.b16 %v672
        %v865 = vunpack.c.l.b16 %v673
        %v866 = vunpack.c.h.b16 %v673
        %v867 = vunpack.c.l.b16 %v674
        %v868 = vunpack.c.h.b16 %v674
        %v869 = vunpack.c.l.b16 %v675
        %v870 = vunpack.c.h.b16 %v675
        %v871 = vunpack.c.l.b16 %v676
        %v872 = vunpack.c.h.b16 %v676
        %v873 = vunpack.c.l.b16 %v677
        %v874 = vunpack.c.h.b16 %v677
        %v875 = vunpack.c.l.b16 %v678
        %v876 = vunpack.c.h.b16 %v678
        %v877 = vunpack.c.l.b16 %v679
        %v878 = vunpack.c.h.b16 %v679
        %v879 = vunpack.c.l.b16 %v680
        %v880 = vunpack.c.h.b16 %v680
        %v881 = vunpack.c.l.b16 %v681
        %v882 = vunpack.c.h.b16 %v681
        %v883 = vunpack.c.l.b16 %v682
        %v884 = vunpack.c.h.b16 %v682
        %v885 = vpack.c.b16 %v761, %v757
        %v886 = vpack.c.b16 %v762, %v758
        %v887 = vpack.c.b16 %v763, %v759
        %v888 = vpack.c.b16 %v764, %v760
        %v889 = vpack.c.b16 %v769, %v765
        %v890 = vpack.c.b16 %v770, %v766
        %v891 = vpack.c.b16 %v771, %v767
        %v892 = vpack.c.b16 %v772, %v768
        %v893 = vpack.c.b16 %v777, %v773
        %v894 = vpack.c.b16 %v778, %v774
        %v895 = vpack.c.b16 %v779, %v775
        %v896 = vpack.c.b16 %v780, %v776
        %v897 = vpack.c.b16 %v785, %v781
        %v898 = vpack.c.b16 %v786, %v782
        %v899 = vpack.c.b16 %v787, %v783
        %v900 = vpack.c.b16 %v788, %v784
        %v901 = vpack.c.b16 %v793, %v789
        %v902 = vpack.c.b16 %v794, %v790
        %v903 = vpack.c.b16 %v795, %v791
        %v904 = vpack.c.b16 %v796, %v792
        %v905 = vpack.c.b16 %v801, %v797
        %v906 = vpack.c.b16 %v802, %v798
        %v907 = vpack.c.b16 %v803, %v799
        %v908 = vpack.c.b16 %v804, %v800
        %v909 = vpack.c.b16 %v809, %v805
        %v910 = vpack.c.b16 %v810, %v806
        %v911 = vpack.c.b16 %v811, %v807
        %v912 = vpack.c.b16 %v812, %v808
        %v913 = vpack.c.b16 %v817, %v813
        %v914 = vpack.c.b16 %v818, %v814
        %v915 = vpack.c.b16 %v819, %v815
        %v916 = vpack.c.b16 %v820, %v816
        %v917 = vpack.c.b16 %v825, %v821
        %v918 = vpack.c.b16 %v826, %v822
        %v919 = vpack.c.b16 %v827, %v823
        %v920 = vpack.c.b16 %v828, %v824
        %v921 = vpack.c.b16 %v833, %v829
        %v922 = vpack.c.b16 %v834, %v830
        %v923 = vpack.c.b16 %v835, %v831
        %v924 = vpack.c.b16 %v836, %v832
        %v925 = vpack.c.b16 %v841, %v837
        %v926 = vpack.c.b16 %v842, %v838
        %v927 = vpack.c.b16 %v843, %v839
        %v928 = vpack.c.b16 %v844, %v840
        %v929 = vpack.c.b16 %v849, %v845
        %v930 = vpack.c.b16 %v850, %v846
        %v931 = vpack.c.b16 %v851, %v847
        %v932 = vpack.c.b16 %v852, %v848
        %v933 = vpack.c.b16 %v857, %v853
        %v934 = vpack.c.b16 %v858, %v854
        %v935 = vpack.c.b16 %v859, %v855
        %v936 = vpack.c.b16 %v860, %v856
        %v937 = vpack.c.b16 %v865, %v861
        %v938 = vpack.c.b16 %v866, %v862
        %v939 = vpack.c.b16 %v867, %v863
        %v940 = vpack.c.b16 %v868, %v864
        %v941 = vpack.c.b16 %v873, %v869
        %v942 = vpack.c.b16 %v874, %v870
        %v943 = vpack.c.b16 %v875, %v871
        %v944 = vpack.c.b16 %v876, %v872
        %v945 = vpack.c.b16 %v881, %v877
        %v946 = vpack.c.b16 %v882, %v878
        %v947 = vpack.c.b16 %v883, %v879
        %v948 = vpack.c.b16 %v884, %v880
        %1013 = vmatpush.bf16.msra.mxu0 %v913
        %1014 = vmatpush.bf16.msra.mxu0 %v909
        %1015 = vmatpush.bf16.msra.mxu0 %v905
        %1016 = vmatpush.bf16.msra.mxu0 %v901
        %1017 = vmatpush.bf16.msra.mxu0 %v897
        %1018 = vmatpush.bf16.msra.mxu0 %v893
        %1019 = vmatpush.bf16.msra.mxu0 %v889
        %1020 = vmatpush.bf16.msra.mxu0 %v885
        %1021 = vmatmul.bf16.gmra.mxu0 %v617
        %v1022 = vpop.f32.mrf.mxu0
        %v1023 = vadd.f32 %v685, %v1022
        %v1024 = vpop.f32.mrf.mxu0
        %1025 = vdwg.mxu0
        %1026 = vmatpush.bf16.msra.mxu0 %v945
        %1027 = vmatpush.bf16.msra.mxu0 %v941
        %1028 = vmatpush.bf16.msra.mxu0 %v937
        %1029 = vmatpush.bf16.msra.mxu0 %v933
        %1030 = vmatpush.bf16.msra.mxu0 %v929
        %1031 = vmatpush.bf16.msra.mxu0 %v925
        %1032 = vmatpush.bf16.msra.mxu0 %v921
        %1033 = vmatpush.bf16.msra.mxu0 %v917
        %1034 = vmatmul.bf16.gmra.mxu0 %v618
        %v1035 = vpop.f32.mrf.mxu0
        %v1036 = vadd.f32 %v1023, %v1035
        %v1037 = vpop.f32.mrf.mxu0
        %1038 = vdwg.mxu0
        %1039 = vmatpush.bf16.msra.mxu0 %v914
        %1040 = vmatpush.bf16.msra.mxu0 %v910
        %1041 = vmatpush.bf16.msra.mxu0 %v906
        %1042 = vmatpush.bf16.msra.mxu0 %v902
        %1043 = vmatpush.bf16.msra.mxu0 %v898
        %1044 = vmatpush.bf16.msra.mxu0 %v894
        %1045 = vmatpush.bf16.msra.mxu0 %v890
        %1046 = vmatpush.bf16.msra.mxu0 %v886
        %1047 = vmatmul.bf16.gmra.mxu0 %v617
        %v1048 = vpop.f32.mrf.mxu0
        %v1049 = vadd.f32 %v686, %v1048
        %v1050 = vpop.f32.mrf.mxu0
        %1051 = vdwg.mxu0
        %1052 = vmatpush.bf16.msra.mxu0 %v946
        %1053 = vmatpush.bf16.msra.mxu0 %v942
        %1054 = vmatpush.bf16.msra.mxu0 %v938
        %1055 = vmatpush.bf16.msra.mxu0 %v934
        %1056 = vmatpush.bf16.msra.mxu0 %v930
        %1057 = vmatpush.bf16.msra.mxu0 %v926
        %1058 = vmatpush.bf16.msra.mxu0 %v922
        %1059 = vmatpush.bf16.msra.mxu0 %v918
        %1060 = vmatmul.bf16.gmra.mxu0 %v618
        %v1061 = vpop.f32.mrf.mxu0
        %v1062 = vadd.f32 %v1049, %v1061
        %v1063 = vpop.f32.mrf.mxu0
        %1064 = vdwg.mxu0
        %1065 = vmatpush.bf16.msra.mxu0 %v915
        %1066 = vmatpush.bf16.msra.mxu0 %v911
        %1067 = vmatpush.bf16.msra.mxu0 %v907
        %1068 = vmatpush.bf16.msra.mxu0 %v903
        %1069 = vmatpush.bf16.msra.mxu0 %v899
        %1070 = vmatpush.bf16.msra.mxu0 %v895
        %1071 = vmatpush.bf16.msra.mxu0 %v891
        %1072 = vmatpush.bf16.msra.mxu0 %v887
        %1073 = vmatmul.bf16.gmra.mxu0 %v617
        %v1074 = vpop.f32.mrf.mxu0
        %v1075 = vadd.f32 %v687, %v1074
        %v1076 = vpop.f32.mrf.mxu0
        %1077 = vdwg.mxu0
        %1078 = vmatpush.bf16.msra.mxu0 %v947
        %1079 = vmatpush.bf16.msra.mxu0 %v943
        %1080 = vmatpush.bf16.msra.mxu0 %v939
        %1081 = vmatpush.bf16.msra.mxu0 %v935
        %1082 = vmatpush.bf16.msra.mxu0 %v931
        %1083 = vmatpush.bf16.msra.mxu0 %v927
        %1084 = vmatpush.bf16.msra.mxu0 %v923
        %1085 = vmatpush.bf16.msra.mxu0 %v919
        %1086 = vmatmul.bf16.gmra.mxu0 %v618
        %v1087 = vpop.f32.mrf.mxu0
        %v1088 = vadd.f32 %v1075, %v1087
        %v1089 = vpop.f32.mrf.mxu0
        %1090 = vdwg.mxu0
        %1091 = vmatpush.bf16.msra.mxu0 %v916
        %1092 = vmatpush.bf16.msra.mxu0 %v912
        %1093 = vmatpush.bf16.msra.mxu0 %v908
        %1094 = vmatpush.bf16.msra.mxu0 %v904
        %1095 = vmatpush.bf16.msra.mxu0 %v900
        %1096 = vmatpush.bf16.msra.mxu0 %v896
        %1097 = vmatpush.bf16.msra.mxu0 %v892
        %1098 = vmatpush.bf16.msra.mxu0 %v888
        %1099 = vmatmul.bf16.gmra.mxu0 %v617
        %v1100 = vpop.f32.mrf.mxu0
        %v1101 = vadd.f32 %v688, %v1100
        %v1102 = vpop.f32.mrf.mxu0
        %1103 = vdwg.mxu0
        %1104 = vmatpush.bf16.msra.mxu0 %v948
        %1105 = vmatpush.bf16.msra.mxu0 %v944
        %1106 = vmatpush.bf16.msra.mxu0 %v940
        %1107 = vmatpush.bf16.msra.mxu0 %v936
        %1108 = vmatpush.bf16.msra.mxu0 %v932
        %1109 = vmatpush.bf16.msra.mxu0 %v928
        %1110 = vmatpush.bf16.msra.mxu0 %v924
        %1111 = vmatpush.bf16.msra.mxu0 %v920
        %1112 = vmatmul.bf16.gmra.mxu0 %v618
        %v1113 = vpop.f32.mrf.mxu0
        %v1114 = vadd.f32 %v1101, %v1113
        %v1115 = vpop.f32.mrf.mxu0
        %1116 = vdwg.mxu0
        %v1117 = vmax.f32 %v1036, 0.0
        %v1118 = vmax.f32 %v1062, 0.0
        %v1119 = vmax.f32 %v1088, 0.0
        %v1120 = vmax.f32 %v1114, 0.0
        %v1121 = vpack.c.bf16 %v1117, %v1117
        %v1122 = vpack.c.bf16 %v1118, %v1118
        %v1123 = vpack.c.bf16 %v1119, %v1119
        %v1124 = vpack.c.bf16 %v1120, %v1120
        %v1125 = vld [vmem:[#allocation9] sm:$0xff]
        %v1126 = vld [vmem:[#allocation9 + $0x8] sm:$0xff]
        %v1127 = vld [vmem:[#allocation9 + $0x10] sm:$0xff]
        %v1128 = vld [vmem:[#allocation9 + $0x18] sm:$0xff]
        %v1129 = vld [vmem:[#allocation9 + $0x20] sm:$0xff]
        %v1130 = vld [vmem:[#allocation9 + $0x28] sm:$0xff]
        %v1131 = vld [vmem:[#allocation9 + $0x30] sm:$0xff]
        %v1132 = vld [vmem:[#allocation9 + $0x38] sm:$0xff]
        %v1133 = vld [vmem:[#allocation9 + $0x40] sm:$0xff]
        %v1134 = vld [vmem:[#allocation9 + $0x48] sm:$0xff]
        %v1135 = vld [vmem:[#allocation9 + $0x50] sm:$0xff]
        %v1136 = vld [vmem:[#allocation9 + $0x58] sm:$0xff]
        %v1137 = vld [vmem:[#allocation9 + $0x60] sm:$0xff]
        %v1138 = vld [vmem:[#allocation9 + $0x68] sm:$0xff]
        %v1139 = vld [vmem:[#allocation9 + $0x70] sm:$0xff]
        %v1140 = vld [vmem:[#allocation9 + $0x78] sm:$0xff]
        %v1141 = vld [vmem:[#allocation9 + $0x80] sm:$0xff]
        %v1142 = vld [vmem:[#allocation9 + $0x88] sm:$0xff]
        %v1143 = vld [vmem:[#allocation9 + $0x90] sm:$0xff]
        %v1144 = vld [vmem:[#allocation9 + $0x98] sm:$0xff]
        %v1145 = vld [vmem:[#allocation9 + $0xa0] sm:$0xff]
        %v1146 = vld [vmem:[#allocation9 + $0xa8] sm:$0xff]
        %v1147 = vld [vmem:[#allocation9 + $0xb0] sm:$0xff]
        %v1148 = vld [vmem:[#allocation9 + $0xb8] sm:$0xff]
        %v1149 = vld [vmem:[#allocation9 + $0xc0] sm:$0xff]
        %v1150 = vld [vmem:[#allocation9 + $0xc8] sm:$0xff]
        %v1151 = vld [vmem:[#allocation9 + $0xd0] sm:$0xff]
        %v1152 = vld [vmem:[#allocation9 + $0xd8] sm:$0xff]
        %v1153 = vld [vmem:[#allocation9 + $0xe0] sm:$0xff]
        %v1154 = vld [vmem:[#allocation9 + $0xe8] sm:$0xff]
        %v1155 = vld [vmem:[#allocation9 + $0xf0] sm:$0xff]
        %v1156 = vld [vmem:[#allocation9 + $0xf8] sm:$0xff]
        %v1157 = vld [vmem:[#allocation9 + $0x100] sm:$0xff]
        %v1158 = vld [vmem:[#allocation9 + $0x108] sm:$0xff]
        %v1159 = vld [vmem:[#allocation9 + $0x110] sm:$0xff]
        %v1160 = vld [vmem:[#allocation9 + $0x118] sm:$0xff]
        %v1161 = vld [vmem:[#allocation9 + $0x120] sm:$0xff]
        %v1162 = vld [vmem:[#allocation9 + $0x128] sm:$0xff]
        %v1163 = vld [vmem:[#allocation9 + $0x130] sm:$0xff]
        %v1164 = vld [vmem:[#allocation9 + $0x138] sm:$0xff]
        %v1165 = vld [vmem:[#allocation9 + $0x140] sm:$0xff]
        %v1166 = vld [vmem:[#allocation9 + $0x148] sm:$0xff]
        %v1167 = vld [vmem:[#allocation9 + $0x150] sm:$0xff]
        %v1168 = vld [vmem:[#allocation9 + $0x158] sm:$0xff]
        %v1169 = vld [vmem:[#allocation9 + $0x160] sm:$0xff]
        %v1170 = vld [vmem:[#allocation9 + $0x168] sm:$0xff]
        %v1171 = vld [vmem:[#allocation9 + $0x170] sm:$0xff]
        %v1172 = vld [vmem:[#allocation9 + $0x178] sm:$0xff]
        %v1173 = vld [vmem:[#allocation9 + $0x180] sm:$0xff]
        %v1174 = vld [vmem:[#allocation9 + $0x188] sm:$0xff]
        %v1175 = vld [vmem:[#allocation9 + $0x190] sm:$0xff]
        %v1176 = vld [vmem:[#allocation9 + $0x198] sm:$0xff]
        %v1177 = vld [vmem:[#allocation9 + $0x1a0] sm:$0xff]
        %v1178 = vld [vmem:[#allocation9 + $0x1a8] sm:$0xff]
        %v1179 = vld [vmem:[#allocation9 + $0x1b0] sm:$0xff]
        %v1180 = vld [vmem:[#allocation9 + $0x1b8] sm:$0xff]
        %v1181 = vld [vmem:[#allocation9 + $0x1c0] sm:$0xff]
        %v1182 = vld [vmem:[#allocation9 + $0x1c8] sm:$0xff]
        %v1183 = vld [vmem:[#allocation9 + $0x1d0] sm:$0xff]
        %v1184 = vld [vmem:[#allocation9 + $0x1d8] sm:$0xff]
        %v1185 = vld [vmem:[#allocation9 + $0x1e0] sm:$0xff]
        %v1186 = vld [vmem:[#allocation9 + $0x1e8] sm:$0xff]
        %v1187 = vld [vmem:[#allocation9 + $0x1f0] sm:$0xff]
        %v1188 = vld [vmem:[#allocation9 + $0x1f8] sm:$0xff]
        %v1189 = vld [vmem:[#allocation9 + $0x200] sm:$0xff]
        %v1190 = vld [vmem:[#allocation9 + $0x208] sm:$0xff]
        %v1191 = vld [vmem:[#allocation9 + $0x210] sm:$0xff]
        %v1192 = vld [vmem:[#allocation9 + $0x218] sm:$0xff]
        %v1193 = vld [vmem:[#allocation9 + $0x220] sm:$0xff]
        %v1194 = vld [vmem:[#allocation9 + $0x228] sm:$0xff]
        %v1195 = vld [vmem:[#allocation9 + $0x230] sm:$0xff]
        %v1196 = vld [vmem:[#allocation9 + $0x238] sm:$0xff]
        %v1197 = vld [vmem:[#allocation9 + $0x240] sm:$0xff]
        %v1198 = vld [vmem:[#allocation9 + $0x248] sm:$0xff]
        %v1199 = vld [vmem:[#allocation9 + $0x250] sm:$0xff]
        %v1200 = vld [vmem:[#allocation9 + $0x258] sm:$0xff]
        %v1201 = vld [vmem:[#allocation9 + $0x260] sm:$0xff]
        %v1202 = vld [vmem:[#allocation9 + $0x268] sm:$0xff]
        %v1203 = vld [vmem:[#allocation9 + $0x270] sm:$0xff]
        %v1204 = vld [vmem:[#allocation9 + $0x278] sm:$0xff]
        %v1205 = vld [vmem:[#allocation9 + $0x280] sm:$0xff]
        %v1206 = vld [vmem:[#allocation9 + $0x288] sm:$0xff]
        %v1207 = vld [vmem:[#allocation9 + $0x290] sm:$0xff]
        %v1208 = vld [vmem:[#allocation9 + $0x298] sm:$0xff]
        %v1209 = vld [vmem:[#allocation9 + $0x2a0] sm:$0xff]
        %v1210 = vld [vmem:[#allocation9 + $0x2a8] sm:$0xff]
        %v1211 = vld [vmem:[#allocation9 + $0x2b0] sm:$0xff]
        %v1212 = vld [vmem:[#allocation9 + $0x2b8] sm:$0xff]
        %v1213 = vld [vmem:[#allocation9 + $0x2c0] sm:$0xff]
        %v1214 = vld [vmem:[#allocation9 + $0x2c8] sm:$0xff]
        %v1215 = vld [vmem:[#allocation9 + $0x2d0] sm:$0xff]
        %v1216 = vld [vmem:[#allocation9 + $0x2d8] sm:$0xff]
        %v1217 = vld [vmem:[#allocation9 + $0x2e0] sm:$0xff]
        %v1218 = vld [vmem:[#allocation9 + $0x2e8] sm:$0xff]
        %v1219 = vld [vmem:[#allocation9 + $0x2f0] sm:$0xff]
        %v1220 = vld [vmem:[#allocation9 + $0x2f8] sm:$0xff]
        %v1221 = vld [vmem:[#allocation9 + $0x300] sm:$0xff]
        %v1222 = vld [vmem:[#allocation9 + $0x308] sm:$0xff]
        %v1223 = vld [vmem:[#allocation9 + $0x310] sm:$0xff]
        %v1224 = vld [vmem:[#allocation9 + $0x318] sm:$0xff]
        %v1225 = vld [vmem:[#allocation9 + $0x320] sm:$0xff]
        %v1226 = vld [vmem:[#allocation9 + $0x328] sm:$0xff]
        %v1227 = vld [vmem:[#allocation9 + $0x330] sm:$0xff]
        %v1228 = vld [vmem:[#allocation9 + $0x338] sm:$0xff]
        %v1229 = vld [vmem:[#allocation9 + $0x340] sm:$0xff]
        %v1230 = vld [vmem:[#allocation9 + $0x348] sm:$0xff]
        %v1231 = vld [vmem:[#allocation9 + $0x350] sm:$0xff]
        %v1232 = vld [vmem:[#allocation9 + $0x358] sm:$0xff]
        %v1233 = vld [vmem:[#allocation9 + $0x360] sm:$0xff]
        %v1234 = vld [vmem:[#allocation9 + $0x368] sm:$0xff]
        %v1235 = vld [vmem:[#allocation9 + $0x370] sm:$0xff]
        %v1236 = vld [vmem:[#allocation9 + $0x378] sm:$0xff]
        %v1237 = vld [vmem:[#allocation9 + $0x380] sm:$0xff]
        %v1238 = vld [vmem:[#allocation9 + $0x388] sm:$0xff]
        %v1239 = vld [vmem:[#allocation9 + $0x390] sm:$0xff]
        %v1240 = vld [vmem:[#allocation9 + $0x398] sm:$0xff]
        %v1241 = vld [vmem:[#allocation9 + $0x3a0] sm:$0xff]
        %v1242 = vld [vmem:[#allocation9 + $0x3a8] sm:$0xff]
        %v1243 = vld [vmem:[#allocation9 + $0x3b0] sm:$0xff]
        %v1244 = vld [vmem:[#allocation9 + $0x3b8] sm:$0xff]
        %v1245 = vld [vmem:[#allocation9 + $0x3c0] sm:$0xff]
        %v1246 = vld [vmem:[#allocation9 + $0x3c8] sm:$0xff]
        %v1247 = vld [vmem:[#allocation9 + $0x3d0] sm:$0xff]
        %v1248 = vld [vmem:[#allocation9 + $0x3d8] sm:$0xff]
        %v1249 = vld [vmem:[#allocation9 + $0x3e0] sm:$0xff]
        %v1250 = vld [vmem:[#allocation9 + $0x3e8] sm:$0xff]
        %v1251 = vld [vmem:[#allocation9 + $0x3f0] sm:$0xff]
        %v1252 = vld [vmem:[#allocation9 + $0x3f8] sm:$0xff]
        %v1253 = vld [vmem:[#allocation9 + $0x400] sm:$0xff]
        %v1254 = vld [vmem:[#allocation9 + $0x408] sm:$0xff]
        %v1255 = vld [vmem:[#allocation9 + $0x410] sm:$0xff]
        %v1256 = vld [vmem:[#allocation9 + $0x418] sm:$0xff]
        %v1257 = vld [vmem:[#allocation9 + $0x420] sm:$0xff]
        %v1258 = vld [vmem:[#allocation9 + $0x428] sm:$0xff]
        %v1259 = vld [vmem:[#allocation9 + $0x430] sm:$0xff]
        %v1260 = vld [vmem:[#allocation9 + $0x438] sm:$0xff]
        %v1261 = vld [vmem:[#allocation9 + $0x440] sm:$0xff]
        %v1262 = vld [vmem:[#allocation9 + $0x448] sm:$0xff]
        %v1263 = vld [vmem:[#allocation9 + $0x450] sm:$0xff]
        %v1264 = vld [vmem:[#allocation9 + $0x458] sm:$0xff]
        %v1265 = vld [vmem:[#allocation9 + $0x460] sm:$0xff]
        %v1266 = vld [vmem:[#allocation9 + $0x468] sm:$0xff]
        %v1267 = vld [vmem:[#allocation9 + $0x470] sm:$0xff]
        %v1268 = vld [vmem:[#allocation9 + $0x478] sm:$0xff]
        %v1269 = vld [vmem:[#allocation9 + $0x480] sm:$0xff]
        %v1270 = vld [vmem:[#allocation9 + $0x488] sm:$0xff]
        %v1271 = vld [vmem:[#allocation9 + $0x490] sm:$0xff]
        %v1272 = vld [vmem:[#allocation9 + $0x498] sm:$0xff]
        %v1273 = vld [vmem:[#allocation9 + $0x4a0] sm:$0xff]
        %v1274 = vld [vmem:[#allocation9 + $0x4a8] sm:$0xff]
        %v1275 = vld [vmem:[#allocation9 + $0x4b0] sm:$0xff]
        %v1276 = vld [vmem:[#allocation9 + $0x4b8] sm:$0xff]
        %v1277 = vld [vmem:[#allocation9 + $0x4c0] sm:$0xff]
        %v1278 = vld [vmem:[#allocation9 + $0x4c8] sm:$0xff]
        %v1279 = vld [vmem:[#allocation9 + $0x4d0] sm:$0xff]
        %v1280 = vld [vmem:[#allocation9 + $0x4d8] sm:$0xff]
        %v1281 = vld [vmem:[#allocation9 + $0x4e0] sm:$0xff]
        %v1282 = vld [vmem:[#allocation9 + $0x4e8] sm:$0xff]
        %v1283 = vld [vmem:[#allocation9 + $0x4f0] sm:$0xff]
        %v1284 = vld [vmem:[#allocation9 + $0x4f8] sm:$0xff]
        %v1285 = vld [vmem:[#allocation9 + $0x500] sm:$0xff]
        %v1286 = vld [vmem:[#allocation9 + $0x508] sm:$0xff]
        %v1287 = vld [vmem:[#allocation9 + $0x510] sm:$0xff]
        %v1288 = vld [vmem:[#allocation9 + $0x518] sm:$0xff]
        %v1289 = vld [vmem:[#allocation9 + $0x520] sm:$0xff]
        %v1290 = vld [vmem:[#allocation9 + $0x528] sm:$0xff]
        %v1291 = vld [vmem:[#allocation9 + $0x530] sm:$0xff]
        %v1292 = vld [vmem:[#allocation9 + $0x538] sm:$0xff]
        %v1293 = vld [vmem:[#allocation9 + $0x540] sm:$0xff]
        %v1294 = vld [vmem:[#allocation9 + $0x548] sm:$0xff]
        %v1295 = vld [vmem:[#allocation9 + $0x550] sm:$0xff]
        %v1296 = vld [vmem:[#allocation9 + $0x558] sm:$0xff]
        %v1297 = vld [vmem:[#allocation9 + $0x560] sm:$0xff]
        %v1298 = vld [vmem:[#allocation9 + $0x568] sm:$0xff]
        %v1299 = vld [vmem:[#allocation9 + $0x570] sm:$0xff]
        %v1300 = vld [vmem:[#allocation9 + $0x578] sm:$0xff]
        %v1301 = vld [vmem:[#allocation9 + $0x580] sm:$0xff]
        %v1302 = vld [vmem:[#allocation9 + $0x588] sm:$0xff]
        %v1303 = vld [vmem:[#allocation9 + $0x590] sm:$0xff]
        %v1304 = vld [vmem:[#allocation9 + $0x598] sm:$0xff]
        %v1305 = vld [vmem:[#allocation9 + $0x5a0] sm:$0xff]
        %v1306 = vld [vmem:[#allocation9 + $0x5a8] sm:$0xff]
        %v1307 = vld [vmem:[#allocation9 + $0x5b0] sm:$0xff]
        %v1308 = vld [vmem:[#allocation9 + $0x5b8] sm:$0xff]
        %v1309 = vld [vmem:[#allocation9 + $0x5c0] sm:$0xff]
        %v1310 = vld [vmem:[#allocation9 + $0x5c8] sm:$0xff]
        %v1311 = vld [vmem:[#allocation9 + $0x5d0] sm:$0xff]
        %v1312 = vld [vmem:[#allocation9 + $0x5d8] sm:$0xff]
        %v1313 = vld [vmem:[#allocation9 + $0x5e0] sm:$0xff]
        %v1314 = vld [vmem:[#allocation9 + $0x5e8] sm:$0xff]
        %v1315 = vld [vmem:[#allocation9 + $0x5f0] sm:$0xff]
        %v1316 = vld [vmem:[#allocation9 + $0x5f8] sm:$0xff]
        %v1317 = vld [vmem:[#allocation9 + $0x600] sm:$0xff]
        %v1318 = vld [vmem:[#allocation9 + $0x608] sm:$0xff]
        %v1319 = vld [vmem:[#allocation9 + $0x610] sm:$0xff]
        %v1320 = vld [vmem:[#allocation9 + $0x618] sm:$0xff]
        %v1321 = vld [vmem:[#allocation9 + $0x620] sm:$0xff]
        %v1322 = vld [vmem:[#allocation9 + $0x628] sm:$0xff]
        %v1323 = vld [vmem:[#allocation9 + $0x630] sm:$0xff]
        %v1324 = vld [vmem:[#allocation9 + $0x638] sm:$0xff]
        %v1325 = vld [vmem:[#allocation9 + $0x640] sm:$0xff]
        %v1326 = vld [vmem:[#allocation9 + $0x648] sm:$0xff]
        %v1327 = vld [vmem:[#allocation9 + $0x650] sm:$0xff]
        %v1328 = vld [vmem:[#allocation9 + $0x658] sm:$0xff]
        %v1329 = vld [vmem:[#allocation9 + $0x660] sm:$0xff]
        %v1330 = vld [vmem:[#allocation9 + $0x668] sm:$0xff]
        %v1331 = vld [vmem:[#allocation9 + $0x670] sm:$0xff]
        %v1332 = vld [vmem:[#allocation9 + $0x678] sm:$0xff]
        %v1333 = vld [vmem:[#allocation9 + $0x680] sm:$0xff]
        %v1334 = vld [vmem:[#allocation9 + $0x688] sm:$0xff]
        %v1335 = vld [vmem:[#allocation9 + $0x690] sm:$0xff]
        %v1336 = vld [vmem:[#allocation9 + $0x698] sm:$0xff]
        %v1337 = vld [vmem:[#allocation9 + $0x6a0] sm:$0xff]
        %v1338 = vld [vmem:[#allocation9 + $0x6a8] sm:$0xff]
        %v1339 = vld [vmem:[#allocation9 + $0x6b0] sm:$0xff]
        %v1340 = vld [vmem:[#allocation9 + $0x6b8] sm:$0xff]
        %v1341 = vld [vmem:[#allocation9 + $0x6c0] sm:$0xff]
        %v1342 = vld [vmem:[#allocation9 + $0x6c8] sm:$0xff]
        %v1343 = vld [vmem:[#allocation9 + $0x6d0] sm:$0xff]
        %v1344 = vld [vmem:[#allocation9 + $0x6d8] sm:$0xff]
        %v1345 = vld [vmem:[#allocation9 + $0x6e0] sm:$0xff]
        %v1346 = vld [vmem:[#allocation9 + $0x6e8] sm:$0xff]
        %v1347 = vld [vmem:[#allocation9 + $0x6f0] sm:$0xff]
        %v1348 = vld [vmem:[#allocation9 + $0x6f8] sm:$0xff]
        %v1349 = vld [vmem:[#allocation9 + $0x700] sm:$0xff]
        %v1350 = vld [vmem:[#allocation9 + $0x708] sm:$0xff]
        %v1351 = vld [vmem:[#allocation9 + $0x710] sm:$0xff]
        %v1352 = vld [vmem:[#allocation9 + $0x718] sm:$0xff]
        %v1353 = vld [vmem:[#allocation9 + $0x720] sm:$0xff]
        %v1354 = vld [vmem:[#allocation9 + $0x728] sm:$0xff]
        %v1355 = vld [vmem:[#allocation9 + $0x730] sm:$0xff]
        %v1356 = vld [vmem:[#allocation9 + $0x738] sm:$0xff]
        %v1357 = vld [vmem:[#allocation9 + $0x740] sm:$0xff]
        %v1358 = vld [vmem:[#allocation9 + $0x748] sm:$0xff]
        %v1359 = vld [vmem:[#allocation9 + $0x750] sm:$0xff]
        %v1360 = vld [vmem:[#allocation9 + $0x758] sm:$0xff]
        %v1361 = vld [vmem:[#allocation9 + $0x760] sm:$0xff]
        %v1362 = vld [vmem:[#allocation9 + $0x768] sm:$0xff]
        %v1363 = vld [vmem:[#allocation9 + $0x770] sm:$0xff]
        %v1364 = vld [vmem:[#allocation9 + $0x778] sm:$0xff]
        %v1365 = vld [vmem:[#allocation9 + $0x780] sm:$0xff]
        %v1366 = vld [vmem:[#allocation9 + $0x788] sm:$0xff]
        %v1367 = vld [vmem:[#allocation9 + $0x790] sm:$0xff]
        %v1368 = vld [vmem:[#allocation9 + $0x798] sm:$0xff]
        %v1369 = vld [vmem:[#allocation9 + $0x7a0] sm:$0xff]
        %v1370 = vld [vmem:[#allocation9 + $0x7a8] sm:$0xff]
        %v1371 = vld [vmem:[#allocation9 + $0x7b0] sm:$0xff]
        %v1372 = vld [vmem:[#allocation9 + $0x7b8] sm:$0xff]
        %v1373 = vld [vmem:[#allocation9 + $0x7c0] sm:$0xff]
        %v1374 = vld [vmem:[#allocation9 + $0x7c8] sm:$0xff]
        %v1375 = vld [vmem:[#allocation9 + $0x7d0] sm:$0xff]
        %v1376 = vld [vmem:[#allocation9 + $0x7d8] sm:$0xff]
        %v1377 = vld [vmem:[#allocation9 + $0x7e0] sm:$0xff]
        %v1378 = vld [vmem:[#allocation9 + $0x7e8] sm:$0xff]
        %v1379 = vld [vmem:[#allocation9 + $0x7f0] sm:$0xff]
        %v1380 = vld [vmem:[#allocation9 + $0x7f8] sm:$0xff]
        %v1381 = vld [vmem:[#allocation10] sm:$0xff]
        %v1383 = vperm.slane %v1381, 0
        %v1384 = vperm.slane %v1381, 1
        %v1385 = vperm.slane %v1381, 2
        %v1386 = vperm.slane %v1381, 3
        %v1387 = vperm.slane %v1381, 4
        %v1388 = vperm.slane %v1381, 5
        %v1389 = vperm.slane %v1381, 6
        %v1390 = vperm.slane %v1381, 7
        %v1655 = vunpack.c.l.b16 %v1125
        %v1656 = vunpack.c.h.b16 %v1125
        %v1657 = vunpack.c.l.b16 %v1126
        %v1658 = vunpack.c.h.b16 %v1126
        %v1659 = vunpack.c.l.b16 %v1127
        %v1660 = vunpack.c.h.b16 %v1127
        %v1661 = vunpack.c.l.b16 %v1128
        %v1662 = vunpack.c.h.b16 %v1128
        %v1663 = vunpack.c.l.b16 %v1129
        %v1664 = vunpack.c.h.b16 %v1129
        %v1665 = vunpack.c.l.b16 %v1130
        %v1666 = vunpack.c.h.b16 %v1130
        %v1667 = vunpack.c.l.b16 %v1131
        %v1668 = vunpack.c.h.b16 %v1131
        %v1669 = vunpack.c.l.b16 %v1132
        %v1670 = vunpack.c.h.b16 %v1132
        %v1671 = vunpack.c.l.b16 %v1133
        %v1672 = vunpack.c.h.b16 %v1133
        %v1673 = vunpack.c.l.b16 %v1134
        %v1674 = vunpack.c.h.b16 %v1134
        %v1675 = vunpack.c.l.b16 %v1135
        %v1676 = vunpack.c.h.b16 %v1135
        %v1677 = vunpack.c.l.b16 %v1136
        %v1678 = vunpack.c.h.b16 %v1136
        %v1679 = vunpack.c.l.b16 %v1137
        %v1680 = vunpack.c.h.b16 %v1137
        %v1681 = vunpack.c.l.b16 %v1138
        %v1682 = vunpack.c.h.b16 %v1138
        %v1683 = vunpack.c.l.b16 %v1139
        %v1684 = vunpack.c.h.b16 %v1139
        %v1685 = vunpack.c.l.b16 %v1140
        %v1686 = vunpack.c.h.b16 %v1140
        %v1687 = vunpack.c.l.b16 %v1141
        %v1688 = vunpack.c.h.b16 %v1141
        %v1689 = vunpack.c.l.b16 %v1142
        %v1690 = vunpack.c.h.b16 %v1142
        %v1691 = vunpack.c.l.b16 %v1143
        %v1692 = vunpack.c.h.b16 %v1143
        %v1693 = vunpack.c.l.b16 %v1144
        %v1694 = vunpack.c.h.b16 %v1144
        %v1695 = vunpack.c.l.b16 %v1145
        %v1696 = vunpack.c.h.b16 %v1145
        %v1697 = vunpack.c.l.b16 %v1146
        %v1698 = vunpack.c.h.b16 %v1146
        %v1699 = vunpack.c.l.b16 %v1147
        %v1700 = vunpack.c.h.b16 %v1147
        %v1701 = vunpack.c.l.b16 %v1148
        %v1702 = vunpack.c.h.b16 %v1148
        %v1703 = vunpack.c.l.b16 %v1149
        %v1704 = vunpack.c.h.b16 %v1149
        %v1705 = vunpack.c.l.b16 %v1150
        %v1706 = vunpack.c.h.b16 %v1150
        %v1707 = vunpack.c.l.b16 %v1151
        %v1708 = vunpack.c.h.b16 %v1151
        %v1709 = vunpack.c.l.b16 %v1152
        %v1710 = vunpack.c.h.b16 %v1152
        %v1711 = vunpack.c.l.b16 %v1153
        %v1712 = vunpack.c.h.b16 %v1153
        %v1713 = vunpack.c.l.b16 %v1154
        %v1714 = vunpack.c.h.b16 %v1154
        %v1715 = vunpack.c.l.b16 %v1155
        %v1716 = vunpack.c.h.b16 %v1155
        %v1717 = vunpack.c.l.b16 %v1156
        %v1718 = vunpack.c.h.b16 %v1156
        %v1719 = vunpack.c.l.b16 %v1157
        %v1720 = vunpack.c.h.b16 %v1157
        %v1721 = vunpack.c.l.b16 %v1158
        %v1722 = vunpack.c.h.b16 %v1158
        %v1723 = vunpack.c.l.b16 %v1159
        %v1724 = vunpack.c.h.b16 %v1159
        %v1725 = vunpack.c.l.b16 %v1160
        %v1726 = vunpack.c.h.b16 %v1160
        %v1727 = vunpack.c.l.b16 %v1161
        %v1728 = vunpack.c.h.b16 %v1161
        %v1729 = vunpack.c.l.b16 %v1162
        %v1730 = vunpack.c.h.b16 %v1162
        %v1731 = vunpack.c.l.b16 %v1163
        %v1732 = vunpack.c.h.b16 %v1163
        %v1733 = vunpack.c.l.b16 %v1164
        %v1734 = vunpack.c.h.b16 %v1164
        %v1735 = vunpack.c.l.b16 %v1165
        %v1736 = vunpack.c.h.b16 %v1165
        %v1737 = vunpack.c.l.b16 %v1166
        %v1738 = vunpack.c.h.b16 %v1166
        %v1739 = vunpack.c.l.b16 %v1167
        %v1740 = vunpack.c.h.b16 %v1167
        %v1741 = vunpack.c.l.b16 %v1168
        %v1742 = vunpack.c.h.b16 %v1168
        %v1743 = vunpack.c.l.b16 %v1169
        %v1744 = vunpack.c.h.b16 %v1169
        %v1745 = vunpack.c.l.b16 %v1170
        %v1746 = vunpack.c.h.b16 %v1170
        %v1747 = vunpack.c.l.b16 %v1171
        %v1748 = vunpack.c.h.b16 %v1171
        %v1749 = vunpack.c.l.b16 %v1172
        %v1750 = vunpack.c.h.b16 %v1172
        %v1751 = vunpack.c.l.b16 %v1173
        %v1752 = vunpack.c.h.b16 %v1173
        %v1753 = vunpack.c.l.b16 %v1174
        %v1754 = vunpack.c.h.b16 %v1174
        %v1755 = vunpack.c.l.b16 %v1175
        %v1756 = vunpack.c.h.b16 %v1175
        %v1757 = vunpack.c.l.b16 %v1176
        %v1758 = vunpack.c.h.b16 %v1176
        %v1759 = vunpack.c.l.b16 %v1177
        %v1760 = vunpack.c.h.b16 %v1177
        %v1761 = vunpack.c.l.b16 %v1178
        %v1762 = vunpack.c.h.b16 %v1178
        %v1763 = vunpack.c.l.b16 %v1179
        %v1764 = vunpack.c.h.b16 %v1179
        %v1765 = vunpack.c.l.b16 %v1180
        %v1766 = vunpack.c.h.b16 %v1180
        %v1767 = vunpack.c.l.b16 %v1181
        %v1768 = vunpack.c.h.b16 %v1181
        %v1769 = vunpack.c.l.b16 %v1182
        %v1770 = vunpack.c.h.b16 %v1182
        %v1771 = vunpack.c.l.b16 %v1183
        %v1772 = vunpack.c.h.b16 %v1183
        %v1773 = vunpack.c.l.b16 %v1184
        %v1774 = vunpack.c.h.b16 %v1184
        %v1775 = vunpack.c.l.b16 %v1185
        %v1776 = vunpack.c.h.b16 %v1185
        %v1777 = vunpack.c.l.b16 %v1186
        %v1778 = vunpack.c.h.b16 %v1186
        %v1779 = vunpack.c.l.b16 %v1187
        %v1780 = vunpack.c.h.b16 %v1187
        %v1781 = vunpack.c.l.b16 %v1188
        %v1782 = vunpack.c.h.b16 %v1188
        %v1783 = vunpack.c.l.b16 %v1189
        %v1784 = vunpack.c.h.b16 %v1189
        %v1785 = vunpack.c.l.b16 %v1190
        %v1786 = vunpack.c.h.b16 %v1190
        %v1787 = vunpack.c.l.b16 %v1191
        %v1788 = vunpack.c.h.b16 %v1191
        %v1789 = vunpack.c.l.b16 %v1192
        %v1790 = vunpack.c.h.b16 %v1192
        %v1791 = vunpack.c.l.b16 %v1193
        %v1792 = vunpack.c.h.b16 %v1193
        %v1793 = vunpack.c.l.b16 %v1194
        %v1794 = vunpack.c.h.b16 %v1194
        %v1795 = vunpack.c.l.b16 %v1195
        %v1796 = vunpack.c.h.b16 %v1195
        %v1797 = vunpack.c.l.b16 %v1196
        %v1798 = vunpack.c.h.b16 %v1196
        %v1799 = vunpack.c.l.b16 %v1197
        %v1800 = vunpack.c.h.b16 %v1197
        %v1801 = vunpack.c.l.b16 %v1198
        %v1802 = vunpack.c.h.b16 %v1198
        %v1803 = vunpack.c.l.b16 %v1199
        %v1804 = vunpack.c.h.b16 %v1199
        %v1805 = vunpack.c.l.b16 %v1200
        %v1806 = vunpack.c.h.b16 %v1200
        %v1807 = vunpack.c.l.b16 %v1201
        %v1808 = vunpack.c.h.b16 %v1201
        %v1809 = vunpack.c.l.b16 %v1202
        %v1810 = vunpack.c.h.b16 %v1202
        %v1811 = vunpack.c.l.b16 %v1203
        %v1812 = vunpack.c.h.b16 %v1203
        %v1813 = vunpack.c.l.b16 %v1204
        %v1814 = vunpack.c.h.b16 %v1204
        %v1815 = vunpack.c.l.b16 %v1205
        %v1816 = vunpack.c.h.b16 %v1205
        %v1817 = vunpack.c.l.b16 %v1206
        %v1818 = vunpack.c.h.b16 %v1206
        %v1819 = vunpack.c.l.b16 %v1207
        %v1820 = vunpack.c.h.b16 %v1207
        %v1821 = vunpack.c.l.b16 %v1208
        %v1822 = vunpack.c.h.b16 %v1208
        %v1823 = vunpack.c.l.b16 %v1209
        %v1824 = vunpack.c.h.b16 %v1209
        %v1825 = vunpack.c.l.b16 %v1210
        %v1826 = vunpack.c.h.b16 %v1210
        %v1827 = vunpack.c.l.b16 %v1211
        %v1828 = vunpack.c.h.b16 %v1211
        %v1829 = vunpack.c.l.b16 %v1212
        %v1830 = vunpack.c.h.b16 %v1212
        %v1831 = vunpack.c.l.b16 %v1213
        %v1832 = vunpack.c.h.b16 %v1213
        %v1833 = vunpack.c.l.b16 %v1214
        %v1834 = vunpack.c.h.b16 %v1214
        %v1835 = vunpack.c.l.b16 %v1215
        %v1836 = vunpack.c.h.b16 %v1215
        %v1837 = vunpack.c.l.b16 %v1216
        %v1838 = vunpack.c.h.b16 %v1216
        %v1839 = vunpack.c.l.b16 %v1217
        %v1840 = vunpack.c.h.b16 %v1217
        %v1841 = vunpack.c.l.b16 %v1218
        %v1842 = vunpack.c.h.b16 %v1218
        %v1843 = vunpack.c.l.b16 %v1219
        %v1844 = vunpack.c.h.b16 %v1219
        %v1845 = vunpack.c.l.b16 %v1220
        %v1846 = vunpack.c.h.b16 %v1220
        %v1847 = vunpack.c.l.b16 %v1221
        %v1848 = vunpack.c.h.b16 %v1221
        %v1849 = vunpack.c.l.b16 %v1222
        %v1850 = vunpack.c.h.b16 %v1222
        %v1851 = vunpack.c.l.b16 %v1223
        %v1852 = vunpack.c.h.b16 %v1223
        %v1853 = vunpack.c.l.b16 %v1224
        %v1854 = vunpack.c.h.b16 %v1224
        %v1855 = vunpack.c.l.b16 %v1225
        %v1856 = vunpack.c.h.b16 %v1225
        %v1857 = vunpack.c.l.b16 %v1226
        %v1858 = vunpack.c.h.b16 %v1226
        %v1859 = vunpack.c.l.b16 %v1227
        %v1860 = vunpack.c.h.b16 %v1227
        %v1861 = vunpack.c.l.b16 %v1228
        %v1862 = vunpack.c.h.b16 %v1228
        %v1863 = vunpack.c.l.b16 %v1229
        %v1864 = vunpack.c.h.b16 %v1229
        %v1865 = vunpack.c.l.b16 %v1230
        %v1866 = vunpack.c.h.b16 %v1230
        %v1867 = vunpack.c.l.b16 %v1231
        %v1868 = vunpack.c.h.b16 %v1231
        %v1869 = vunpack.c.l.b16 %v1232
        %v1870 = vunpack.c.h.b16 %v1232
        %v1871 = vunpack.c.l.b16 %v1233
        %v1872 = vunpack.c.h.b16 %v1233
        %v1873 = vunpack.c.l.b16 %v1234
        %v1874 = vunpack.c.h.b16 %v1234
        %v1875 = vunpack.c.l.b16 %v1235
        %v1876 = vunpack.c.h.b16 %v1235
        %v1877 = vunpack.c.l.b16 %v1236
        %v1878 = vunpack.c.h.b16 %v1236
        %v1879 = vunpack.c.l.b16 %v1237
        %v1880 = vunpack.c.h.b16 %v1237
        %v1881 = vunpack.c.l.b16 %v1238
        %v1882 = vunpack.c.h.b16 %v1238
        %v1883 = vunpack.c.l.b16 %v1239
        %v1884 = vunpack.c.h.b16 %v1239
        %v1885 = vunpack.c.l.b16 %v1240
        %v1886 = vunpack.c.h.b16 %v1240
        %v1887 = vunpack.c.l.b16 %v1241
        %v1888 = vunpack.c.h.b16 %v1241
        %v1889 = vunpack.c.l.b16 %v1242
        %v1890 = vunpack.c.h.b16 %v1242
        %v1891 = vunpack.c.l.b16 %v1243
        %v1892 = vunpack.c.h.b16 %v1243
        %v1893 = vunpack.c.l.b16 %v1244
        %v1894 = vunpack.c.h.b16 %v1244
        %v1895 = vunpack.c.l.b16 %v1245
        %v1896 = vunpack.c.h.b16 %v1245
        %v1897 = vunpack.c.l.b16 %v1246
        %v1898 = vunpack.c.h.b16 %v1246
        %v1899 = vunpack.c.l.b16 %v1247
        %v1900 = vunpack.c.h.b16 %v1247
        %v1901 = vunpack.c.l.b16 %v1248
        %v1902 = vunpack.c.h.b16 %v1248
        %v1903 = vunpack.c.l.b16 %v1249
        %v1904 = vunpack.c.h.b16 %v1249
        %v1905 = vunpack.c.l.b16 %v1250
        %v1906 = vunpack.c.h.b16 %v1250
        %v1907 = vunpack.c.l.b16 %v1251
        %v1908 = vunpack.c.h.b16 %v1251
        %v1909 = vunpack.c.l.b16 %v1252
        %v1910 = vunpack.c.h.b16 %v1252
        %v1911 = vunpack.c.l.b16 %v1253
        %v1912 = vunpack.c.h.b16 %v1253
        %v1913 = vunpack.c.l.b16 %v1254
        %v1914 = vunpack.c.h.b16 %v1254
        %v1915 = vunpack.c.l.b16 %v1255
        %v1916 = vunpack.c.h.b16 %v1255
        %v1917 = vunpack.c.l.b16 %v1256
        %v1918 = vunpack.c.h.b16 %v1256
        %v1919 = vunpack.c.l.b16 %v1257
        %v1920 = vunpack.c.h.b16 %v1257
        %v1921 = vunpack.c.l.b16 %v1258
        %v1922 = vunpack.c.h.b16 %v1258
        %v1923 = vunpack.c.l.b16 %v1259
        %v1924 = vunpack.c.h.b16 %v1259
        %v1925 = vunpack.c.l.b16 %v1260
        %v1926 = vunpack.c.h.b16 %v1260
        %v1927 = vunpack.c.l.b16 %v1261
        %v1928 = vunpack.c.h.b16 %v1261
        %v1929 = vunpack.c.l.b16 %v1262
        %v1930 = vunpack.c.h.b16 %v1262
        %v1931 = vunpack.c.l.b16 %v1263
        %v1932 = vunpack.c.h.b16 %v1263
        %v1933 = vunpack.c.l.b16 %v1264
        %v1934 = vunpack.c.h.b16 %v1264
        %v1935 = vunpack.c.l.b16 %v1265
        %v1936 = vunpack.c.h.b16 %v1265
        %v1937 = vunpack.c.l.b16 %v1266
        %v1938 = vunpack.c.h.b16 %v1266
        %v1939 = vunpack.c.l.b16 %v1267
        %v1940 = vunpack.c.h.b16 %v1267
        %v1941 = vunpack.c.l.b16 %v1268
        %v1942 = vunpack.c.h.b16 %v1268
        %v1943 = vunpack.c.l.b16 %v1269
        %v1944 = vunpack.c.h.b16 %v1269
        %v1945 = vunpack.c.l.b16 %v1270
        %v1946 = vunpack.c.h.b16 %v1270
        %v1947 = vunpack.c.l.b16 %v1271
        %v1948 = vunpack.c.h.b16 %v1271
        %v1949 = vunpack.c.l.b16 %v1272
        %v1950 = vunpack.c.h.b16 %v1272
        %v1951 = vunpack.c.l.b16 %v1273
        %v1952 = vunpack.c.h.b16 %v1273
        %v1953 = vunpack.c.l.b16 %v1274
        %v1954 = vunpack.c.h.b16 %v1274
        %v1955 = vunpack.c.l.b16 %v1275
        %v1956 = vunpack.c.h.b16 %v1275
        %v1957 = vunpack.c.l.b16 %v1276
        %v1958 = vunpack.c.h.b16 %v1276
        %v1959 = vunpack.c.l.b16 %v1277
        %v1960 = vunpack.c.h.b16 %v1277
        %v1961 = vunpack.c.l.b16 %v1278
        %v1962 = vunpack.c.h.b16 %v1278
        %v1963 = vunpack.c.l.b16 %v1279
        %v1964 = vunpack.c.h.b16 %v1279
        %v1965 = vunpack.c.l.b16 %v1280
        %v1966 = vunpack.c.h.b16 %v1280
        %v1967 = vunpack.c.l.b16 %v1281
        %v1968 = vunpack.c.h.b16 %v1281
        %v1969 = vunpack.c.l.b16 %v1282
        %v1970 = vunpack.c.h.b16 %v1282
        %v1971 = vunpack.c.l.b16 %v1283
        %v1972 = vunpack.c.h.b16 %v1283
        %v1973 = vunpack.c.l.b16 %v1284
        %v1974 = vunpack.c.h.b16 %v1284
        %v1975 = vunpack.c.l.b16 %v1285
        %v1976 = vunpack.c.h.b16 %v1285
        %v1977 = vunpack.c.l.b16 %v1286
        %v1978 = vunpack.c.h.b16 %v1286
        %v1979 = vunpack.c.l.b16 %v1287
        %v1980 = vunpack.c.h.b16 %v1287
        %v1981 = vunpack.c.l.b16 %v1288
        %v1982 = vunpack.c.h.b16 %v1288
        %v1983 = vunpack.c.l.b16 %v1289
        %v1984 = vunpack.c.h.b16 %v1289
        %v1985 = vunpack.c.l.b16 %v1290
        %v1986 = vunpack.c.h.b16 %v1290
        %v1987 = vunpack.c.l.b16 %v1291
        %v1988 = vunpack.c.h.b16 %v1291
        %v1989 = vunpack.c.l.b16 %v1292
        %v1990 = vunpack.c.h.b16 %v1292
        %v1991 = vunpack.c.l.b16 %v1293
        %v1992 = vunpack.c.h.b16 %v1293
        %v1993 = vunpack.c.l.b16 %v1294
        %v1994 = vunpack.c.h.b16 %v1294
        %v1995 = vunpack.c.l.b16 %v1295
        %v1996 = vunpack.c.h.b16 %v1295
        %v1997 = vunpack.c.l.b16 %v1296
        %v1998 = vunpack.c.h.b16 %v1296
        %v1999 = vunpack.c.l.b16 %v1297
        %v2000 = vunpack.c.h.b16 %v1297
        %v2001 = vunpack.c.l.b16 %v1298
        %v2002 = vunpack.c.h.b16 %v1298
        %v2003 = vunpack.c.l.b16 %v1299
        %v2004 = vunpack.c.h.b16 %v1299
        %v2005 = vunpack.c.l.b16 %v1300
        %v2006 = vunpack.c.h.b16 %v1300
        %v2007 = vunpack.c.l.b16 %v1301
        %v2008 = vunpack.c.h.b16 %v1301
        %v2009 = vunpack.c.l.b16 %v1302
        %v2010 = vunpack.c.h.b16 %v1302
        %v2011 = vunpack.c.l.b16 %v1303
        %v2012 = vunpack.c.h.b16 %v1303
        %v2013 = vunpack.c.l.b16 %v1304
        %v2014 = vunpack.c.h.b16 %v1304
        %v2015 = vunpack.c.l.b16 %v1305
        %v2016 = vunpack.c.h.b16 %v1305
        %v2017 = vunpack.c.l.b16 %v1306
        %v2018 = vunpack.c.h.b16 %v1306
        %v2019 = vunpack.c.l.b16 %v1307
        %v2020 = vunpack.c.h.b16 %v1307
        %v2021 = vunpack.c.l.b16 %v1308
        %v2022 = vunpack.c.h.b16 %v1308
        %v2023 = vunpack.c.l.b16 %v1309
        %v2024 = vunpack.c.h.b16 %v1309
        %v2025 = vunpack.c.l.b16 %v1310
        %v2026 = vunpack.c.h.b16 %v1310
        %v2027 = vunpack.c.l.b16 %v1311
        %v2028 = vunpack.c.h.b16 %v1311
        %v2029 = vunpack.c.l.b16 %v1312
        %v2030 = vunpack.c.h.b16 %v1312
        %v2031 = vunpack.c.l.b16 %v1313
        %v2032 = vunpack.c.h.b16 %v1313
        %v2033 = vunpack.c.l.b16 %v1314
        %v2034 = vunpack.c.h.b16 %v1314
        %v2035 = vunpack.c.l.b16 %v1315
        %v2036 = vunpack.c.h.b16 %v1315
        %v2037 = vunpack.c.l.b16 %v1316
        %v2038 = vunpack.c.h.b16 %v1316
        %v2039 = vunpack.c.l.b16 %v1317
        %v2040 = vunpack.c.h.b16 %v1317
        %v2041 = vunpack.c.l.b16 %v1318
        %v2042 = vunpack.c.h.b16 %v1318
        %v2043 = vunpack.c.l.b16 %v1319
        %v2044 = vunpack.c.h.b16 %v1319
        %v2045 = vunpack.c.l.b16 %v1320
        %v2046 = vunpack.c.h.b16 %v1320
        %v2047 = vunpack.c.l.b16 %v1321
        %v2048 = vunpack.c.h.b16 %v1321
        %v2049 = vunpack.c.l.b16 %v1322
        %v2050 = vunpack.c.h.b16 %v1322
        %v2051 = vunpack.c.l.b16 %v1323
        %v2052 = vunpack.c.h.b16 %v1323
        %v2053 = vunpack.c.l.b16 %v1324
        %v2054 = vunpack.c.h.b16 %v1324
        %v2055 = vunpack.c.l.b16 %v1325
        %v2056 = vunpack.c.h.b16 %v1325
        %v2057 = vunpack.c.l.b16 %v1326
        %v2058 = vunpack.c.h.b16 %v1326
        %v2059 = vunpack.c.l.b16 %v1327
        %v2060 = vunpack.c.h.b16 %v1327
        %v2061 = vunpack.c.l.b16 %v1328
        %v2062 = vunpack.c.h.b16 %v1328
        %v2063 = vunpack.c.l.b16 %v1329
        %v2064 = vunpack.c.h.b16 %v1329
        %v2065 = vunpack.c.l.b16 %v1330
        %v2066 = vunpack.c.h.b16 %v1330
        %v2067 = vunpack.c.l.b16 %v1331
        %v2068 = vunpack.c.h.b16 %v1331
        %v2069 = vunpack.c.l.b16 %v1332
        %v2070 = vunpack.c.h.b16 %v1332
        %v2071 = vunpack.c.l.b16 %v1333
        %v2072 = vunpack.c.h.b16 %v1333
        %v2073 = vunpack.c.l.b16 %v1334
        %v2074 = vunpack.c.h.b16 %v1334
        %v2075 = vunpack.c.l.b16 %v1335
        %v2076 = vunpack.c.h.b16 %v1335
        %v2077 = vunpack.c.l.b16 %v1336
        %v2078 = vunpack.c.h.b16 %v1336
        %v2079 = vunpack.c.l.b16 %v1337
        %v2080 = vunpack.c.h.b16 %v1337
        %v2081 = vunpack.c.l.b16 %v1338
        %v2082 = vunpack.c.h.b16 %v1338
        %v2083 = vunpack.c.l.b16 %v1339
        %v2084 = vunpack.c.h.b16 %v1339
        %v2085 = vunpack.c.l.b16 %v1340
        %v2086 = vunpack.c.h.b16 %v1340
        %v2087 = vunpack.c.l.b16 %v1341
        %v2088 = vunpack.c.h.b16 %v1341
        %v2089 = vunpack.c.l.b16 %v1342
        %v2090 = vunpack.c.h.b16 %v1342
        %v2091 = vunpack.c.l.b16 %v1343
        %v2092 = vunpack.c.h.b16 %v1343
        %v2093 = vunpack.c.l.b16 %v1344
        %v2094 = vunpack.c.h.b16 %v1344
        %v2095 = vunpack.c.l.b16 %v1345
        %v2096 = vunpack.c.h.b16 %v1345
        %v2097 = vunpack.c.l.b16 %v1346
        %v2098 = vunpack.c.h.b16 %v1346
        %v2099 = vunpack.c.l.b16 %v1347
        %v2100 = vunpack.c.h.b16 %v1347
        %v2101 = vunpack.c.l.b16 %v1348
        %v2102 = vunpack.c.h.b16 %v1348
        %v2103 = vunpack.c.l.b16 %v1349
        %v2104 = vunpack.c.h.b16 %v1349
        %v2105 = vunpack.c.l.b16 %v1350
        %v2106 = vunpack.c.h.b16 %v1350
        %v2107 = vunpack.c.l.b16 %v1351
        %v2108 = vunpack.c.h.b16 %v1351
        %v2109 = vunpack.c.l.b16 %v1352
        %v2110 = vunpack.c.h.b16 %v1352
        %v2111 = vunpack.c.l.b16 %v1353
        %v2112 = vunpack.c.h.b16 %v1353
        %v2113 = vunpack.c.l.b16 %v1354
        %v2114 = vunpack.c.h.b16 %v1354
        %v2115 = vunpack.c.l.b16 %v1355
        %v2116 = vunpack.c.h.b16 %v1355
        %v2117 = vunpack.c.l.b16 %v1356
        %v2118 = vunpack.c.h.b16 %v1356
        %v2119 = vunpack.c.l.b16 %v1357
        %v2120 = vunpack.c.h.b16 %v1357
        %v2121 = vunpack.c.l.b16 %v1358
        %v2122 = vunpack.c.h.b16 %v1358
        %v2123 = vunpack.c.l.b16 %v1359
        %v2124 = vunpack.c.h.b16 %v1359
        %v2125 = vunpack.c.l.b16 %v1360
        %v2126 = vunpack.c.h.b16 %v1360
        %v2127 = vunpack.c.l.b16 %v1361
        %v2128 = vunpack.c.h.b16 %v1361
        %v2129 = vunpack.c.l.b16 %v1362
        %v2130 = vunpack.c.h.b16 %v1362
        %v2131 = vunpack.c.l.b16 %v1363
        %v2132 = vunpack.c.h.b16 %v1363
        %v2133 = vunpack.c.l.b16 %v1364
        %v2134 = vunpack.c.h.b16 %v1364
        %v2135 = vunpack.c.l.b16 %v1365
        %v2136 = vunpack.c.h.b16 %v1365
        %v2137 = vunpack.c.l.b16 %v1366
        %v2138 = vunpack.c.h.b16 %v1366
        %v2139 = vunpack.c.l.b16 %v1367
        %v2140 = vunpack.c.h.b16 %v1367
        %v2141 = vunpack.c.l.b16 %v1368
        %v2142 = vunpack.c.h.b16 %v1368
        %v2143 = vunpack.c.l.b16 %v1369
        %v2144 = vunpack.c.h.b16 %v1369
        %v2145 = vunpack.c.l.b16 %v1370
        %v2146 = vunpack.c.h.b16 %v1370
        %v2147 = vunpack.c.l.b16 %v1371
        %v2148 = vunpack.c.h.b16 %v1371
        %v2149 = vunpack.c.l.b16 %v1372
        %v2150 = vunpack.c.h.b16 %v1372
        %v2151 = vunpack.c.l.b16 %v1373
        %v2152 = vunpack.c.h.b16 %v1373
        %v2153 = vunpack.c.l.b16 %v1374
        %v2154 = vunpack.c.h.b16 %v1374
        %v2155 = vunpack.c.l.b16 %v1375
        %v2156 = vunpack.c.h.b16 %v1375
        %v2157 = vunpack.c.l.b16 %v1376
        %v2158 = vunpack.c.h.b16 %v1376
        %v2159 = vunpack.c.l.b16 %v1377
        %v2160 = vunpack.c.h.b16 %v1377
        %v2161 = vunpack.c.l.b16 %v1378
        %v2162 = vunpack.c.h.b16 %v1378
        %v2163 = vunpack.c.l.b16 %v1379
        %v2164 = vunpack.c.h.b16 %v1379
        %v2165 = vunpack.c.l.b16 %v1380
        %v2166 = vunpack.c.h.b16 %v1380
        %v2167 = vpack.c.b16 %v1663, %v1655
        %v2168 = vpack.c.b16 %v1664, %v1656
        %v2169 = vpack.c.b16 %v1665, %v1657
        %v2170 = vpack.c.b16 %v1666, %v1658
        %v2171 = vpack.c.b16 %v1667, %v1659
        %v2172 = vpack.c.b16 %v1668, %v1660
        %v2173 = vpack.c.b16 %v1669, %v1661
        %v2174 = vpack.c.b16 %v1670, %v1662
        %v2175 = vpack.c.b16 %v1679, %v1671
        %v2176 = vpack.c.b16 %v1680, %v1672
        %v2177 = vpack.c.b16 %v1681, %v1673
        %v2178 = vpack.c.b16 %v1682, %v1674
        %v2179 = vpack.c.b16 %v1683, %v1675
        %v2180 = vpack.c.b16 %v1684, %v1676
        %v2181 = vpack.c.b16 %v1685, %v1677
        %v2182 = vpack.c.b16 %v1686, %v1678
        %v2183 = vpack.c.b16 %v1695, %v1687
        %v2184 = vpack.c.b16 %v1696, %v1688
        %v2185 = vpack.c.b16 %v1697, %v1689
        %v2186 = vpack.c.b16 %v1698, %v1690
        %v2187 = vpack.c.b16 %v1699, %v1691
        %v2188 = vpack.c.b16 %v1700, %v1692
        %v2189 = vpack.c.b16 %v1701, %v1693
        %v2190 = vpack.c.b16 %v1702, %v1694
        %v2191 = vpack.c.b16 %v1711, %v1703
        %v2192 = vpack.c.b16 %v1712, %v1704
        %v2193 = vpack.c.b16 %v1713, %v1705
        %v2194 = vpack.c.b16 %v1714, %v1706
        %v2195 = vpack.c.b16 %v1715, %v1707
        %v2196 = vpack.c.b16 %v1716, %v1708
        %v2197 = vpack.c.b16 %v1717, %v1709
        %v2198 = vpack.c.b16 %v1718, %v1710
        %v2199 = vpack.c.b16 %v1727, %v1719
        %v2200 = vpack.c.b16 %v1728, %v1720
        %v2201 = vpack.c.b16 %v1729, %v1721
        %v2202 = vpack.c.b16 %v1730, %v1722
        %v2203 = vpack.c.b16 %v1731, %v1723
        %v2204 = vpack.c.b16 %v1732, %v1724
        %v2205 = vpack.c.b16 %v1733, %v1725
        %v2206 = vpack.c.b16 %v1734, %v1726
        %v2207 = vpack.c.b16 %v1743, %v1735
        %v2208 = vpack.c.b16 %v1744, %v1736
        %v2209 = vpack.c.b16 %v1745, %v1737
        %v2210 = vpack.c.b16 %v1746, %v1738
        %v2211 = vpack.c.b16 %v1747, %v1739
        %v2212 = vpack.c.b16 %v1748, %v1740
        %v2213 = vpack.c.b16 %v1749, %v1741
        %v2214 = vpack.c.b16 %v1750, %v1742
        %v2215 = vpack.c.b16 %v1759, %v1751
        %v2216 = vpack.c.b16 %v1760, %v1752
        %v2217 = vpack.c.b16 %v1761, %v1753
        %v2218 = vpack.c.b16 %v1762, %v1754
        %v2219 = vpack.c.b16 %v1763, %v1755
        %v2220 = vpack.c.b16 %v1764, %v1756
        %v2221 = vpack.c.b16 %v1765, %v1757
        %v2222 = vpack.c.b16 %v1766, %v1758
        %v2223 = vpack.c.b16 %v1775, %v1767
        %v2224 = vpack.c.b16 %v1776, %v1768
        %v2225 = vpack.c.b16 %v1777, %v1769
        %v2226 = vpack.c.b16 %v1778, %v1770
        %v2227 = vpack.c.b16 %v1779, %v1771
        %v2228 = vpack.c.b16 %v1780, %v1772
        %v2229 = vpack.c.b16 %v1781, %v1773
        %v2230 = vpack.c.b16 %v1782, %v1774
        %v2231 = vpack.c.b16 %v1791, %v1783
        %v2232 = vpack.c.b16 %v1792, %v1784
        %v2233 = vpack.c.b16 %v1793, %v1785
        %v2234 = vpack.c.b16 %v1794, %v1786
        %v2235 = vpack.c.b16 %v1795, %v1787
        %v2236 = vpack.c.b16 %v1796, %v1788
        %v2237 = vpack.c.b16 %v1797, %v1789
        %v2238 = vpack.c.b16 %v1798, %v1790
        %v2239 = vpack.c.b16 %v1807, %v1799
        %v2240 = vpack.c.b16 %v1808, %v1800
        %v2241 = vpack.c.b16 %v1809, %v1801
        %v2242 = vpack.c.b16 %v1810, %v1802
        %v2243 = vpack.c.b16 %v1811, %v1803
        %v2244 = vpack.c.b16 %v1812, %v1804
        %v2245 = vpack.c.b16 %v1813, %v1805
        %v2246 = vpack.c.b16 %v1814, %v1806
        %v2247 = vpack.c.b16 %v1823, %v1815
        %v2248 = vpack.c.b16 %v1824, %v1816
        %v2249 = vpack.c.b16 %v1825, %v1817
        %v2250 = vpack.c.b16 %v1826, %v1818
        %v2251 = vpack.c.b16 %v1827, %v1819
        %v2252 = vpack.c.b16 %v1828, %v1820
        %v2253 = vpack.c.b16 %v1829, %v1821
        %v2254 = vpack.c.b16 %v1830, %v1822
        %v2255 = vpack.c.b16 %v1839, %v1831
        %v2256 = vpack.c.b16 %v1840, %v1832
        %v2257 = vpack.c.b16 %v1841, %v1833
        %v2258 = vpack.c.b16 %v1842, %v1834
        %v2259 = vpack.c.b16 %v1843, %v1835
        %v2260 = vpack.c.b16 %v1844, %v1836
        %v2261 = vpack.c.b16 %v1845, %v1837
        %v2262 = vpack.c.b16 %v1846, %v1838
        %v2263 = vpack.c.b16 %v1855, %v1847
        %v2264 = vpack.c.b16 %v1856, %v1848
        %v2265 = vpack.c.b16 %v1857, %v1849
        %v2266 = vpack.c.b16 %v1858, %v1850
        %v2267 = vpack.c.b16 %v1859, %v1851
        %v2268 = vpack.c.b16 %v1860, %v1852
        %v2269 = vpack.c.b16 %v1861, %v1853
        %v2270 = vpack.c.b16 %v1862, %v1854
        %v2271 = vpack.c.b16 %v1871, %v1863
        %v2272 = vpack.c.b16 %v1872, %v1864
        %v2273 = vpack.c.b16 %v1873, %v1865
        %v2274 = vpack.c.b16 %v1874, %v1866
        %v2275 = vpack.c.b16 %v1875, %v1867
        %v2276 = vpack.c.b16 %v1876, %v1868
        %v2277 = vpack.c.b16 %v1877, %v1869
        %v2278 = vpack.c.b16 %v1878, %v1870
        %v2279 = vpack.c.b16 %v1887, %v1879
        %v2280 = vpack.c.b16 %v1888, %v1880
        %v2281 = vpack.c.b16 %v1889, %v1881
        %v2282 = vpack.c.b16 %v1890, %v1882
        %v2283 = vpack.c.b16 %v1891, %v1883
        %v2284 = vpack.c.b16 %v1892, %v1884
        %v2285 = vpack.c.b16 %v1893, %v1885
        %v2286 = vpack.c.b16 %v1894, %v1886
        %v2287 = vpack.c.b16 %v1903, %v1895
        %v2288 = vpack.c.b16 %v1904, %v1896
        %v2289 = vpack.c.b16 %v1905, %v1897
        %v2290 = vpack.c.b16 %v1906, %v1898
        %v2291 = vpack.c.b16 %v1907, %v1899
        %v2292 = vpack.c.b16 %v1908, %v1900
        %v2293 = vpack.c.b16 %v1909, %v1901
        %v2294 = vpack.c.b16 %v1910, %v1902
        %v2295 = vpack.c.b16 %v1919, %v1911
        %v2296 = vpack.c.b16 %v1920, %v1912
        %v2297 = vpack.c.b16 %v1921, %v1913
        %v2298 = vpack.c.b16 %v1922, %v1914
        %v2299 = vpack.c.b16 %v1923, %v1915
        %v2300 = vpack.c.b16 %v1924, %v1916
        %v2301 = vpack.c.b16 %v1925, %v1917
        %v2302 = vpack.c.b16 %v1926, %v1918
        %v2303 = vpack.c.b16 %v1935, %v1927
        %v2304 = vpack.c.b16 %v1936, %v1928
        %v2305 = vpack.c.b16 %v1937, %v1929
        %v2306 = vpack.c.b16 %v1938, %v1930
        %v2307 = vpack.c.b16 %v1939, %v1931
        %v2308 = vpack.c.b16 %v1940, %v1932
        %v2309 = vpack.c.b16 %v1941, %v1933
        %v2310 = vpack.c.b16 %v1942, %v1934
        %v2311 = vpack.c.b16 %v1951, %v1943
        %v2312 = vpack.c.b16 %v1952, %v1944
        %v2313 = vpack.c.b16 %v1953, %v1945
        %v2314 = vpack.c.b16 %v1954, %v1946
        %v2315 = vpack.c.b16 %v1955, %v1947
        %v2316 = vpack.c.b16 %v1956, %v1948
        %v2317 = vpack.c.b16 %v1957, %v1949
        %v2318 = vpack.c.b16 %v1958, %v1950
        %v2319 = vpack.c.b16 %v1967, %v1959
        %v2320 = vpack.c.b16 %v1968, %v1960
        %v2321 = vpack.c.b16 %v1969, %v1961
        %v2322 = vpack.c.b16 %v1970, %v1962
        %v2323 = vpack.c.b16 %v1971, %v1963
        %v2324 = vpack.c.b16 %v1972, %v1964
        %v2325 = vpack.c.b16 %v1973, %v1965
        %v2326 = vpack.c.b16 %v1974, %v1966
        %v2327 = vpack.c.b16 %v1983, %v1975
        %v2328 = vpack.c.b16 %v1984, %v1976
        %v2329 = vpack.c.b16 %v1985, %v1977
        %v2330 = vpack.c.b16 %v1986, %v1978
        %v2331 = vpack.c.b16 %v1987, %v1979
        %v2332 = vpack.c.b16 %v1988, %v1980
        %v2333 = vpack.c.b16 %v1989, %v1981
        %v2334 = vpack.c.b16 %v1990, %v1982
        %v2335 = vpack.c.b16 %v1999, %v1991
        %v2336 = vpack.c.b16 %v2000, %v1992
        %v2337 = vpack.c.b16 %v2001, %v1993
        %v2338 = vpack.c.b16 %v2002, %v1994
        %v2339 = vpack.c.b16 %v2003, %v1995
        %v2340 = vpack.c.b16 %v2004, %v1996
        %v2341 = vpack.c.b16 %v2005, %v1997
        %v2342 = vpack.c.b16 %v2006, %v1998
        %v2343 = vpack.c.b16 %v2015, %v2007
        %v2344 = vpack.c.b16 %v2016, %v2008
        %v2345 = vpack.c.b16 %v2017, %v2009
        %v2346 = vpack.c.b16 %v2018, %v2010
        %v2347 = vpack.c.b16 %v2019, %v2011
        %v2348 = vpack.c.b16 %v2020, %v2012
        %v2349 = vpack.c.b16 %v2021, %v2013
        %v2350 = vpack.c.b16 %v2022, %v2014
        %v2351 = vpack.c.b16 %v2031, %v2023
        %v2352 = vpack.c.b16 %v2032, %v2024
        %v2353 = vpack.c.b16 %v2033, %v2025
        %v2354 = vpack.c.b16 %v2034, %v2026
        %v2355 = vpack.c.b16 %v2035, %v2027
        %v2356 = vpack.c.b16 %v2036, %v2028
        %v2357 = vpack.c.b16 %v2037, %v2029
        %v2358 = vpack.c.b16 %v2038, %v2030
        %v2359 = vpack.c.b16 %v2047, %v2039
        %v2360 = vpack.c.b16 %v2048, %v2040
        %v2361 = vpack.c.b16 %v2049, %v2041
        %v2362 = vpack.c.b16 %v2050, %v2042
        %v2363 = vpack.c.b16 %v2051, %v2043
        %v2364 = vpack.c.b16 %v2052, %v2044
        %v2365 = vpack.c.b16 %v2053, %v2045
        %v2366 = vpack.c.b16 %v2054, %v2046
        %v2367 = vpack.c.b16 %v2063, %v2055
        %v2368 = vpack.c.b16 %v2064, %v2056
        %v2369 = vpack.c.b16 %v2065, %v2057
        %v2370 = vpack.c.b16 %v2066, %v2058
        %v2371 = vpack.c.b16 %v2067, %v2059
        %v2372 = vpack.c.b16 %v2068, %v2060
        %v2373 = vpack.c.b16 %v2069, %v2061
        %v2374 = vpack.c.b16 %v2070, %v2062
        %v2375 = vpack.c.b16 %v2079, %v2071
        %v2376 = vpack.c.b16 %v2080, %v2072
        %v2377 = vpack.c.b16 %v2081, %v2073
        %v2378 = vpack.c.b16 %v2082, %v2074
        %v2379 = vpack.c.b16 %v2083, %v2075
        %v2380 = vpack.c.b16 %v2084, %v2076
        %v2381 = vpack.c.b16 %v2085, %v2077
        %v2382 = vpack.c.b16 %v2086, %v2078
        %v2383 = vpack.c.b16 %v2095, %v2087
        %v2384 = vpack.c.b16 %v2096, %v2088
        %v2385 = vpack.c.b16 %v2097, %v2089
        %v2386 = vpack.c.b16 %v2098, %v2090
        %v2387 = vpack.c.b16 %v2099, %v2091
        %v2388 = vpack.c.b16 %v2100, %v2092
        %v2389 = vpack.c.b16 %v2101, %v2093
        %v2390 = vpack.c.b16 %v2102, %v2094
        %v2391 = vpack.c.b16 %v2111, %v2103
        %v2392 = vpack.c.b16 %v2112, %v2104
        %v2393 = vpack.c.b16 %v2113, %v2105
        %v2394 = vpack.c.b16 %v2114, %v2106
        %v2395 = vpack.c.b16 %v2115, %v2107
        %v2396 = vpack.c.b16 %v2116, %v2108
        %v2397 = vpack.c.b16 %v2117, %v2109
        %v2398 = vpack.c.b16 %v2118, %v2110
        %v2399 = vpack.c.b16 %v2127, %v2119
        %v2400 = vpack.c.b16 %v2128, %v2120
        %v2401 = vpack.c.b16 %v2129, %v2121
        %v2402 = vpack.c.b16 %v2130, %v2122
        %v2403 = vpack.c.b16 %v2131, %v2123
        %v2404 = vpack.c.b16 %v2132, %v2124
        %v2405 = vpack.c.b16 %v2133, %v2125
        %v2406 = vpack.c.b16 %v2134, %v2126
        %v2407 = vpack.c.b16 %v2143, %v2135
        %v2408 = vpack.c.b16 %v2144, %v2136
        %v2409 = vpack.c.b16 %v2145, %v2137
        %v2410 = vpack.c.b16 %v2146, %v2138
        %v2411 = vpack.c.b16 %v2147, %v2139
        %v2412 = vpack.c.b16 %v2148, %v2140
        %v2413 = vpack.c.b16 %v2149, %v2141
        %v2414 = vpack.c.b16 %v2150, %v2142
        %v2415 = vpack.c.b16 %v2159, %v2151
        %v2416 = vpack.c.b16 %v2160, %v2152
        %v2417 = vpack.c.b16 %v2161, %v2153
        %v2418 = vpack.c.b16 %v2162, %v2154
        %v2419 = vpack.c.b16 %v2163, %v2155
        %v2420 = vpack.c.b16 %v2164, %v2156
        %v2421 = vpack.c.b16 %v2165, %v2157
        %v2422 = vpack.c.b16 %v2166, %v2158
        %2679 = vmatpush.bf16.msra.mxu0 %v2223
        %2680 = vmatpush.bf16.msra.mxu0 %v2215
        %2681 = vmatpush.bf16.msra.mxu0 %v2207
        %2682 = vmatpush.bf16.msra.mxu0 %v2199
        %2683 = vmatpush.bf16.msra.mxu0 %v2191
        %2684 = vmatpush.bf16.msra.mxu0 %v2183
        %2685 = vmatpush.bf16.msra.mxu0 %v2175
        %2686 = vmatpush.bf16.msra.mxu0 %v2167
        %2687 = vmatmul.bf16.gmra.mxu0 %v1121
        %v2688 = vpop.f32.mrf.mxu0
        %v2689 = vadd.f32 %v1383, %v2688
        %v2690 = vpop.f32.mrf.mxu0
        %2691 = vdwg.mxu0
        %2692 = vmatpush.bf16.msra.mxu0 %v2287
        %2693 = vmatpush.bf16.msra.mxu0 %v2279
        %2694 = vmatpush.bf16.msra.mxu0 %v2271
        %2695 = vmatpush.bf16.msra.mxu0 %v2263
        %2696 = vmatpush.bf16.msra.mxu0 %v2255
        %2697 = vmatpush.bf16.msra.mxu0 %v2247
        %2698 = vmatpush.bf16.msra.mxu0 %v2239
        %2699 = vmatpush.bf16.msra.mxu0 %v2231
        %2700 = vmatmul.bf16.gmra.mxu0 %v1122
        %v2701 = vpop.f32.mrf.mxu0
        %v2702 = vadd.f32 %v2689, %v2701
        %v2703 = vpop.f32.mrf.mxu0
        %2704 = vdwg.mxu0
        %2705 = vmatpush.bf16.msra.mxu0 %v2351
        %2706 = vmatpush.bf16.msra.mxu0 %v2343
        %2707 = vmatpush.bf16.msra.mxu0 %v2335
        %2708 = vmatpush.bf16.msra.mxu0 %v2327
        %2709 = vmatpush.bf16.msra.mxu0 %v2319
        %2710 = vmatpush.bf16.msra.mxu0 %v2311
        %2711 = vmatpush.bf16.msra.mxu0 %v2303
        %2712 = vmatpush.bf16.msra.mxu0 %v2295
        %2713 = vmatmul.bf16.gmra.mxu0 %v1123
        %v2714 = vpop.f32.mrf.mxu0
        %v2715 = vadd.f32 %v2702, %v2714
        %v2716 = vpop.f32.mrf.mxu0
        %2717 = vdwg.mxu0
        %2718 = vmatpush.bf16.msra.mxu0 %v2415
        %2719 = vmatpush.bf16.msra.mxu0 %v2407
        %2720 = vmatpush.bf16.msra.mxu0 %v2399
        %2721 = vmatpush.bf16.msra.mxu0 %v2391
        %2722 = vmatpush.bf16.msra.mxu0 %v2383
        %2723 = vmatpush.bf16.msra.mxu0 %v2375
        %2724 = vmatpush.bf16.msra.mxu0 %v2367
        %2725 = vmatpush.bf16.msra.mxu0 %v2359
        %2726 = vmatmul.bf16.gmra.mxu0 %v1124
        %v2727 = vpop.f32.mrf.mxu0
        %v2728 = vadd.f32 %v2715, %v2727
        %v2729 = vpop.f32.mrf.mxu0
        %2730 = vdwg.mxu0
        %2731 = vmatpush.bf16.msra.mxu0 %v2224
        %2732 = vmatpush.bf16.msra.mxu0 %v2216
        %2733 = vmatpush.bf16.msra.mxu0 %v2208
        %2734 = vmatpush.bf16.msra.mxu0 %v2200
        %2735 = vmatpush.bf16.msra.mxu0 %v2192
        %2736 = vmatpush.bf16.msra.mxu0 %v2184
        %2737 = vmatpush.bf16.msra.mxu0 %v2176
        %2738 = vmatpush.bf16.msra.mxu0 %v2168
        %2739 = vmatmul.bf16.gmra.mxu0 %v1121
        %v2740 = vpop.f32.mrf.mxu0
        %v2741 = vadd.f32 %v1384, %v2740
        %v2742 = vpop.f32.mrf.mxu0
        %2743 = vdwg.mxu0
        %2744 = vmatpush.bf16.msra.mxu0 %v2288
        %2745 = vmatpush.bf16.msra.mxu0 %v2280
        %2746 = vmatpush.bf16.msra.mxu0 %v2272
        %2747 = vmatpush.bf16.msra.mxu0 %v2264
        %2748 = vmatpush.bf16.msra.mxu0 %v2256
        %2749 = vmatpush.bf16.msra.mxu0 %v2248
        %2750 = vmatpush.bf16.msra.mxu0 %v2240
        %2751 = vmatpush.bf16.msra.mxu0 %v2232
        %2752 = vmatmul.bf16.gmra.mxu0 %v1122
        %v2753 = vpop.f32.mrf.mxu0
        %v2754 = vadd.f32 %v2741, %v2753
        %v2755 = vpop.f32.mrf.mxu0
        %2756 = vdwg.mxu0
        %2757 = vmatpush.bf16.msra.mxu0 %v2352
        %2758 = vmatpush.bf16.msra.mxu0 %v2344
        %2759 = vmatpush.bf16.msra.mxu0 %v2336
        %2760 = vmatpush.bf16.msra.mxu0 %v2328
        %2761 = vmatpush.bf16.msra.mxu0 %v2320
        %2762 = vmatpush.bf16.msra.mxu0 %v2312
        %2763 = vmatpush.bf16.msra.mxu0 %v2304
        %2764 = vmatpush.bf16.msra.mxu0 %v2296
        %2765 = vmatmul.bf16.gmra.mxu0 %v1123
        %v2766 = vpop.f32.mrf.mxu0
        %v2767 = vadd.f32 %v2754, %v2766
        %v2768 = vpop.f32.mrf.mxu0
        %2769 = vdwg.mxu0
        %2770 = vmatpush.bf16.msra.mxu0 %v2416
        %2771 = vmatpush.bf16.msra.mxu0 %v2408
        %2772 = vmatpush.bf16.msra.mxu0 %v2400
        %2773 = vmatpush.bf16.msra.mxu0 %v2392
        %2774 = vmatpush.bf16.msra.mxu0 %v2384
        %2775 = vmatpush.bf16.msra.mxu0 %v2376
        %2776 = vmatpush.bf16.msra.mxu0 %v2368
        %2777 = vmatpush.bf16.msra.mxu0 %v2360
        %2778 = vmatmul.bf16.gmra.mxu0 %v1124
        %v2779 = vpop.f32.mrf.mxu0
        %v2780 = vadd.f32 %v2767, %v2779
        %v2781 = vpop.f32.mrf.mxu0
        %2782 = vdwg.mxu0
        %2783 = vmatpush.bf16.msra.mxu0 %v2225
        %2784 = vmatpush.bf16.msra.mxu0 %v2217
        %2785 = vmatpush.bf16.msra.mxu0 %v2209
        %2786 = vmatpush.bf16.msra.mxu0 %v2201
        %2787 = vmatpush.bf16.msra.mxu0 %v2193
        %2788 = vmatpush.bf16.msra.mxu0 %v2185
        %2789 = vmatpush.bf16.msra.mxu0 %v2177
        %2790 = vmatpush.bf16.msra.mxu0 %v2169
        %2791 = vmatmul.bf16.gmra.mxu0 %v1121
        %v2792 = vpop.f32.mrf.mxu0
        %v2793 = vadd.f32 %v1385, %v2792
        %v2794 = vpop.f32.mrf.mxu0
        %2795 = vdwg.mxu0
        %2796 = vmatpush.bf16.msra.mxu0 %v2289
        %2797 = vmatpush.bf16.msra.mxu0 %v2281
        %2798 = vmatpush.bf16.msra.mxu0 %v2273
        %2799 = vmatpush.bf16.msra.mxu0 %v2265
        %2800 = vmatpush.bf16.msra.mxu0 %v2257
        %2801 = vmatpush.bf16.msra.mxu0 %v2249
        %2802 = vmatpush.bf16.msra.mxu0 %v2241
        %2803 = vmatpush.bf16.msra.mxu0 %v2233
        %2804 = vmatmul.bf16.gmra.mxu0 %v1122
        %v2805 = vpop.f32.mrf.mxu0
        %v2806 = vadd.f32 %v2793, %v2805
        %v2807 = vpop.f32.mrf.mxu0
        %2808 = vdwg.mxu0
        %2809 = vmatpush.bf16.msra.mxu0 %v2353
        %2810 = vmatpush.bf16.msra.mxu0 %v2345
        %2811 = vmatpush.bf16.msra.mxu0 %v2337
        %2812 = vmatpush.bf16.msra.mxu0 %v2329
        %2813 = vmatpush.bf16.msra.mxu0 %v2321
        %2814 = vmatpush.bf16.msra.mxu0 %v2313
        %2815 = vmatpush.bf16.msra.mxu0 %v2305
        %2816 = vmatpush.bf16.msra.mxu0 %v2297
        %2817 = vmatmul.bf16.gmra.mxu0 %v1123
        %v2818 = vpop.f32.mrf.mxu0
        %v2819 = vadd.f32 %v2806, %v2818
        %v2820 = vpop.f32.mrf.mxu0
        %2821 = vdwg.mxu0
        %2822 = vmatpush.bf16.msra.mxu0 %v2417
        %2823 = vmatpush.bf16.msra.mxu0 %v2409
        %2824 = vmatpush.bf16.msra.mxu0 %v2401
        %2825 = vmatpush.bf16.msra.mxu0 %v2393
        %2826 = vmatpush.bf16.msra.mxu0 %v2385
        %2827 = vmatpush.bf16.msra.mxu0 %v2377
        %2828 = vmatpush.bf16.msra.mxu0 %v2369
        %2829 = vmatpush.bf16.msra.mxu0 %v2361
        %2830 = vmatmul.bf16.gmra.mxu0 %v1124
        %v2831 = vpop.f32.mrf.mxu0
        %v2832 = vadd.f32 %v2819, %v2831
        %v2833 = vpop.f32.mrf.mxu0
        %2834 = vdwg.mxu0
        %2835 = vmatpush.bf16.msra.mxu0 %v2226
        %2836 = vmatpush.bf16.msra.mxu0 %v2218
        %2837 = vmatpush.bf16.msra.mxu0 %v2210
        %2838 = vmatpush.bf16.msra.mxu0 %v2202
        %2839 = vmatpush.bf16.msra.mxu0 %v2194
        %2840 = vmatpush.bf16.msra.mxu0 %v2186
        %2841 = vmatpush.bf16.msra.mxu0 %v2178
        %2842 = vmatpush.bf16.msra.mxu0 %v2170
        %2843 = vmatmul.bf16.gmra.mxu0 %v1121
        %v2844 = vpop.f32.mrf.mxu0
        %v2845 = vadd.f32 %v1386, %v2844
        %v2846 = vpop.f32.mrf.mxu0
        %2847 = vdwg.mxu0
        %2848 = vmatpush.bf16.msra.mxu0 %v2290
        %2849 = vmatpush.bf16.msra.mxu0 %v2282
        %2850 = vmatpush.bf16.msra.mxu0 %v2274
        %2851 = vmatpush.bf16.msra.mxu0 %v2266
        %2852 = vmatpush.bf16.msra.mxu0 %v2258
        %2853 = vmatpush.bf16.msra.mxu0 %v2250
        %2854 = vmatpush.bf16.msra.mxu0 %v2242
        %2855 = vmatpush.bf16.msra.mxu0 %v2234
        %2856 = vmatmul.bf16.gmra.mxu0 %v1122
        %v2857 = vpop.f32.mrf.mxu0
        %v2858 = vadd.f32 %v2845, %v2857
        %v2859 = vpop.f32.mrf.mxu0
        %2860 = vdwg.mxu0
        %2861 = vmatpush.bf16.msra.mxu0 %v2354
        %2862 = vmatpush.bf16.msra.mxu0 %v2346
        %2863 = vmatpush.bf16.msra.mxu0 %v2338
        %2864 = vmatpush.bf16.msra.mxu0 %v2330
        %2865 = vmatpush.bf16.msra.mxu0 %v2322
        %2866 = vmatpush.bf16.msra.mxu0 %v2314
        %2867 = vmatpush.bf16.msra.mxu0 %v2306
        %2868 = vmatpush.bf16.msra.mxu0 %v2298
        %2869 = vmatmul.bf16.gmra.mxu0 %v1123
        %v2870 = vpop.f32.mrf.mxu0
        %v2871 = vadd.f32 %v2858, %v2870
        %v2872 = vpop.f32.mrf.mxu0
        %2873 = vdwg.mxu0
        %2874 = vmatpush.bf16.msra.mxu0 %v2418
        %2875 = vmatpush.bf16.msra.mxu0 %v2410
        %2876 = vmatpush.bf16.msra.mxu0 %v2402
        %2877 = vmatpush.bf16.msra.mxu0 %v2394
        %2878 = vmatpush.bf16.msra.mxu0 %v2386
        %2879 = vmatpush.bf16.msra.mxu0 %v2378
        %2880 = vmatpush.bf16.msra.mxu0 %v2370
        %2881 = vmatpush.bf16.msra.mxu0 %v2362
        %2882 = vmatmul.bf16.gmra.mxu0 %v1124
        %v2883 = vpop.f32.mrf.mxu0
        %v2884 = vadd.f32 %v2871, %v2883
        %v2885 = vpop.f32.mrf.mxu0
        %2886 = vdwg.mxu0
        %2887 = vmatpush.bf16.msra.mxu0 %v2227
        %2888 = vmatpush.bf16.msra.mxu0 %v2219
        %2889 = vmatpush.bf16.msra.mxu0 %v2211
        %2890 = vmatpush.bf16.msra.mxu0 %v2203
        %2891 = vmatpush.bf16.msra.mxu0 %v2195
        %2892 = vmatpush.bf16.msra.mxu0 %v2187
        %2893 = vmatpush.bf16.msra.mxu0 %v2179
        %2894 = vmatpush.bf16.msra.mxu0 %v2171
        %2895 = vmatmul.bf16.gmra.mxu0 %v1121
        %v2896 = vpop.f32.mrf.mxu0
        %v2897 = vadd.f32 %v1387, %v2896
        %v2898 = vpop.f32.mrf.mxu0
        %2899 = vdwg.mxu0
        %2900 = vmatpush.bf16.msra.mxu0 %v2291
        %2901 = vmatpush.bf16.msra.mxu0 %v2283
        %2902 = vmatpush.bf16.msra.mxu0 %v2275
        %2903 = vmatpush.bf16.msra.mxu0 %v2267
        %2904 = vmatpush.bf16.msra.mxu0 %v2259
        %2905 = vmatpush.bf16.msra.mxu0 %v2251
        %2906 = vmatpush.bf16.msra.mxu0 %v2243
        %2907 = vmatpush.bf16.msra.mxu0 %v2235
        %2908 = vmatmul.bf16.gmra.mxu0 %v1122
        %v2909 = vpop.f32.mrf.mxu0
        %v2910 = vadd.f32 %v2897, %v2909
        %v2911 = vpop.f32.mrf.mxu0
        %2912 = vdwg.mxu0
        %2913 = vmatpush.bf16.msra.mxu0 %v2355
        %2914 = vmatpush.bf16.msra.mxu0 %v2347
        %2915 = vmatpush.bf16.msra.mxu0 %v2339
        %2916 = vmatpush.bf16.msra.mxu0 %v2331
        %2917 = vmatpush.bf16.msra.mxu0 %v2323
        %2918 = vmatpush.bf16.msra.mxu0 %v2315
        %2919 = vmatpush.bf16.msra.mxu0 %v2307
        %2920 = vmatpush.bf16.msra.mxu0 %v2299
        %2921 = vmatmul.bf16.gmra.mxu0 %v1123
        %v2922 = vpop.f32.mrf.mxu0
        %v2923 = vadd.f32 %v2910, %v2922
        %v2924 = vpop.f32.mrf.mxu0
        %2925 = vdwg.mxu0
        %2926 = vmatpush.bf16.msra.mxu0 %v2419
        %2927 = vmatpush.bf16.msra.mxu0 %v2411
        %2928 = vmatpush.bf16.msra.mxu0 %v2403
        %2929 = vmatpush.bf16.msra.mxu0 %v2395
        %2930 = vmatpush.bf16.msra.mxu0 %v2387
        %2931 = vmatpush.bf16.msra.mxu0 %v2379
        %2932 = vmatpush.bf16.msra.mxu0 %v2371
        %2933 = vmatpush.bf16.msra.mxu0 %v2363
        %2934 = vmatmul.bf16.gmra.mxu0 %v1124
        %v2935 = vpop.f32.mrf.mxu0
        %v2936 = vadd.f32 %v2923, %v2935
        %v2937 = vpop.f32.mrf.mxu0
        %2938 = vdwg.mxu0
        %2939 = vmatpush.bf16.msra.mxu0 %v2228
        %2940 = vmatpush.bf16.msra.mxu0 %v2220
        %2941 = vmatpush.bf16.msra.mxu0 %v2212
        %2942 = vmatpush.bf16.msra.mxu0 %v2204
        %2943 = vmatpush.bf16.msra.mxu0 %v2196
        %2944 = vmatpush.bf16.msra.mxu0 %v2188
        %2945 = vmatpush.bf16.msra.mxu0 %v2180
        %2946 = vmatpush.bf16.msra.mxu0 %v2172
        %2947 = vmatmul.bf16.gmra.mxu0 %v1121
        %v2948 = vpop.f32.mrf.mxu0
        %v2949 = vadd.f32 %v1388, %v2948
        %v2950 = vpop.f32.mrf.mxu0
        %2951 = vdwg.mxu0
        %2952 = vmatpush.bf16.msra.mxu0 %v2292
        %2953 = vmatpush.bf16.msra.mxu0 %v2284
        %2954 = vmatpush.bf16.msra.mxu0 %v2276
        %2955 = vmatpush.bf16.msra.mxu0 %v2268
        %2956 = vmatpush.bf16.msra.mxu0 %v2260
        %2957 = vmatpush.bf16.msra.mxu0 %v2252
        %2958 = vmatpush.bf16.msra.mxu0 %v2244
        %2959 = vmatpush.bf16.msra.mxu0 %v2236
        %2960 = vmatmul.bf16.gmra.mxu0 %v1122
        %v2961 = vpop.f32.mrf.mxu0
        %v2962 = vadd.f32 %v2949, %v2961
        %v2963 = vpop.f32.mrf.mxu0
        %2964 = vdwg.mxu0
        %2965 = vmatpush.bf16.msra.mxu0 %v2356
        %2966 = vmatpush.bf16.msra.mxu0 %v2348
        %2967 = vmatpush.bf16.msra.mxu0 %v2340
        %2968 = vmatpush.bf16.msra.mxu0 %v2332
        %2969 = vmatpush.bf16.msra.mxu0 %v2324
        %2970 = vmatpush.bf16.msra.mxu0 %v2316
        %2971 = vmatpush.bf16.msra.mxu0 %v2308
        %2972 = vmatpush.bf16.msra.mxu0 %v2300
        %2973 = vmatmul.bf16.gmra.mxu0 %v1123
        %v2974 = vpop.f32.mrf.mxu0
        %v2975 = vadd.f32 %v2962, %v2974
        %v2976 = vpop.f32.mrf.mxu0
        %2977 = vdwg.mxu0
        %2978 = vmatpush.bf16.msra.mxu0 %v2420
        %2979 = vmatpush.bf16.msra.mxu0 %v2412
        %2980 = vmatpush.bf16.msra.mxu0 %v2404
        %2981 = vmatpush.bf16.msra.mxu0 %v2396
        %2982 = vmatpush.bf16.msra.mxu0 %v2388
        %2983 = vmatpush.bf16.msra.mxu0 %v2380
        %2984 = vmatpush.bf16.msra.mxu0 %v2372
        %2985 = vmatpush.bf16.msra.mxu0 %v2364
        %2986 = vmatmul.bf16.gmra.mxu0 %v1124
        %v2987 = vpop.f32.mrf.mxu0
        %v2988 = vadd.f32 %v2975, %v2987
        %v2989 = vpop.f32.mrf.mxu0
        %2990 = vdwg.mxu0
        %2991 = vmatpush.bf16.msra.mxu0 %v2229
        %2992 = vmatpush.bf16.msra.mxu0 %v2221
        %2993 = vmatpush.bf16.msra.mxu0 %v2213
        %2994 = vmatpush.bf16.msra.mxu0 %v2205
        %2995 = vmatpush.bf16.msra.mxu0 %v2197
        %2996 = vmatpush.bf16.msra.mxu0 %v2189
        %2997 = vmatpush.bf16.msra.mxu0 %v2181
        %2998 = vmatpush.bf16.msra.mxu0 %v2173
        %2999 = vmatmul.bf16.gmra.mxu0 %v1121
        %v3000 = vpop.f32.mrf.mxu0
        %v3001 = vadd.f32 %v1389, %v3000
        %v3002 = vpop.f32.mrf.mxu0
        %3003 = vdwg.mxu0
        %3004 = vmatpush.bf16.msra.mxu0 %v2293
        %3005 = vmatpush.bf16.msra.mxu0 %v2285
        %3006 = vmatpush.bf16.msra.mxu0 %v2277
        %3007 = vmatpush.bf16.msra.mxu0 %v2269
        %3008 = vmatpush.bf16.msra.mxu0 %v2261
        %3009 = vmatpush.bf16.msra.mxu0 %v2253
        %3010 = vmatpush.bf16.msra.mxu0 %v2245
        %3011 = vmatpush.bf16.msra.mxu0 %v2237
        %3012 = vmatmul.bf16.gmra.mxu0 %v1122
        %v3013 = vpop.f32.mrf.mxu0
        %v3014 = vadd.f32 %v3001, %v3013
        %v3015 = vpop.f32.mrf.mxu0
        %3016 = vdwg.mxu0
        %3017 = vmatpush.bf16.msra.mxu0 %v2357
        %3018 = vmatpush.bf16.msra.mxu0 %v2349
        %3019 = vmatpush.bf16.msra.mxu0 %v2341
        %3020 = vmatpush.bf16.msra.mxu0 %v2333
        %3021 = vmatpush.bf16.msra.mxu0 %v2325
        %3022 = vmatpush.bf16.msra.mxu0 %v2317
        %3023 = vmatpush.bf16.msra.mxu0 %v2309
        %3024 = vmatpush.bf16.msra.mxu0 %v2301
        %3025 = vmatmul.bf16.gmra.mxu0 %v1123
        %v3026 = vpop.f32.mrf.mxu0
        %v3027 = vadd.f32 %v3014, %v3026
        %v3028 = vpop.f32.mrf.mxu0
        %3029 = vdwg.mxu0
        %3030 = vmatpush.bf16.msra.mxu0 %v2421
        %3031 = vmatpush.bf16.msra.mxu0 %v2413
        %3032 = vmatpush.bf16.msra.mxu0 %v2405
        %3033 = vmatpush.bf16.msra.mxu0 %v2397
        %3034 = vmatpush.bf16.msra.mxu0 %v2389
        %3035 = vmatpush.bf16.msra.mxu0 %v2381
        %3036 = vmatpush.bf16.msra.mxu0 %v2373
        %3037 = vmatpush.bf16.msra.mxu0 %v2365
        %3038 = vmatmul.bf16.gmra.mxu0 %v1124
        %v3039 = vpop.f32.mrf.mxu0
        %v3040 = vadd.f32 %v3027, %v3039
        %v3041 = vpop.f32.mrf.mxu0
        %3042 = vdwg.mxu0
        %3043 = vmatpush.bf16.msra.mxu0 %v2230
        %3044 = vmatpush.bf16.msra.mxu0 %v2222
        %3045 = vmatpush.bf16.msra.mxu0 %v2214
        %3046 = vmatpush.bf16.msra.mxu0 %v2206
        %3047 = vmatpush.bf16.msra.mxu0 %v2198
        %3048 = vmatpush.bf16.msra.mxu0 %v2190
        %3049 = vmatpush.bf16.msra.mxu0 %v2182
        %3050 = vmatpush.bf16.msra.mxu0 %v2174
        %3051 = vmatmul.bf16.gmra.mxu0 %v1121
        %v3052 = vpop.f32.mrf.mxu0
        %v3053 = vadd.f32 %v1390, %v3052
        %v3054 = vpop.f32.mrf.mxu0
        %3055 = vdwg.mxu0
        %3056 = vmatpush.bf16.msra.mxu0 %v2294
        %3057 = vmatpush.bf16.msra.mxu0 %v2286
        %3058 = vmatpush.bf16.msra.mxu0 %v2278
        %3059 = vmatpush.bf16.msra.mxu0 %v2270
        %3060 = vmatpush.bf16.msra.mxu0 %v2262
        %3061 = vmatpush.bf16.msra.mxu0 %v2254
        %3062 = vmatpush.bf16.msra.mxu0 %v2246
        %3063 = vmatpush.bf16.msra.mxu0 %v2238
        %3064 = vmatmul.bf16.gmra.mxu0 %v1122
        %v3065 = vpop.f32.mrf.mxu0
        %v3066 = vadd.f32 %v3053, %v3065
        %v3067 = vpop.f32.mrf.mxu0
        %3068 = vdwg.mxu0
        %3069 = vmatpush.bf16.msra.mxu0 %v2358
        %3070 = vmatpush.bf16.msra.mxu0 %v2350
        %3071 = vmatpush.bf16.msra.mxu0 %v2342
        %3072 = vmatpush.bf16.msra.mxu0 %v2334
        %3073 = vmatpush.bf16.msra.mxu0 %v2326
        %3074 = vmatpush.bf16.msra.mxu0 %v2318
        %3075 = vmatpush.bf16.msra.mxu0 %v2310
        %3076 = vmatpush.bf16.msra.mxu0 %v2302
        %3077 = vmatmul.bf16.gmra.mxu0 %v1123
        %v3078 = vpop.f32.mrf.mxu0
        %v3079 = vadd.f32 %v3066, %v3078
        %v3080 = vpop.f32.mrf.mxu0
        %3081 = vdwg.mxu0
        %3082 = vmatpush.bf16.msra.mxu0 %v2422
        %3083 = vmatpush.bf16.msra.mxu0 %v2414
        %3084 = vmatpush.bf16.msra.mxu0 %v2406
        %3085 = vmatpush.bf16.msra.mxu0 %v2398
        %3086 = vmatpush.bf16.msra.mxu0 %v2390
        %3087 = vmatpush.bf16.msra.mxu0 %v2382
        %3088 = vmatpush.bf16.msra.mxu0 %v2374
        %3089 = vmatpush.bf16.msra.mxu0 %v2366
        %3090 = vmatmul.bf16.gmra.mxu0 %v1124
        %v3091 = vpop.f32.mrf.mxu0
        %v3092 = vadd.f32 %v3079, %v3091
        %v3093 = vpop.f32.mrf.mxu0
        %3094 = vdwg.mxu0
        %v3095 = vmax.f32 %v2728, 0.0
        %v3096 = vmax.f32 %v2780, 0.0
        %v3097 = vmax.f32 %v2832, 0.0
        %v3098 = vmax.f32 %v2884, 0.0
        %v3099 = vmax.f32 %v2936, 0.0
        %v3100 = vmax.f32 %v2988, 0.0
        %v3101 = vmax.f32 %v3040, 0.0
        %v3102 = vmax.f32 %v3092, 0.0
        %v3103 = vpack.c.bf16 %v3095, %v3095
        %v3104 = vpack.c.bf16 %v3096, %v3096
        %v3105 = vpack.c.bf16 %v3097, %v3097
        %v3106 = vpack.c.bf16 %v3098, %v3098
        %v3107 = vpack.c.bf16 %v3099, %v3099
        %v3108 = vpack.c.bf16 %v3100, %v3100
        %v3109 = vpack.c.bf16 %v3101, %v3101
        %v3110 = vpack.c.bf16 %v3102, %v3102
        %v3111 = vld [vmem:[%s426] sm:$0xff]
        %v3112 = vld [vmem:[%s426 + $0x8] sm:$0xff]
        %v3113 = vld [vmem:[%s426 + $0x10] sm:$0xf]
        %v3114 = vld [vmem:[%s426 + $0x14] sm:$0xff]
        %v3115 = vld [vmem:[%s426 + $0x1c] sm:$0xff]
        %v3116 = vld [vmem:[%s426 + $0x24] sm:$0xf]
        %v3117 = vld [vmem:[%s426 + $0x28] sm:$0xff]
        %v3118 = vld [vmem:[%s426 + $0x30] sm:$0xff]
        %v3119 = vld [vmem:[%s426 + $0x38] sm:$0xf]
        %v3120 = vld [vmem:[%s426 + $0x3c] sm:$0xff]
        %v3121 = vld [vmem:[%s426 + $0x44] sm:$0xff]
        %v3122 = vld [vmem:[%s426 + $0x4c] sm:$0xf]
        %v3123 = vld [vmem:[%s426 + $0x50] sm:$0xff]
        %v3124 = vld [vmem:[%s426 + $0x58] sm:$0xff]
        %v3125 = vld [vmem:[%s426 + $0x60] sm:$0xf]
        %v3126 = vld [vmem:[%s426 + $0x64] sm:$0xff]
        %v3127 = vld [vmem:[%s426 + $0x6c] sm:$0xff]
        %v3128 = vld [vmem:[%s426 + $0x74] sm:$0xf]
        %v3129 = vld [vmem:[%s426 + $0x78] sm:$0xff]
        %v3130 = vld [vmem:[%s426 + $0x80] sm:$0xff]
        %v3131 = vld [vmem:[%s426 + $0x88] sm:$0xf]
        %v3132 = vld [vmem:[%s426 + $0x8c] sm:$0xff]
        %v3133 = vld [vmem:[%s426 + $0x94] sm:$0xff]
        %v3134 = vld [vmem:[%s426 + $0x9c] sm:$0xf]
        %v3135 = vld [vmem:[%s426 + $0xa0] sm:$0xff]
        %v3136 = vld [vmem:[%s426 + $0xa8] sm:$0xff]
        %v3137 = vld [vmem:[%s426 + $0xb0] sm:$0xf]
        %v3138 = vld [vmem:[%s426 + $0xb4] sm:$0xff]
        %v3139 = vld [vmem:[%s426 + $0xbc] sm:$0xff]
        %v3140 = vld [vmem:[%s426 + $0xc4] sm:$0xf]
        %v3141 = vld [vmem:[%s426 + $0xc8] sm:$0xff]
        %v3142 = vld [vmem:[%s426 + $0xd0] sm:$0xff]
        %v3143 = vld [vmem:[%s426 + $0xd8] sm:$0xf]
        %v3144 = vld [vmem:[%s426 + $0xdc] sm:$0xff]
        %v3145 = vld [vmem:[%s426 + $0xe4] sm:$0xff]
        %v3146 = vld [vmem:[%s426 + $0xec] sm:$0xf]
        %v3147 = vld [vmem:[%s426 + $0xf0] sm:$0xff]
        %v3148 = vld [vmem:[%s426 + $0xf8] sm:$0xff]
        %v3149 = vld [vmem:[%s426 + $0x100] sm:$0xf]
        %v3150 = vld [vmem:[%s426 + $0x104] sm:$0xff]
        %v3151 = vld [vmem:[%s426 + $0x10c] sm:$0xff]
        %v3152 = vld [vmem:[%s426 + $0x114] sm:$0xf]
        %v3153 = vld [vmem:[%s426 + $0x118] sm:$0xff]
        %v3154 = vld [vmem:[%s426 + $0x120] sm:$0xff]
        %v3155 = vld [vmem:[%s426 + $0x128] sm:$0xf]
        %v3156 = vld [vmem:[%s426 + $0x12c] sm:$0xff]
        %v3157 = vld [vmem:[%s426 + $0x134] sm:$0xff]
        %v3158 = vld [vmem:[%s426 + $0x13c] sm:$0xf]
        %v3159 = vld [vmem:[%s426 + $0x140] sm:$0xff]
        %v3160 = vld [vmem:[%s426 + $0x148] sm:$0xff]
        %v3161 = vld [vmem:[%s426 + $0x150] sm:$0xf]
        %v3162 = vld [vmem:[%s426 + $0x154] sm:$0xff]
        %v3163 = vld [vmem:[%s426 + $0x15c] sm:$0xff]
        %v3164 = vld [vmem:[%s426 + $0x164] sm:$0xf]
        %v3165 = vld [vmem:[%s426 + $0x168] sm:$0xff]
        %v3166 = vld [vmem:[%s426 + $0x170] sm:$0xff]
        %v3167 = vld [vmem:[%s426 + $0x178] sm:$0xf]
        %v3168 = vld [vmem:[%s426 + $0x17c] sm:$0xff]
        %v3169 = vld [vmem:[%s426 + $0x184] sm:$0xff]
        %v3170 = vld [vmem:[%s426 + $0x18c] sm:$0xf]
        %v3171 = vld [vmem:[%s426 + $0x190] sm:$0xff]
        %v3172 = vld [vmem:[%s426 + $0x198] sm:$0xff]
        %v3173 = vld [vmem:[%s426 + $0x1a0] sm:$0xf]
        %v3174 = vld [vmem:[%s426 + $0x1a4] sm:$0xff]
        %v3175 = vld [vmem:[%s426 + $0x1ac] sm:$0xff]
        %v3176 = vld [vmem:[%s426 + $0x1b4] sm:$0xf]
        %v3177 = vld [vmem:[%s426 + $0x1b8] sm:$0xff]
        %v3178 = vld [vmem:[%s426 + $0x1c0] sm:$0xff]
        %v3179 = vld [vmem:[%s426 + $0x1c8] sm:$0xf]
        %v3180 = vld [vmem:[%s426 + $0x1cc] sm:$0xff]
        %v3181 = vld [vmem:[%s426 + $0x1d4] sm:$0xff]
        %v3182 = vld [vmem:[%s426 + $0x1dc] sm:$0xf]
        %v3183 = vld [vmem:[%s426 + $0x1e0] sm:$0xff]
        %v3184 = vld [vmem:[%s426 + $0x1e8] sm:$0xff]
        %v3185 = vld [vmem:[%s426 + $0x1f0] sm:$0xf]
        %v3186 = vld [vmem:[%s426 + $0x1f4] sm:$0xff]
        %v3187 = vld [vmem:[%s426 + $0x1fc] sm:$0xff]
        %v3188 = vld [vmem:[%s426 + $0x204] sm:$0xf]
        %v3189 = vld [vmem:[%s426 + $0x208] sm:$0xff]
        %v3190 = vld [vmem:[%s426 + $0x210] sm:$0xff]
        %v3191 = vld [vmem:[%s426 + $0x218] sm:$0xf]
        %v3192 = vld [vmem:[%s426 + $0x21c] sm:$0xff]
        %v3193 = vld [vmem:[%s426 + $0x224] sm:$0xff]
        %v3194 = vld [vmem:[%s426 + $0x22c] sm:$0xf]
        %v3195 = vld [vmem:[%s426 + $0x230] sm:$0xff]
        %v3196 = vld [vmem:[%s426 + $0x238] sm:$0xff]
        %v3197 = vld [vmem:[%s426 + $0x240] sm:$0xf]
        %v3198 = vld [vmem:[%s426 + $0x244] sm:$0xff]
        %v3199 = vld [vmem:[%s426 + $0x24c] sm:$0xff]
        %v3200 = vld [vmem:[%s426 + $0x254] sm:$0xf]
        %v3201 = vld [vmem:[%s426 + $0x258] sm:$0xff]
        %v3202 = vld [vmem:[%s426 + $0x260] sm:$0xff]
        %v3203 = vld [vmem:[%s426 + $0x268] sm:$0xf]
        %v3204 = vld [vmem:[%s426 + $0x26c] sm:$0xff]
        %v3205 = vld [vmem:[%s426 + $0x274] sm:$0xff]
        %v3206 = vld [vmem:[%s426 + $0x27c] sm:$0xf]
        %v3207 = vld [vmem:[%s426 + $0x280] sm:$0xff]
        %v3208 = vld [vmem:[%s426 + $0x288] sm:$0xff]
        %v3209 = vld [vmem:[%s426 + $0x290] sm:$0xf]
        %v3210 = vld [vmem:[%s426 + $0x294] sm:$0xff]
        %v3211 = vld [vmem:[%s426 + $0x29c] sm:$0xff]
        %v3212 = vld [vmem:[%s426 + $0x2a4] sm:$0xf]
        %v3213 = vld [vmem:[%s426 + $0x2a8] sm:$0xff]
        %v3214 = vld [vmem:[%s426 + $0x2b0] sm:$0xff]
        %v3215 = vld [vmem:[%s426 + $0x2b8] sm:$0xf]
        %v3216 = vld [vmem:[%s426 + $0x2bc] sm:$0xff]
        %v3217 = vld [vmem:[%s426 + $0x2c4] sm:$0xff]
        %v3218 = vld [vmem:[%s426 + $0x2cc] sm:$0xf]
        %v3219 = vld [vmem:[%s426 + $0x2d0] sm:$0xff]
        %v3220 = vld [vmem:[%s426 + $0x2d8] sm:$0xff]
        %v3221 = vld [vmem:[%s426 + $0x2e0] sm:$0xf]
        %v3222 = vld [vmem:[%s426 + $0x2e4] sm:$0xff]
        %v3223 = vld [vmem:[%s426 + $0x2ec] sm:$0xff]
        %v3224 = vld [vmem:[%s426 + $0x2f4] sm:$0xf]
        %v3225 = vld [vmem:[%s426 + $0x2f8] sm:$0xff]
        %v3226 = vld [vmem:[%s426 + $0x300] sm:$0xff]
        %v3227 = vld [vmem:[%s426 + $0x308] sm:$0xf]
        %v3228 = vld [vmem:[%s426 + $0x30c] sm:$0xff]
        %v3229 = vld [vmem:[%s426 + $0x314] sm:$0xff]
        %v3230 = vld [vmem:[%s426 + $0x31c] sm:$0xf]
        %v3231 = vld [vmem:[%s426 + $0x320] sm:$0xff]
        %v3232 = vld [vmem:[%s426 + $0x328] sm:$0xff]
        %v3233 = vld [vmem:[%s426 + $0x330] sm:$0xf]
        %v3234 = vld [vmem:[%s426 + $0x334] sm:$0xff]
        %v3235 = vld [vmem:[%s426 + $0x33c] sm:$0xff]
        %v3236 = vld [vmem:[%s426 + $0x344] sm:$0xf]
        %v3237 = vld [vmem:[%s426 + $0x348] sm:$0xff]
        %v3238 = vld [vmem:[%s426 + $0x350] sm:$0xff]
        %v3239 = vld [vmem:[%s426 + $0x358] sm:$0xf]
        %v3240 = vld [vmem:[%s426 + $0x35c] sm:$0xff]
        %v3241 = vld [vmem:[%s426 + $0x364] sm:$0xff]
        %v3242 = vld [vmem:[%s426 + $0x36c] sm:$0xf]
        %v3243 = vld [vmem:[%s426 + $0x370] sm:$0xff]
        %v3244 = vld [vmem:[%s426 + $0x378] sm:$0xff]
        %v3245 = vld [vmem:[%s426 + $0x380] sm:$0xf]
        %v3246 = vld [vmem:[%s426 + $0x384] sm:$0xff]
        %v3247 = vld [vmem:[%s426 + $0x38c] sm:$0xff]
        %v3248 = vld [vmem:[%s426 + $0x394] sm:$0xf]
        %v3249 = vld [vmem:[%s426 + $0x398] sm:$0xff]
        %v3250 = vld [vmem:[%s426 + $0x3a0] sm:$0xff]
        %v3251 = vld [vmem:[%s426 + $0x3a8] sm:$0xf]
        %v3252 = vld [vmem:[%s426 + $0x3ac] sm:$0xff]
        %v3253 = vld [vmem:[%s426 + $0x3b4] sm:$0xff]
        %v3254 = vld [vmem:[%s426 + $0x3bc] sm:$0xf]
        %v3255 = vld [vmem:[%s426 + $0x3c0] sm:$0xff]
        %v3256 = vld [vmem:[%s426 + $0x3c8] sm:$0xff]
        %v3257 = vld [vmem:[%s426 + $0x3d0] sm:$0xf]
        %v3258 = vld [vmem:[%s426 + $0x3d4] sm:$0xff]
        %v3259 = vld [vmem:[%s426 + $0x3dc] sm:$0xff]
        %v3260 = vld [vmem:[%s426 + $0x3e4] sm:$0xf]
        %v3261 = vld [vmem:[%s426 + $0x3e8] sm:$0xff]
        %v3262 = vld [vmem:[%s426 + $0x3f0] sm:$0xff]
        %v3263 = vld [vmem:[%s426 + $0x3f8] sm:$0xf]
        %v3264 = vld [vmem:[%s426 + $0x3fc] sm:$0xff]
        %v3265 = vld [vmem:[%s426 + $0x404] sm:$0xff]
        %v3266 = vld [vmem:[%s426 + $0x40c] sm:$0xf]
        %v3267 = vld [vmem:[%s426 + $0x410] sm:$0xff]
        %v3268 = vld [vmem:[%s426 + $0x418] sm:$0xff]
        %v3269 = vld [vmem:[%s426 + $0x420] sm:$0xf]
        %v3270 = vld [vmem:[%s426 + $0x424] sm:$0xff]
        %v3271 = vld [vmem:[%s426 + $0x42c] sm:$0xff]
        %v3272 = vld [vmem:[%s426 + $0x434] sm:$0xf]
        %v3273 = vld [vmem:[%s426 + $0x438] sm:$0xff]
        %v3274 = vld [vmem:[%s426 + $0x440] sm:$0xff]
        %v3275 = vld [vmem:[%s426 + $0x448] sm:$0xf]
        %v3276 = vld [vmem:[%s426 + $0x44c] sm:$0xff]
        %v3277 = vld [vmem:[%s426 + $0x454] sm:$0xff]
        %v3278 = vld [vmem:[%s426 + $0x45c] sm:$0xf]
        %v3279 = vld [vmem:[%s426 + $0x460] sm:$0xff]
        %v3280 = vld [vmem:[%s426 + $0x468] sm:$0xff]
        %v3281 = vld [vmem:[%s426 + $0x470] sm:$0xf]
        %v3282 = vld [vmem:[%s426 + $0x474] sm:$0xff]
        %v3283 = vld [vmem:[%s426 + $0x47c] sm:$0xff]
        %v3284 = vld [vmem:[%s426 + $0x484] sm:$0xf]
        %v3285 = vld [vmem:[%s426 + $0x488] sm:$0xff]
        %v3286 = vld [vmem:[%s426 + $0x490] sm:$0xff]
        %v3287 = vld [vmem:[%s426 + $0x498] sm:$0xf]
        %v3288 = vld [vmem:[%s426 + $0x49c] sm:$0xff]
        %v3289 = vld [vmem:[%s426 + $0x4a4] sm:$0xff]
        %v3290 = vld [vmem:[%s426 + $0x4ac] sm:$0xf]
        %v3291 = vld [vmem:[%s426 + $0x4b0] sm:$0xff]
        %v3292 = vld [vmem:[%s426 + $0x4b8] sm:$0xff]
        %v3293 = vld [vmem:[%s426 + $0x4c0] sm:$0xf]
        %v3294 = vld [vmem:[%s426 + $0x4c4] sm:$0xff]
        %v3295 = vld [vmem:[%s426 + $0x4cc] sm:$0xff]
        %v3296 = vld [vmem:[%s426 + $0x4d4] sm:$0xf]
        %v3297 = vld [vmem:[%s426 + $0x4d8] sm:$0xff]
        %v3298 = vld [vmem:[%s426 + $0x4e0] sm:$0xff]
        %v3299 = vld [vmem:[%s426 + $0x4e8] sm:$0xf]
        %v3300 = vld [vmem:[%s426 + $0x4ec] sm:$0xff]
        %v3301 = vld [vmem:[%s426 + $0x4f4] sm:$0xff]
        %v3302 = vld [vmem:[%s426 + $0x4fc] sm:$0xf]
        %v3303 = vld [vmem:[%s426 + $0x500] sm:$0xff]
        %v3304 = vld [vmem:[%s426 + $0x508] sm:$0xff]
        %v3305 = vld [vmem:[%s426 + $0x510] sm:$0xf]
        %v3306 = vld [vmem:[%s426 + $0x514] sm:$0xff]
        %v3307 = vld [vmem:[%s426 + $0x51c] sm:$0xff]
        %v3308 = vld [vmem:[%s426 + $0x524] sm:$0xf]
        %v3309 = vld [vmem:[%s426 + $0x528] sm:$0xff]
        %v3310 = vld [vmem:[%s426 + $0x530] sm:$0xff]
        %v3311 = vld [vmem:[%s426 + $0x538] sm:$0xf]
        %v3312 = vld [vmem:[%s426 + $0x53c] sm:$0xff]
        %v3313 = vld [vmem:[%s426 + $0x544] sm:$0xff]
        %v3314 = vld [vmem:[%s426 + $0x54c] sm:$0xf]
        %v3315 = vld [vmem:[%s426 + $0x550] sm:$0xff]
        %v3316 = vld [vmem:[%s426 + $0x558] sm:$0xff]
        %v3317 = vld [vmem:[%s426 + $0x560] sm:$0xf]
        %v3318 = vld [vmem:[%s426 + $0x564] sm:$0xff]
        %v3319 = vld [vmem:[%s426 + $0x56c] sm:$0xff]
        %v3320 = vld [vmem:[%s426 + $0x574] sm:$0xf]
        %v3321 = vld [vmem:[%s426 + $0x578] sm:$0xff]
        %v3322 = vld [vmem:[%s426 + $0x580] sm:$0xff]
        %v3323 = vld [vmem:[%s426 + $0x588] sm:$0xf]
        %v3324 = vld [vmem:[%s426 + $0x58c] sm:$0xff]
        %v3325 = vld [vmem:[%s426 + $0x594] sm:$0xff]
        %v3326 = vld [vmem:[%s426 + $0x59c] sm:$0xf]
        %v3327 = vld [vmem:[%s426 + $0x5a0] sm:$0xff]
        %v3328 = vld [vmem:[%s426 + $0x5a8] sm:$0xff]
        %v3329 = vld [vmem:[%s426 + $0x5b0] sm:$0xf]
        %v3330 = vld [vmem:[%s426 + $0x5b4] sm:$0xff]
        %v3331 = vld [vmem:[%s426 + $0x5bc] sm:$0xff]
        %v3332 = vld [vmem:[%s426 + $0x5c4] sm:$0xf]
        %v3333 = vld [vmem:[%s426 + $0x5c8] sm:$0xff]
        %v3334 = vld [vmem:[%s426 + $0x5d0] sm:$0xff]
        %v3335 = vld [vmem:[%s426 + $0x5d8] sm:$0xf]
        %v3336 = vld [vmem:[%s426 + $0x5dc] sm:$0xff]
        %v3337 = vld [vmem:[%s426 + $0x5e4] sm:$0xff]
        %v3338 = vld [vmem:[%s426 + $0x5ec] sm:$0xf]
        %v3339 = vld [vmem:[%s426 + $0x5f0] sm:$0xff]
        %v3340 = vld [vmem:[%s426 + $0x5f8] sm:$0xff]
        %v3341 = vld [vmem:[%s426 + $0x600] sm:$0xf]
        %v3342 = vld [vmem:[%s426 + $0x604] sm:$0xff]
        %v3343 = vld [vmem:[%s426 + $0x60c] sm:$0xff]
        %v3344 = vld [vmem:[%s426 + $0x614] sm:$0xf]
        %v3345 = vld [vmem:[%s426 + $0x618] sm:$0xff]
        %v3346 = vld [vmem:[%s426 + $0x620] sm:$0xff]
        %v3347 = vld [vmem:[%s426 + $0x628] sm:$0xf]
        %v3348 = vld [vmem:[%s426 + $0x62c] sm:$0xff]
        %v3349 = vld [vmem:[%s426 + $0x634] sm:$0xff]
        %v3350 = vld [vmem:[%s426 + $0x63c] sm:$0xf]
        %v3351 = vld [vmem:[%s426 + $0x640] sm:$0xff]
        %v3352 = vld [vmem:[%s426 + $0x648] sm:$0xff]
        %v3353 = vld [vmem:[%s426 + $0x650] sm:$0xf]
        %v3354 = vld [vmem:[%s426 + $0x654] sm:$0xff]
        %v3355 = vld [vmem:[%s426 + $0x65c] sm:$0xff]
        %v3356 = vld [vmem:[%s426 + $0x664] sm:$0xf]
        %v3357 = vld [vmem:[%s426 + $0x668] sm:$0xff]
        %v3358 = vld [vmem:[%s426 + $0x670] sm:$0xff]
        %v3359 = vld [vmem:[%s426 + $0x678] sm:$0xf]
        %v3360 = vld [vmem:[%s426 + $0x67c] sm:$0xff]
        %v3361 = vld [vmem:[%s426 + $0x684] sm:$0xff]
        %v3362 = vld [vmem:[%s426 + $0x68c] sm:$0xf]
        %v3363 = vld [vmem:[%s426 + $0x690] sm:$0xff]
        %v3364 = vld [vmem:[%s426 + $0x698] sm:$0xff]
        %v3365 = vld [vmem:[%s426 + $0x6a0] sm:$0xf]
        %v3366 = vld [vmem:[%s426 + $0x6a4] sm:$0xff]
        %v3367 = vld [vmem:[%s426 + $0x6ac] sm:$0xff]
        %v3368 = vld [vmem:[%s426 + $0x6b4] sm:$0xf]
        %v3369 = vld [vmem:[%s426 + $0x6b8] sm:$0xff]
        %v3370 = vld [vmem:[%s426 + $0x6c0] sm:$0xff]
        %v3371 = vld [vmem:[%s426 + $0x6c8] sm:$0xf]
        %v3372 = vld [vmem:[%s426 + $0x6cc] sm:$0xff]
        %v3373 = vld [vmem:[%s426 + $0x6d4] sm:$0xff]
        %v3374 = vld [vmem:[%s426 + $0x6dc] sm:$0xf]
        %v3375 = vld [vmem:[%s426 + $0x6e0] sm:$0xff]
        %v3376 = vld [vmem:[%s426 + $0x6e8] sm:$0xff]
        %v3377 = vld [vmem:[%s426 + $0x6f0] sm:$0xf]
        %v3378 = vld [vmem:[%s426 + $0x6f4] sm:$0xff]
        %v3379 = vld [vmem:[%s426 + $0x6fc] sm:$0xff]
        %v3380 = vld [vmem:[%s426 + $0x704] sm:$0xf]
        %v3381 = vld [vmem:[%s426 + $0x708] sm:$0xff]
        %v3382 = vld [vmem:[%s426 + $0x710] sm:$0xff]
        %v3383 = vld [vmem:[%s426 + $0x718] sm:$0xf]
        %v3384 = vld [vmem:[%s426 + $0x71c] sm:$0xff]
        %v3385 = vld [vmem:[%s426 + $0x724] sm:$0xff]
        %v3386 = vld [vmem:[%s426 + $0x72c] sm:$0xf]
        %v3387 = vld [vmem:[%s426 + $0x730] sm:$0xff]
        %v3388 = vld [vmem:[%s426 + $0x738] sm:$0xff]
        %v3389 = vld [vmem:[%s426 + $0x740] sm:$0xf]
        %v3390 = vld [vmem:[%s426 + $0x744] sm:$0xff]
        %v3391 = vld [vmem:[%s426 + $0x74c] sm:$0xff]
        %v3392 = vld [vmem:[%s426 + $0x754] sm:$0xf]
        %v3393 = vld [vmem:[%s426 + $0x758] sm:$0xff]
        %v3394 = vld [vmem:[%s426 + $0x760] sm:$0xff]
        %v3395 = vld [vmem:[%s426 + $0x768] sm:$0xf]
        %v3396 = vld [vmem:[%s426 + $0x76c] sm:$0xff]
        %v3397 = vld [vmem:[%s426 + $0x774] sm:$0xff]
        %v3398 = vld [vmem:[%s426 + $0x77c] sm:$0xf]
        %v3399 = vld [vmem:[%s426 + $0x780] sm:$0xff]
        %v3400 = vld [vmem:[%s426 + $0x788] sm:$0xff]
        %v3401 = vld [vmem:[%s426 + $0x790] sm:$0xf]
        %v3402 = vld [vmem:[%s426 + $0x794] sm:$0xff]
        %v3403 = vld [vmem:[%s426 + $0x79c] sm:$0xff]
        %v3404 = vld [vmem:[%s426 + $0x7a4] sm:$0xf]
        %v3405 = vld [vmem:[%s426 + $0x7a8] sm:$0xff]
        %v3406 = vld [vmem:[%s426 + $0x7b0] sm:$0xff]
        %v3407 = vld [vmem:[%s426 + $0x7b8] sm:$0xf]
        %v3408 = vld [vmem:[%s426 + $0x7bc] sm:$0xff]
        %v3409 = vld [vmem:[%s426 + $0x7c4] sm:$0xff]
        %v3410 = vld [vmem:[%s426 + $0x7cc] sm:$0xf]
        %v3411 = vld [vmem:[%s426 + $0x7d0] sm:$0xff]
        %v3412 = vld [vmem:[%s426 + $0x7d8] sm:$0xff]
        %v3413 = vld [vmem:[%s426 + $0x7e0] sm:$0xf]
        %v3414 = vld [vmem:[%s426 + $0x7e4] sm:$0xff]
        %v3415 = vld [vmem:[%s426 + $0x7ec] sm:$0xff]
        %v3416 = vld [vmem:[%s426 + $0x7f4] sm:$0xf]
        %v3417 = vld [vmem:[%s426 + $0x7f8] sm:$0xff]
        %v3418 = vld [vmem:[%s426 + $0x800] sm:$0xff]
        %v3419 = vld [vmem:[%s426 + $0x808] sm:$0xf]
        %v3420 = vld [vmem:[%s426 + $0x80c] sm:$0xff]
        %v3421 = vld [vmem:[%s426 + $0x814] sm:$0xff]
        %v3422 = vld [vmem:[%s426 + $0x81c] sm:$0xf]
        %v3423 = vld [vmem:[%s426 + $0x820] sm:$0xff]
        %v3424 = vld [vmem:[%s426 + $0x828] sm:$0xff]
        %v3425 = vld [vmem:[%s426 + $0x830] sm:$0xf]
        %v3426 = vld [vmem:[%s426 + $0x834] sm:$0xff]
        %v3427 = vld [vmem:[%s426 + $0x83c] sm:$0xff]
        %v3428 = vld [vmem:[%s426 + $0x844] sm:$0xf]
        %v3429 = vld [vmem:[%s426 + $0x848] sm:$0xff]
        %v3430 = vld [vmem:[%s426 + $0x850] sm:$0xff]
        %v3431 = vld [vmem:[%s426 + $0x858] sm:$0xf]
        %v3432 = vld [vmem:[%s426 + $0x85c] sm:$0xff]
        %v3433 = vld [vmem:[%s426 + $0x864] sm:$0xff]
        %v3434 = vld [vmem:[%s426 + $0x86c] sm:$0xf]
        %v3435 = vld [vmem:[%s426 + $0x870] sm:$0xff]
        %v3436 = vld [vmem:[%s426 + $0x878] sm:$0xff]
        %v3437 = vld [vmem:[%s426 + $0x880] sm:$0xf]
        %v3438 = vld [vmem:[%s426 + $0x884] sm:$0xff]
        %v3439 = vld [vmem:[%s426 + $0x88c] sm:$0xff]
        %v3440 = vld [vmem:[%s426 + $0x894] sm:$0xf]
        %v3441 = vld [vmem:[%s426 + $0x898] sm:$0xff]
        %v3442 = vld [vmem:[%s426 + $0x8a0] sm:$0xff]
        %v3443 = vld [vmem:[%s426 + $0x8a8] sm:$0xf]
        %v3444 = vld [vmem:[%s426 + $0x8ac] sm:$0xff]
        %v3445 = vld [vmem:[%s426 + $0x8b4] sm:$0xff]
        %v3446 = vld [vmem:[%s426 + $0x8bc] sm:$0xf]
        %v3447 = vld [vmem:[%s426 + $0x8c0] sm:$0xff]
        %v3448 = vld [vmem:[%s426 + $0x8c8] sm:$0xff]
        %v3449 = vld [vmem:[%s426 + $0x8d0] sm:$0xf]
        %v3450 = vld [vmem:[%s426 + $0x8d4] sm:$0xff]
        %v3451 = vld [vmem:[%s426 + $0x8dc] sm:$0xff]
        %v3452 = vld [vmem:[%s426 + $0x8e4] sm:$0xf]
        %v3453 = vld [vmem:[%s426 + $0x8e8] sm:$0xff]
        %v3454 = vld [vmem:[%s426 + $0x8f0] sm:$0xff]
        %v3455 = vld [vmem:[%s426 + $0x8f8] sm:$0xf]
        %v3456 = vld [vmem:[%s426 + $0x8fc] sm:$0xff]
        %v3457 = vld [vmem:[%s426 + $0x904] sm:$0xff]
        %v3458 = vld [vmem:[%s426 + $0x90c] sm:$0xf]
        %v3459 = vld [vmem:[%s426 + $0x910] sm:$0xff]
        %v3460 = vld [vmem:[%s426 + $0x918] sm:$0xff]
        %v3461 = vld [vmem:[%s426 + $0x920] sm:$0xf]
        %v3462 = vld [vmem:[%s426 + $0x924] sm:$0xff]
        %v3463 = vld [vmem:[%s426 + $0x92c] sm:$0xff]
        %v3464 = vld [vmem:[%s426 + $0x934] sm:$0xf]
        %v3465 = vld [vmem:[%s426 + $0x938] sm:$0xff]
        %v3466 = vld [vmem:[%s426 + $0x940] sm:$0xff]
        %v3467 = vld [vmem:[%s426 + $0x948] sm:$0xf]
        %v3468 = vld [vmem:[%s426 + $0x94c] sm:$0xff]
        %v3469 = vld [vmem:[%s426 + $0x954] sm:$0xff]
        %v3470 = vld [vmem:[%s426 + $0x95c] sm:$0xf]
        %v3471 = vld [vmem:[%s426 + $0x960] sm:$0xff]
        %v3472 = vld [vmem:[%s426 + $0x968] sm:$0xff]
        %v3473 = vld [vmem:[%s426 + $0x970] sm:$0xf]
        %v3474 = vld [vmem:[%s426 + $0x974] sm:$0xff]
        %v3475 = vld [vmem:[%s426 + $0x97c] sm:$0xff]
        %v3476 = vld [vmem:[%s426 + $0x984] sm:$0xf]
        %v3477 = vld [vmem:[%s426 + $0x988] sm:$0xff]
        %v3478 = vld [vmem:[%s426 + $0x990] sm:$0xff]
        %v3479 = vld [vmem:[%s426 + $0x998] sm:$0xf]
        %v3480 = vld [vmem:[%s426 + $0x99c] sm:$0xff]
        %v3481 = vld [vmem:[%s426 + $0x9a4] sm:$0xff]
        %v3482 = vld [vmem:[%s426 + $0x9ac] sm:$0xf]
        %v3483 = vld [vmem:[%s426 + $0x9b0] sm:$0xff]
        %v3484 = vld [vmem:[%s426 + $0x9b8] sm:$0xff]
        %v3485 = vld [vmem:[%s426 + $0x9c0] sm:$0xf]
        %v3486 = vld [vmem:[%s426 + $0x9c4] sm:$0xff]
        %v3487 = vld [vmem:[%s426 + $0x9cc] sm:$0xff]
        %v3488 = vld [vmem:[%s426 + $0x9d4] sm:$0xf]
        %v3489 = vld [vmem:[%s426 + $0x9d8] sm:$0xff]
        %v3490 = vld [vmem:[%s426 + $0x9e0] sm:$0xff]
        %v3491 = vld [vmem:[%s426 + $0x9e8] sm:$0xf]
        %v3492 = vld [vmem:[%s426 + $0x9ec] sm:$0xff]
        %v3493 = vld [vmem:[%s426 + $0x9f4] sm:$0xff]
        %v3494 = vld [vmem:[%s426 + $0x9fc] sm:$0xf]
        %v3495 = vld [vmem:[%s436] sm:$0x1f]
        %v3497 = vperm.slane %v3495, 0
        %v3498 = vperm.slane %v3495, 1
        %v3499 = vperm.slane %v3495, 2
        %v3500 = vperm.slane %v3495, 3
        %v3501 = vperm.slane %v3495, 4
        %v3891 = vunpack.c.l.b16 %v3111
        %v3892 = vunpack.c.h.b16 %v3111
        %v3893 = vunpack.c.l.b16 %v3112
        %v3894 = vunpack.c.h.b16 %v3112
        %v3895 = vunpack.c.l.b16 %v3113
        %v3896 = vunpack.c.l.b16 %v3114
        %v3897 = vunpack.c.h.b16 %v3114
        %v3898 = vunpack.c.l.b16 %v3115
        %v3899 = vunpack.c.h.b16 %v3115
        %v3900 = vunpack.c.l.b16 %v3116
        %v3901 = vunpack.c.l.b16 %v3117
        %v3902 = vunpack.c.h.b16 %v3117
        %v3903 = vunpack.c.l.b16 %v3118
        %v3904 = vunpack.c.h.b16 %v3118
        %v3905 = vunpack.c.l.b16 %v3119
        %v3906 = vunpack.c.l.b16 %v3120
        %v3907 = vunpack.c.h.b16 %v3120
        %v3908 = vunpack.c.l.b16 %v3121
        %v3909 = vunpack.c.h.b16 %v3121
        %v3910 = vunpack.c.l.b16 %v3122
        %v3911 = vunpack.c.l.b16 %v3123
        %v3912 = vunpack.c.h.b16 %v3123
        %v3913 = vunpack.c.l.b16 %v3124
        %v3914 = vunpack.c.h.b16 %v3124
        %v3915 = vunpack.c.l.b16 %v3125
        %v3916 = vunpack.c.l.b16 %v3126
        %v3917 = vunpack.c.h.b16 %v3126
        %v3918 = vunpack.c.l.b16 %v3127
        %v3919 = vunpack.c.h.b16 %v3127
        %v3920 = vunpack.c.l.b16 %v3128
        %v3921 = vunpack.c.l.b16 %v3129
        %v3922 = vunpack.c.h.b16 %v3129
        %v3923 = vunpack.c.l.b16 %v3130
        %v3924 = vunpack.c.h.b16 %v3130
        %v3925 = vunpack.c.l.b16 %v3131
        %v3926 = vunpack.c.l.b16 %v3132
        %v3927 = vunpack.c.h.b16 %v3132
        %v3928 = vunpack.c.l.b16 %v3133
        %v3929 = vunpack.c.h.b16 %v3133
        %v3930 = vunpack.c.l.b16 %v3134
        %v3931 = vunpack.c.l.b16 %v3135
        %v3932 = vunpack.c.h.b16 %v3135
        %v3933 = vunpack.c.l.b16 %v3136
        %v3934 = vunpack.c.h.b16 %v3136
        %v3935 = vunpack.c.l.b16 %v3137
        %v3936 = vunpack.c.l.b16 %v3138
        %v3937 = vunpack.c.h.b16 %v3138
        %v3938 = vunpack.c.l.b16 %v3139
        %v3939 = vunpack.c.h.b16 %v3139
        %v3940 = vunpack.c.l.b16 %v3140
        %v3941 = vunpack.c.l.b16 %v3141
        %v3942 = vunpack.c.h.b16 %v3141
        %v3943 = vunpack.c.l.b16 %v3142
        %v3944 = vunpack.c.h.b16 %v3142
        %v3945 = vunpack.c.l.b16 %v3143
        %v3946 = vunpack.c.l.b16 %v3144
        %v3947 = vunpack.c.h.b16 %v3144
        %v3948 = vunpack.c.l.b16 %v3145
        %v3949 = vunpack.c.h.b16 %v3145
        %v3950 = vunpack.c.l.b16 %v3146
        %v3951 = vunpack.c.l.b16 %v3147
        %v3952 = vunpack.c.h.b16 %v3147
        %v3953 = vunpack.c.l.b16 %v3148
        %v3954 = vunpack.c.h.b16 %v3148
        %v3955 = vunpack.c.l.b16 %v3149
        %v3956 = vunpack.c.l.b16 %v3150
        %v3957 = vunpack.c.h.b16 %v3150
        %v3958 = vunpack.c.l.b16 %v3151
        %v3959 = vunpack.c.h.b16 %v3151
        %v3960 = vunpack.c.l.b16 %v3152
        %v3961 = vunpack.c.l.b16 %v3153
        %v3962 = vunpack.c.h.b16 %v3153
        %v3963 = vunpack.c.l.b16 %v3154
        %v3964 = vunpack.c.h.b16 %v3154
        %v3965 = vunpack.c.l.b16 %v3155
        %v3966 = vunpack.c.l.b16 %v3156
        %v3967 = vunpack.c.h.b16 %v3156
        %v3968 = vunpack.c.l.b16 %v3157
        %v3969 = vunpack.c.h.b16 %v3157
        %v3970 = vunpack.c.l.b16 %v3158
        %v3971 = vunpack.c.l.b16 %v3159
        %v3972 = vunpack.c.h.b16 %v3159
        %v3973 = vunpack.c.l.b16 %v3160
        %v3974 = vunpack.c.h.b16 %v3160
        %v3975 = vunpack.c.l.b16 %v3161
        %v3976 = vunpack.c.l.b16 %v3162
        %v3977 = vunpack.c.h.b16 %v3162
        %v3978 = vunpack.c.l.b16 %v3163
        %v3979 = vunpack.c.h.b16 %v3163
        %v3980 = vunpack.c.l.b16 %v3164
        %v3981 = vunpack.c.l.b16 %v3165
        %v3982 = vunpack.c.h.b16 %v3165
        %v3983 = vunpack.c.l.b16 %v3166
        %v3984 = vunpack.c.h.b16 %v3166
        %v3985 = vunpack.c.l.b16 %v3167
        %v3986 = vunpack.c.l.b16 %v3168
        %v3987 = vunpack.c.h.b16 %v3168
        %v3988 = vunpack.c.l.b16 %v3169
        %v3989 = vunpack.c.h.b16 %v3169
        %v3990 = vunpack.c.l.b16 %v3170
        %v3991 = vunpack.c.l.b16 %v3171
        %v3992 = vunpack.c.h.b16 %v3171
        %v3993 = vunpack.c.l.b16 %v3172
        %v3994 = vunpack.c.h.b16 %v3172
        %v3995 = vunpack.c.l.b16 %v3173
        %v3996 = vunpack.c.l.b16 %v3174
        %v3997 = vunpack.c.h.b16 %v3174
        %v3998 = vunpack.c.l.b16 %v3175
        %v3999 = vunpack.c.h.b16 %v3175
        %v4000 = vunpack.c.l.b16 %v3176
        %v4001 = vunpack.c.l.b16 %v3177
        %v4002 = vunpack.c.h.b16 %v3177
        %v4003 = vunpack.c.l.b16 %v3178
        %v4004 = vunpack.c.h.b16 %v3178
        %v4005 = vunpack.c.l.b16 %v3179
        %v4006 = vunpack.c.l.b16 %v3180
        %v4007 = vunpack.c.h.b16 %v3180
        %v4008 = vunpack.c.l.b16 %v3181
        %v4009 = vunpack.c.h.b16 %v3181
        %v4010 = vunpack.c.l.b16 %v3182
        %v4011 = vunpack.c.l.b16 %v3183
        %v4012 = vunpack.c.h.b16 %v3183
        %v4013 = vunpack.c.l.b16 %v3184
        %v4014 = vunpack.c.h.b16 %v3184
        %v4015 = vunpack.c.l.b16 %v3185
        %v4016 = vunpack.c.l.b16 %v3186
        %v4017 = vunpack.c.h.b16 %v3186
        %v4018 = vunpack.c.l.b16 %v3187
        %v4019 = vunpack.c.h.b16 %v3187
        %v4020 = vunpack.c.l.b16 %v3188
        %v4021 = vunpack.c.l.b16 %v3189
        %v4022 = vunpack.c.h.b16 %v3189
        %v4023 = vunpack.c.l.b16 %v3190
        %v4024 = vunpack.c.h.b16 %v3190
        %v4025 = vunpack.c.l.b16 %v3191
        %v4026 = vunpack.c.l.b16 %v3192
        %v4027 = vunpack.c.h.b16 %v3192
        %v4028 = vunpack.c.l.b16 %v3193
        %v4029 = vunpack.c.h.b16 %v3193
        %v4030 = vunpack.c.l.b16 %v3194
        %v4031 = vunpack.c.l.b16 %v3195
        %v4032 = vunpack.c.h.b16 %v3195
        %v4033 = vunpack.c.l.b16 %v3196
        %v4034 = vunpack.c.h.b16 %v3196
        %v4035 = vunpack.c.l.b16 %v3197
        %v4036 = vunpack.c.l.b16 %v3198
        %v4037 = vunpack.c.h.b16 %v3198
        %v4038 = vunpack.c.l.b16 %v3199
        %v4039 = vunpack.c.h.b16 %v3199
        %v4040 = vunpack.c.l.b16 %v3200
        %v4041 = vunpack.c.l.b16 %v3201
        %v4042 = vunpack.c.h.b16 %v3201
        %v4043 = vunpack.c.l.b16 %v3202
        %v4044 = vunpack.c.h.b16 %v3202
        %v4045 = vunpack.c.l.b16 %v3203
        %v4046 = vunpack.c.l.b16 %v3204
        %v4047 = vunpack.c.h.b16 %v3204
        %v4048 = vunpack.c.l.b16 %v3205
        %v4049 = vunpack.c.h.b16 %v3205
        %v4050 = vunpack.c.l.b16 %v3206
        %v4051 = vunpack.c.l.b16 %v3207
        %v4052 = vunpack.c.h.b16 %v3207
        %v4053 = vunpack.c.l.b16 %v3208
        %v4054 = vunpack.c.h.b16 %v3208
        %v4055 = vunpack.c.l.b16 %v3209
        %v4056 = vunpack.c.l.b16 %v3210
        %v4057 = vunpack.c.h.b16 %v3210
        %v4058 = vunpack.c.l.b16 %v3211
        %v4059 = vunpack.c.h.b16 %v3211
        %v4060 = vunpack.c.l.b16 %v3212
        %v4061 = vunpack.c.l.b16 %v3213
        %v4062 = vunpack.c.h.b16 %v3213
        %v4063 = vunpack.c.l.b16 %v3214
        %v4064 = vunpack.c.h.b16 %v3214
        %v4065 = vunpack.c.l.b16 %v3215
        %v4066 = vunpack.c.l.b16 %v3216
        %v4067 = vunpack.c.h.b16 %v3216
        %v4068 = vunpack.c.l.b16 %v3217
        %v4069 = vunpack.c.h.b16 %v3217
        %v4070 = vunpack.c.l.b16 %v3218
        %v4071 = vunpack.c.l.b16 %v3219
        %v4072 = vunpack.c.h.b16 %v3219
        %v4073 = vunpack.c.l.b16 %v3220
        %v4074 = vunpack.c.h.b16 %v3220
        %v4075 = vunpack.c.l.b16 %v3221
        %v4076 = vunpack.c.l.b16 %v3222
        %v4077 = vunpack.c.h.b16 %v3222
        %v4078 = vunpack.c.l.b16 %v3223
        %v4079 = vunpack.c.h.b16 %v3223
        %v4080 = vunpack.c.l.b16 %v3224
        %v4081 = vunpack.c.l.b16 %v3225
        %v4082 = vunpack.c.h.b16 %v3225
        %v4083 = vunpack.c.l.b16 %v3226
        %v4084 = vunpack.c.h.b16 %v3226
        %v4085 = vunpack.c.l.b16 %v3227
        %v4086 = vunpack.c.l.b16 %v3228
        %v4087 = vunpack.c.h.b16 %v3228
        %v4088 = vunpack.c.l.b16 %v3229
        %v4089 = vunpack.c.h.b16 %v3229
        %v4090 = vunpack.c.l.b16 %v3230
        %v4091 = vunpack.c.l.b16 %v3231
        %v4092 = vunpack.c.h.b16 %v3231
        %v4093 = vunpack.c.l.b16 %v3232
        %v4094 = vunpack.c.h.b16 %v3232
        %v4095 = vunpack.c.l.b16 %v3233
        %v4096 = vunpack.c.l.b16 %v3234
        %v4097 = vunpack.c.h.b16 %v3234
        %v4098 = vunpack.c.l.b16 %v3235
        %v4099 = vunpack.c.h.b16 %v3235
        %v4100 = vunpack.c.l.b16 %v3236
        %v4101 = vunpack.c.l.b16 %v3237
        %v4102 = vunpack.c.h.b16 %v3237
        %v4103 = vunpack.c.l.b16 %v3238
        %v4104 = vunpack.c.h.b16 %v3238
        %v4105 = vunpack.c.l.b16 %v3239
        %v4106 = vunpack.c.l.b16 %v3240
        %v4107 = vunpack.c.h.b16 %v3240
        %v4108 = vunpack.c.l.b16 %v3241
        %v4109 = vunpack.c.h.b16 %v3241
        %v4110 = vunpack.c.l.b16 %v3242
        %v4111 = vunpack.c.l.b16 %v3243
        %v4112 = vunpack.c.h.b16 %v3243
        %v4113 = vunpack.c.l.b16 %v3244
        %v4114 = vunpack.c.h.b16 %v3244
        %v4115 = vunpack.c.l.b16 %v3245
        %v4116 = vunpack.c.l.b16 %v3246
        %v4117 = vunpack.c.h.b16 %v3246
        %v4118 = vunpack.c.l.b16 %v3247
        %v4119 = vunpack.c.h.b16 %v3247
        %v4120 = vunpack.c.l.b16 %v3248
        %v4121 = vunpack.c.l.b16 %v3249
        %v4122 = vunpack.c.h.b16 %v3249
        %v4123 = vunpack.c.l.b16 %v3250
        %v4124 = vunpack.c.h.b16 %v3250
        %v4125 = vunpack.c.l.b16 %v3251
        %v4126 = vunpack.c.l.b16 %v3252
        %v4127 = vunpack.c.h.b16 %v3252
        %v4128 = vunpack.c.l.b16 %v3253
        %v4129 = vunpack.c.h.b16 %v3253
        %v4130 = vunpack.c.l.b16 %v3254
        %v4131 = vunpack.c.l.b16 %v3255
        %v4132 = vunpack.c.h.b16 %v3255
        %v4133 = vunpack.c.l.b16 %v3256
        %v4134 = vunpack.c.h.b16 %v3256
        %v4135 = vunpack.c.l.b16 %v3257
        %v4136 = vunpack.c.l.b16 %v3258
        %v4137 = vunpack.c.h.b16 %v3258
        %v4138 = vunpack.c.l.b16 %v3259
        %v4139 = vunpack.c.h.b16 %v3259
        %v4140 = vunpack.c.l.b16 %v3260
        %v4141 = vunpack.c.l.b16 %v3261
        %v4142 = vunpack.c.h.b16 %v3261
        %v4143 = vunpack.c.l.b16 %v3262
        %v4144 = vunpack.c.h.b16 %v3262
        %v4145 = vunpack.c.l.b16 %v3263
        %v4146 = vunpack.c.l.b16 %v3264
        %v4147 = vunpack.c.h.b16 %v3264
        %v4148 = vunpack.c.l.b16 %v3265
        %v4149 = vunpack.c.h.b16 %v3265
        %v4150 = vunpack.c.l.b16 %v3266
        %v4151 = vunpack.c.l.b16 %v3267
        %v4152 = vunpack.c.h.b16 %v3267
        %v4153 = vunpack.c.l.b16 %v3268
        %v4154 = vunpack.c.h.b16 %v3268
        %v4155 = vunpack.c.l.b16 %v3269
        %v4156 = vunpack.c.l.b16 %v3270
        %v4157 = vunpack.c.h.b16 %v3270
        %v4158 = vunpack.c.l.b16 %v3271
        %v4159 = vunpack.c.h.b16 %v3271
        %v4160 = vunpack.c.l.b16 %v3272
        %v4161 = vunpack.c.l.b16 %v3273
        %v4162 = vunpack.c.h.b16 %v3273
        %v4163 = vunpack.c.l.b16 %v3274
        %v4164 = vunpack.c.h.b16 %v3274
        %v4165 = vunpack.c.l.b16 %v3275
        %v4166 = vunpack.c.l.b16 %v3276
        %v4167 = vunpack.c.h.b16 %v3276
        %v4168 = vunpack.c.l.b16 %v3277
        %v4169 = vunpack.c.h.b16 %v3277
        %v4170 = vunpack.c.l.b16 %v3278
        %v4171 = vunpack.c.l.b16 %v3279
        %v4172 = vunpack.c.h.b16 %v3279
        %v4173 = vunpack.c.l.b16 %v3280
        %v4174 = vunpack.c.h.b16 %v3280
        %v4175 = vunpack.c.l.b16 %v3281
        %v4176 = vunpack.c.l.b16 %v3282
        %v4177 = vunpack.c.h.b16 %v3282
        %v4178 = vunpack.c.l.b16 %v3283
        %v4179 = vunpack.c.h.b16 %v3283
        %v4180 = vunpack.c.l.b16 %v3284
        %v4181 = vunpack.c.l.b16 %v3285
        %v4182 = vunpack.c.h.b16 %v3285
        %v4183 = vunpack.c.l.b16 %v3286
        %v4184 = vunpack.c.h.b16 %v3286
        %v4185 = vunpack.c.l.b16 %v3287
        %v4186 = vunpack.c.l.b16 %v3288
        %v4187 = vunpack.c.h.b16 %v3288
        %v4188 = vunpack.c.l.b16 %v3289
        %v4189 = vunpack.c.h.b16 %v3289
        %v4190 = vunpack.c.l.b16 %v3290
        %v4191 = vunpack.c.l.b16 %v3291
        %v4192 = vunpack.c.h.b16 %v3291
        %v4193 = vunpack.c.l.b16 %v3292
        %v4194 = vunpack.c.h.b16 %v3292
        %v4195 = vunpack.c.l.b16 %v3293
        %v4196 = vunpack.c.l.b16 %v3294
        %v4197 = vunpack.c.h.b16 %v3294
        %v4198 = vunpack.c.l.b16 %v3295
        %v4199 = vunpack.c.h.b16 %v3295
        %v4200 = vunpack.c.l.b16 %v3296
        %v4201 = vunpack.c.l.b16 %v3297
        %v4202 = vunpack.c.h.b16 %v3297
        %v4203 = vunpack.c.l.b16 %v3298
        %v4204 = vunpack.c.h.b16 %v3298
        %v4205 = vunpack.c.l.b16 %v3299
        %v4206 = vunpack.c.l.b16 %v3300
        %v4207 = vunpack.c.h.b16 %v3300
        %v4208 = vunpack.c.l.b16 %v3301
        %v4209 = vunpack.c.h.b16 %v3301
        %v4210 = vunpack.c.l.b16 %v3302
        %v4211 = vunpack.c.l.b16 %v3303
        %v4212 = vunpack.c.h.b16 %v3303
        %v4213 = vunpack.c.l.b16 %v3304
        %v4214 = vunpack.c.h.b16 %v3304
        %v4215 = vunpack.c.l.b16 %v3305
        %v4216 = vunpack.c.l.b16 %v3306
        %v4217 = vunpack.c.h.b16 %v3306
        %v4218 = vunpack.c.l.b16 %v3307
        %v4219 = vunpack.c.h.b16 %v3307
        %v4220 = vunpack.c.l.b16 %v3308
        %v4221 = vunpack.c.l.b16 %v3309
        %v4222 = vunpack.c.h.b16 %v3309
        %v4223 = vunpack.c.l.b16 %v3310
        %v4224 = vunpack.c.h.b16 %v3310
        %v4225 = vunpack.c.l.b16 %v3311
        %v4226 = vunpack.c.l.b16 %v3312
        %v4227 = vunpack.c.h.b16 %v3312
        %v4228 = vunpack.c.l.b16 %v3313
        %v4229 = vunpack.c.h.b16 %v3313
        %v4230 = vunpack.c.l.b16 %v3314
        %v4231 = vunpack.c.l.b16 %v3315
        %v4232 = vunpack.c.h.b16 %v3315
        %v4233 = vunpack.c.l.b16 %v3316
        %v4234 = vunpack.c.h.b16 %v3316
        %v4235 = vunpack.c.l.b16 %v3317
        %v4236 = vunpack.c.l.b16 %v3318
        %v4237 = vunpack.c.h.b16 %v3318
        %v4238 = vunpack.c.l.b16 %v3319
        %v4239 = vunpack.c.h.b16 %v3319
        %v4240 = vunpack.c.l.b16 %v3320
        %v4241 = vunpack.c.l.b16 %v3321
        %v4242 = vunpack.c.h.b16 %v3321
        %v4243 = vunpack.c.l.b16 %v3322
        %v4244 = vunpack.c.h.b16 %v3322
        %v4245 = vunpack.c.l.b16 %v3323
        %v4246 = vunpack.c.l.b16 %v3324
        %v4247 = vunpack.c.h.b16 %v3324
        %v4248 = vunpack.c.l.b16 %v3325
        %v4249 = vunpack.c.h.b16 %v3325
        %v4250 = vunpack.c.l.b16 %v3326
        %v4251 = vunpack.c.l.b16 %v3327
        %v4252 = vunpack.c.h.b16 %v3327
        %v4253 = vunpack.c.l.b16 %v3328
        %v4254 = vunpack.c.h.b16 %v3328
        %v4255 = vunpack.c.l.b16 %v3329
        %v4256 = vunpack.c.l.b16 %v3330
        %v4257 = vunpack.c.h.b16 %v3330
        %v4258 = vunpack.c.l.b16 %v3331
        %v4259 = vunpack.c.h.b16 %v3331
        %v4260 = vunpack.c.l.b16 %v3332
        %v4261 = vunpack.c.l.b16 %v3333
        %v4262 = vunpack.c.h.b16 %v3333
        %v4263 = vunpack.c.l.b16 %v3334
        %v4264 = vunpack.c.h.b16 %v3334
        %v4265 = vunpack.c.l.b16 %v3335
        %v4266 = vunpack.c.l.b16 %v3336
        %v4267 = vunpack.c.h.b16 %v3336
        %v4268 = vunpack.c.l.b16 %v3337
        %v4269 = vunpack.c.h.b16 %v3337
        %v4270 = vunpack.c.l.b16 %v3338
        %v4271 = vunpack.c.l.b16 %v3339
        %v4272 = vunpack.c.h.b16 %v3339
        %v4273 = vunpack.c.l.b16 %v3340
        %v4274 = vunpack.c.h.b16 %v3340
        %v4275 = vunpack.c.l.b16 %v3341
        %v4276 = vunpack.c.l.b16 %v3342
        %v4277 = vunpack.c.h.b16 %v3342
        %v4278 = vunpack.c.l.b16 %v3343
        %v4279 = vunpack.c.h.b16 %v3343
        %v4280 = vunpack.c.l.b16 %v3344
        %v4281 = vunpack.c.l.b16 %v3345
        %v4282 = vunpack.c.h.b16 %v3345
        %v4283 = vunpack.c.l.b16 %v3346
        %v4284 = vunpack.c.h.b16 %v3346
        %v4285 = vunpack.c.l.b16 %v3347
        %v4286 = vunpack.c.l.b16 %v3348
        %v4287 = vunpack.c.h.b16 %v3348
        %v4288 = vunpack.c.l.b16 %v3349
        %v4289 = vunpack.c.h.b16 %v3349
        %v4290 = vunpack.c.l.b16 %v3350
        %v4291 = vunpack.c.l.b16 %v3351
        %v4292 = vunpack.c.h.b16 %v3351
        %v4293 = vunpack.c.l.b16 %v3352
        %v4294 = vunpack.c.h.b16 %v3352
        %v4295 = vunpack.c.l.b16 %v3353
        %v4296 = vunpack.c.l.b16 %v3354
        %v4297 = vunpack.c.h.b16 %v3354
        %v4298 = vunpack.c.l.b16 %v3355
        %v4299 = vunpack.c.h.b16 %v3355
        %v4300 = vunpack.c.l.b16 %v3356
        %v4301 = vunpack.c.l.b16 %v3357
        %v4302 = vunpack.c.h.b16 %v3357
        %v4303 = vunpack.c.l.b16 %v3358
        %v4304 = vunpack.c.h.b16 %v3358
        %v4305 = vunpack.c.l.b16 %v3359
        %v4306 = vunpack.c.l.b16 %v3360
        %v4307 = vunpack.c.h.b16 %v3360
        %v4308 = vunpack.c.l.b16 %v3361
        %v4309 = vunpack.c.h.b16 %v3361
        %v4310 = vunpack.c.l.b16 %v3362
        %v4311 = vunpack.c.l.b16 %v3363
        %v4312 = vunpack.c.h.b16 %v3363
        %v4313 = vunpack.c.l.b16 %v3364
        %v4314 = vunpack.c.h.b16 %v3364
        %v4315 = vunpack.c.l.b16 %v3365
        %v4316 = vunpack.c.l.b16 %v3366
        %v4317 = vunpack.c.h.b16 %v3366
        %v4318 = vunpack.c.l.b16 %v3367
        %v4319 = vunpack.c.h.b16 %v3367
        %v4320 = vunpack.c.l.b16 %v3368
        %v4321 = vunpack.c.l.b16 %v3369
        %v4322 = vunpack.c.h.b16 %v3369
        %v4323 = vunpack.c.l.b16 %v3370
        %v4324 = vunpack.c.h.b16 %v3370
        %v4325 = vunpack.c.l.b16 %v3371
        %v4326 = vunpack.c.l.b16 %v3372
        %v4327 = vunpack.c.h.b16 %v3372
        %v4328 = vunpack.c.l.b16 %v3373
        %v4329 = vunpack.c.h.b16 %v3373
        %v4330 = vunpack.c.l.b16 %v3374
        %v4331 = vunpack.c.l.b16 %v3375
        %v4332 = vunpack.c.h.b16 %v3375
        %v4333 = vunpack.c.l.b16 %v3376
        %v4334 = vunpack.c.h.b16 %v3376
        %v4335 = vunpack.c.l.b16 %v3377
        %v4336 = vunpack.c.l.b16 %v3378
        %v4337 = vunpack.c.h.b16 %v3378
        %v4338 = vunpack.c.l.b16 %v3379
        %v4339 = vunpack.c.h.b16 %v3379
        %v4340 = vunpack.c.l.b16 %v3380
        %v4341 = vunpack.c.l.b16 %v3381
        %v4342 = vunpack.c.h.b16 %v3381
        %v4343 = vunpack.c.l.b16 %v3382
        %v4344 = vunpack.c.h.b16 %v3382
        %v4345 = vunpack.c.l.b16 %v3383
        %v4346 = vunpack.c.l.b16 %v3384
        %v4347 = vunpack.c.h.b16 %v3384
        %v4348 = vunpack.c.l.b16 %v3385
        %v4349 = vunpack.c.h.b16 %v3385
        %v4350 = vunpack.c.l.b16 %v3386
        %v4351 = vunpack.c.l.b16 %v3387
        %v4352 = vunpack.c.h.b16 %v3387
        %v4353 = vunpack.c.l.b16 %v3388
        %v4354 = vunpack.c.h.b16 %v3388
        %v4355 = vunpack.c.l.b16 %v3389
        %v4356 = vunpack.c.l.b16 %v3390
        %v4357 = vunpack.c.h.b16 %v3390
        %v4358 = vunpack.c.l.b16 %v3391
        %v4359 = vunpack.c.h.b16 %v3391
        %v4360 = vunpack.c.l.b16 %v3392
        %v4361 = vunpack.c.l.b16 %v3393
        %v4362 = vunpack.c.h.b16 %v3393
        %v4363 = vunpack.c.l.b16 %v3394
        %v4364 = vunpack.c.h.b16 %v3394
        %v4365 = vunpack.c.l.b16 %v3395
        %v4366 = vunpack.c.l.b16 %v3396
        %v4367 = vunpack.c.h.b16 %v3396
        %v4368 = vunpack.c.l.b16 %v3397
        %v4369 = vunpack.c.h.b16 %v3397
        %v4370 = vunpack.c.l.b16 %v3398
        %v4371 = vunpack.c.l.b16 %v3399
        %v4372 = vunpack.c.h.b16 %v3399
        %v4373 = vunpack.c.l.b16 %v3400
        %v4374 = vunpack.c.h.b16 %v3400
        %v4375 = vunpack.c.l.b16 %v3401
        %v4376 = vunpack.c.l.b16 %v3402
        %v4377 = vunpack.c.h.b16 %v3402
        %v4378 = vunpack.c.l.b16 %v3403
        %v4379 = vunpack.c.h.b16 %v3403
        %v4380 = vunpack.c.l.b16 %v3404
        %v4381 = vunpack.c.l.b16 %v3405
        %v4382 = vunpack.c.h.b16 %v3405
        %v4383 = vunpack.c.l.b16 %v3406
        %v4384 = vunpack.c.h.b16 %v3406
        %v4385 = vunpack.c.l.b16 %v3407
        %v4386 = vunpack.c.l.b16 %v3408
        %v4387 = vunpack.c.h.b16 %v3408
        %v4388 = vunpack.c.l.b16 %v3409
        %v4389 = vunpack.c.h.b16 %v3409
        %v4390 = vunpack.c.l.b16 %v3410
        %v4391 = vunpack.c.l.b16 %v3411
        %v4392 = vunpack.c.h.b16 %v3411
        %v4393 = vunpack.c.l.b16 %v3412
        %v4394 = vunpack.c.h.b16 %v3412
        %v4395 = vunpack.c.l.b16 %v3413
        %v4396 = vunpack.c.l.b16 %v3414
        %v4397 = vunpack.c.h.b16 %v3414
        %v4398 = vunpack.c.l.b16 %v3415
        %v4399 = vunpack.c.h.b16 %v3415
        %v4400 = vunpack.c.l.b16 %v3416
        %v4401 = vunpack.c.l.b16 %v3417
        %v4402 = vunpack.c.h.b16 %v3417
        %v4403 = vunpack.c.l.b16 %v3418
        %v4404 = vunpack.c.h.b16 %v3418
        %v4405 = vunpack.c.l.b16 %v3419
        %v4406 = vunpack.c.l.b16 %v3420
        %v4407 = vunpack.c.h.b16 %v3420
        %v4408 = vunpack.c.l.b16 %v3421
        %v4409 = vunpack.c.h.b16 %v3421
        %v4410 = vunpack.c.l.b16 %v3422
        %v4411 = vunpack.c.l.b16 %v3423
        %v4412 = vunpack.c.h.b16 %v3423
        %v4413 = vunpack.c.l.b16 %v3424
        %v4414 = vunpack.c.h.b16 %v3424
        %v4415 = vunpack.c.l.b16 %v3425
        %v4416 = vunpack.c.l.b16 %v3426
        %v4417 = vunpack.c.h.b16 %v3426
        %v4418 = vunpack.c.l.b16 %v3427
        %v4419 = vunpack.c.h.b16 %v3427
        %v4420 = vunpack.c.l.b16 %v3428
        %v4421 = vunpack.c.l.b16 %v3429
        %v4422 = vunpack.c.h.b16 %v3429
        %v4423 = vunpack.c.l.b16 %v3430
        %v4424 = vunpack.c.h.b16 %v3430
        %v4425 = vunpack.c.l.b16 %v3431
        %v4426 = vunpack.c.l.b16 %v3432
        %v4427 = vunpack.c.h.b16 %v3432
        %v4428 = vunpack.c.l.b16 %v3433
        %v4429 = vunpack.c.h.b16 %v3433
        %v4430 = vunpack.c.l.b16 %v3434
        %v4431 = vunpack.c.l.b16 %v3435
        %v4432 = vunpack.c.h.b16 %v3435
        %v4433 = vunpack.c.l.b16 %v3436
        %v4434 = vunpack.c.h.b16 %v3436
        %v4435 = vunpack.c.l.b16 %v3437
        %v4436 = vunpack.c.l.b16 %v3438
        %v4437 = vunpack.c.h.b16 %v3438
        %v4438 = vunpack.c.l.b16 %v3439
        %v4439 = vunpack.c.h.b16 %v3439
        %v4440 = vunpack.c.l.b16 %v3440
        %v4441 = vunpack.c.l.b16 %v3441
        %v4442 = vunpack.c.h.b16 %v3441
        %v4443 = vunpack.c.l.b16 %v3442
        %v4444 = vunpack.c.h.b16 %v3442
        %v4445 = vunpack.c.l.b16 %v3443
        %v4446 = vunpack.c.l.b16 %v3444
        %v4447 = vunpack.c.h.b16 %v3444
        %v4448 = vunpack.c.l.b16 %v3445
        %v4449 = vunpack.c.h.b16 %v3445
        %v4450 = vunpack.c.l.b16 %v3446
        %v4451 = vunpack.c.l.b16 %v3447
        %v4452 = vunpack.c.h.b16 %v3447
        %v4453 = vunpack.c.l.b16 %v3448
        %v4454 = vunpack.c.h.b16 %v3448
        %v4455 = vunpack.c.l.b16 %v3449
        %v4456 = vunpack.c.l.b16 %v3450
        %v4457 = vunpack.c.h.b16 %v3450
        %v4458 = vunpack.c.l.b16 %v3451
        %v4459 = vunpack.c.h.b16 %v3451
        %v4460 = vunpack.c.l.b16 %v3452
        %v4461 = vunpack.c.l.b16 %v3453
        %v4462 = vunpack.c.h.b16 %v3453
        %v4463 = vunpack.c.l.b16 %v3454
        %v4464 = vunpack.c.h.b16 %v3454
        %v4465 = vunpack.c.l.b16 %v3455
        %v4466 = vunpack.c.l.b16 %v3456
        %v4467 = vunpack.c.h.b16 %v3456
        %v4468 = vunpack.c.l.b16 %v3457
        %v4469 = vunpack.c.h.b16 %v3457
        %v4470 = vunpack.c.l.b16 %v3458
        %v4471 = vunpack.c.l.b16 %v3459
        %v4472 = vunpack.c.h.b16 %v3459
        %v4473 = vunpack.c.l.b16 %v3460
        %v4474 = vunpack.c.h.b16 %v3460
        %v4475 = vunpack.c.l.b16 %v3461
        %v4476 = vunpack.c.l.b16 %v3462
        %v4477 = vunpack.c.h.b16 %v3462
        %v4478 = vunpack.c.l.b16 %v3463
        %v4479 = vunpack.c.h.b16 %v3463
        %v4480 = vunpack.c.l.b16 %v3464
        %v4481 = vunpack.c.l.b16 %v3465
        %v4482 = vunpack.c.h.b16 %v3465
        %v4483 = vunpack.c.l.b16 %v3466
        %v4484 = vunpack.c.h.b16 %v3466
        %v4485 = vunpack.c.l.b16 %v3467
        %v4486 = vunpack.c.l.b16 %v3468
        %v4487 = vunpack.c.h.b16 %v3468
        %v4488 = vunpack.c.l.b16 %v3469
        %v4489 = vunpack.c.h.b16 %v3469
        %v4490 = vunpack.c.l.b16 %v3470
        %v4491 = vunpack.c.l.b16 %v3471
        %v4492 = vunpack.c.h.b16 %v3471
        %v4493 = vunpack.c.l.b16 %v3472
        %v4494 = vunpack.c.h.b16 %v3472
        %v4495 = vunpack.c.l.b16 %v3473
        %v4496 = vunpack.c.l.b16 %v3474
        %v4497 = vunpack.c.h.b16 %v3474
        %v4498 = vunpack.c.l.b16 %v3475
        %v4499 = vunpack.c.h.b16 %v3475
        %v4500 = vunpack.c.l.b16 %v3476
        %v4501 = vunpack.c.l.b16 %v3477
        %v4502 = vunpack.c.h.b16 %v3477
        %v4503 = vunpack.c.l.b16 %v3478
        %v4504 = vunpack.c.h.b16 %v3478
        %v4505 = vunpack.c.l.b16 %v3479
        %v4506 = vunpack.c.l.b16 %v3480
        %v4507 = vunpack.c.h.b16 %v3480
        %v4508 = vunpack.c.l.b16 %v3481
        %v4509 = vunpack.c.h.b16 %v3481
        %v4510 = vunpack.c.l.b16 %v3482
        %v4511 = vunpack.c.l.b16 %v3483
        %v4512 = vunpack.c.h.b16 %v3483
        %v4513 = vunpack.c.l.b16 %v3484
        %v4514 = vunpack.c.h.b16 %v3484
        %v4515 = vunpack.c.l.b16 %v3485
        %v4516 = vunpack.c.l.b16 %v3486
        %v4517 = vunpack.c.h.b16 %v3486
        %v4518 = vunpack.c.l.b16 %v3487
        %v4519 = vunpack.c.h.b16 %v3487
        %v4520 = vunpack.c.l.b16 %v3488
        %v4521 = vunpack.c.l.b16 %v3489
        %v4522 = vunpack.c.h.b16 %v3489
        %v4523 = vunpack.c.l.b16 %v3490
        %v4524 = vunpack.c.h.b16 %v3490
        %v4525 = vunpack.c.l.b16 %v3491
        %v4526 = vunpack.c.l.b16 %v3492
        %v4527 = vunpack.c.h.b16 %v3492
        %v4528 = vunpack.c.l.b16 %v3493
        %v4529 = vunpack.c.h.b16 %v3493
        %v4530 = vunpack.c.l.b16 %v3494
        %v4531 = vpack.c.b16 %v3896, %v3891
        %v4532 = vpack.c.b16 %v3897, %v3892
        %v4533 = vpack.c.b16 %v3898, %v3893
        %v4534 = vpack.c.b16 %v3899, %v3894
        %v4535 = vpack.c.b16 %v3900, %v3895
        %v4536 = vpack.c.b16 %v3906, %v3901
        %v4537 = vpack.c.b16 %v3907, %v3902
        %v4538 = vpack.c.b16 %v3908, %v3903
        %v4539 = vpack.c.b16 %v3909, %v3904
        %v4540 = vpack.c.b16 %v3910, %v3905
        %v4541 = vpack.c.b16 %v3916, %v3911
        %v4542 = vpack.c.b16 %v3917, %v3912
        %v4543 = vpack.c.b16 %v3918, %v3913
        %v4544 = vpack.c.b16 %v3919, %v3914
        %v4545 = vpack.c.b16 %v3920, %v3915
        %v4546 = vpack.c.b16 %v3926, %v3921
        %v4547 = vpack.c.b16 %v3927, %v3922
        %v4548 = vpack.c.b16 %v3928, %v3923
        %v4549 = vpack.c.b16 %v3929, %v3924
        %v4550 = vpack.c.b16 %v3930, %v3925
        %v4551 = vpack.c.b16 %v3936, %v3931
        %v4552 = vpack.c.b16 %v3937, %v3932
        %v4553 = vpack.c.b16 %v3938, %v3933
        %v4554 = vpack.c.b16 %v3939, %v3934
        %v4555 = vpack.c.b16 %v3940, %v3935
        %v4556 = vpack.c.b16 %v3946, %v3941
        %v4557 = vpack.c.b16 %v3947, %v3942
        %v4558 = vpack.c.b16 %v3948, %v3943
        %v4559 = vpack.c.b16 %v3949, %v3944
        %v4560 = vpack.c.b16 %v3950, %v3945
        %v4561 = vpack.c.b16 %v3956, %v3951
        %v4562 = vpack.c.b16 %v3957, %v3952
        %v4563 = vpack.c.b16 %v3958, %v3953
        %v4564 = vpack.c.b16 %v3959, %v3954
        %v4565 = vpack.c.b16 %v3960, %v3955
        %v4566 = vpack.c.b16 %v3966, %v3961
        %v4567 = vpack.c.b16 %v3967, %v3962
        %v4568 = vpack.c.b16 %v3968, %v3963
        %v4569 = vpack.c.b16 %v3969, %v3964
        %v4570 = vpack.c.b16 %v3970, %v3965
        %v4571 = vpack.c.b16 %v3976, %v3971
        %v4572 = vpack.c.b16 %v3977, %v3972
        %v4573 = vpack.c.b16 %v3978, %v3973
        %v4574 = vpack.c.b16 %v3979, %v3974
        %v4575 = vpack.c.b16 %v3980, %v3975
        %v4576 = vpack.c.b16 %v3986, %v3981
        %v4577 = vpack.c.b16 %v3987, %v3982
        %v4578 = vpack.c.b16 %v3988, %v3983
        %v4579 = vpack.c.b16 %v3989, %v3984
        %v4580 = vpack.c.b16 %v3990, %v3985
        %v4581 = vpack.c.b16 %v3996, %v3991
        %v4582 = vpack.c.b16 %v3997, %v3992
        %v4583 = vpack.c.b16 %v3998, %v3993
        %v4584 = vpack.c.b16 %v3999, %v3994
        %v4585 = vpack.c.b16 %v4000, %v3995
        %v4586 = vpack.c.b16 %v4006, %v4001
        %v4587 = vpack.c.b16 %v4007, %v4002
        %v4588 = vpack.c.b16 %v4008, %v4003
        %v4589 = vpack.c.b16 %v4009, %v4004
        %v4590 = vpack.c.b16 %v4010, %v4005
        %v4591 = vpack.c.b16 %v4016, %v4011
        %v4592 = vpack.c.b16 %v4017, %v4012
        %v4593 = vpack.c.b16 %v4018, %v4013
        %v4594 = vpack.c.b16 %v4019, %v4014
        %v4595 = vpack.c.b16 %v4020, %v4015
        %v4596 = vpack.c.b16 %v4026, %v4021
        %v4597 = vpack.c.b16 %v4027, %v4022
        %v4598 = vpack.c.b16 %v4028, %v4023
        %v4599 = vpack.c.b16 %v4029, %v4024
        %v4600 = vpack.c.b16 %v4030, %v4025
        %v4601 = vpack.c.b16 %v4036, %v4031
        %v4602 = vpack.c.b16 %v4037, %v4032
        %v4603 = vpack.c.b16 %v4038, %v4033
        %v4604 = vpack.c.b16 %v4039, %v4034
        %v4605 = vpack.c.b16 %v4040, %v4035
        %v4606 = vpack.c.b16 %v4046, %v4041
        %v4607 = vpack.c.b16 %v4047, %v4042
        %v4608 = vpack.c.b16 %v4048, %v4043
        %v4609 = vpack.c.b16 %v4049, %v4044
        %v4610 = vpack.c.b16 %v4050, %v4045
        %v4611 = vpack.c.b16 %v4056, %v4051
        %v4612 = vpack.c.b16 %v4057, %v4052
        %v4613 = vpack.c.b16 %v4058, %v4053
        %v4614 = vpack.c.b16 %v4059, %v4054
        %v4615 = vpack.c.b16 %v4060, %v4055
        %v4616 = vpack.c.b16 %v4066, %v4061
        %v4617 = vpack.c.b16 %v4067, %v4062
        %v4618 = vpack.c.b16 %v4068, %v4063
        %v4619 = vpack.c.b16 %v4069, %v4064
        %v4620 = vpack.c.b16 %v4070, %v4065
        %v4621 = vpack.c.b16 %v4076, %v4071
        %v4622 = vpack.c.b16 %v4077, %v4072
        %v4623 = vpack.c.b16 %v4078, %v4073
        %v4624 = vpack.c.b16 %v4079, %v4074
        %v4625 = vpack.c.b16 %v4080, %v4075
        %v4626 = vpack.c.b16 %v4086, %v4081
        %v4627 = vpack.c.b16 %v4087, %v4082
        %v4628 = vpack.c.b16 %v4088, %v4083
        %v4629 = vpack.c.b16 %v4089, %v4084
        %v4630 = vpack.c.b16 %v4090, %v4085
        %v4631 = vpack.c.b16 %v4096, %v4091
        %v4632 = vpack.c.b16 %v4097, %v4092
        %v4633 = vpack.c.b16 %v4098, %v4093
        %v4634 = vpack.c.b16 %v4099, %v4094
        %v4635 = vpack.c.b16 %v4100, %v4095
        %v4636 = vpack.c.b16 %v4106, %v4101
        %v4637 = vpack.c.b16 %v4107, %v4102
        %v4638 = vpack.c.b16 %v4108, %v4103
        %v4639 = vpack.c.b16 %v4109, %v4104
        %v4640 = vpack.c.b16 %v4110, %v4105
        %v4641 = vpack.c.b16 %v4116, %v4111
        %v4642 = vpack.c.b16 %v4117, %v4112
        %v4643 = vpack.c.b16 %v4118, %v4113
        %v4644 = vpack.c.b16 %v4119, %v4114
        %v4645 = vpack.c.b16 %v4120, %v4115
        %v4646 = vpack.c.b16 %v4126, %v4121
        %v4647 = vpack.c.b16 %v4127, %v4122
        %v4648 = vpack.c.b16 %v4128, %v4123
        %v4649 = vpack.c.b16 %v4129, %v4124
        %v4650 = vpack.c.b16 %v4130, %v4125
        %v4651 = vpack.c.b16 %v4136, %v4131
        %v4652 = vpack.c.b16 %v4137, %v4132
        %v4653 = vpack.c.b16 %v4138, %v4133
        %v4654 = vpack.c.b16 %v4139, %v4134
        %v4655 = vpack.c.b16 %v4140, %v4135
        %v4656 = vpack.c.b16 %v4146, %v4141
        %v4657 = vpack.c.b16 %v4147, %v4142
        %v4658 = vpack.c.b16 %v4148, %v4143
        %v4659 = vpack.c.b16 %v4149, %v4144
        %v4660 = vpack.c.b16 %v4150, %v4145
        %v4661 = vpack.c.b16 %v4156, %v4151
        %v4662 = vpack.c.b16 %v4157, %v4152
        %v4663 = vpack.c.b16 %v4158, %v4153
        %v4664 = vpack.c.b16 %v4159, %v4154
        %v4665 = vpack.c.b16 %v4160, %v4155
        %v4666 = vpack.c.b16 %v4166, %v4161
        %v4667 = vpack.c.b16 %v4167, %v4162
        %v4668 = vpack.c.b16 %v4168, %v4163
        %v4669 = vpack.c.b16 %v4169, %v4164
        %v4670 = vpack.c.b16 %v4170, %v4165
        %v4671 = vpack.c.b16 %v4176, %v4171
        %v4672 = vpack.c.b16 %v4177, %v4172
        %v4673 = vpack.c.b16 %v4178, %v4173
        %v4674 = vpack.c.b16 %v4179, %v4174
        %v4675 = vpack.c.b16 %v4180, %v4175
        %v4676 = vpack.c.b16 %v4186, %v4181
        %v4677 = vpack.c.b16 %v4187, %v4182
        %v4678 = vpack.c.b16 %v4188, %v4183
        %v4679 = vpack.c.b16 %v4189, %v4184
        %v4680 = vpack.c.b16 %v4190, %v4185
        %v4681 = vpack.c.b16 %v4196, %v4191
        %v4682 = vpack.c.b16 %v4197, %v4192
        %v4683 = vpack.c.b16 %v4198, %v4193
        %v4684 = vpack.c.b16 %v4199, %v4194
        %v4685 = vpack.c.b16 %v4200, %v4195
        %v4686 = vpack.c.b16 %v4206, %v4201
        %v4687 = vpack.c.b16 %v4207, %v4202
        %v4688 = vpack.c.b16 %v4208, %v4203
        %v4689 = vpack.c.b16 %v4209, %v4204
        %v4690 = vpack.c.b16 %v4210, %v4205
        %v4691 = vpack.c.b16 %v4216, %v4211
        %v4692 = vpack.c.b16 %v4217, %v4212
        %v4693 = vpack.c.b16 %v4218, %v4213
        %v4694 = vpack.c.b16 %v4219, %v4214
        %v4695 = vpack.c.b16 %v4220, %v4215
        %v4696 = vpack.c.b16 %v4226, %v4221
        %v4697 = vpack.c.b16 %v4227, %v4222
        %v4698 = vpack.c.b16 %v4228, %v4223
        %v4699 = vpack.c.b16 %v4229, %v4224
        %v4700 = vpack.c.b16 %v4230, %v4225
        %v4701 = vpack.c.b16 %v4236, %v4231
        %v4702 = vpack.c.b16 %v4237, %v4232
        %v4703 = vpack.c.b16 %v4238, %v4233
        %v4704 = vpack.c.b16 %v4239, %v4234
        %v4705 = vpack.c.b16 %v4240, %v4235
        %v4706 = vpack.c.b16 %v4246, %v4241
        %v4707 = vpack.c.b16 %v4247, %v4242
        %v4708 = vpack.c.b16 %v4248, %v4243
        %v4709 = vpack.c.b16 %v4249, %v4244
        %v4710 = vpack.c.b16 %v4250, %v4245
        %v4711 = vpack.c.b16 %v4256, %v4251
        %v4712 = vpack.c.b16 %v4257, %v4252
        %v4713 = vpack.c.b16 %v4258, %v4253
        %v4714 = vpack.c.b16 %v4259, %v4254
        %v4715 = vpack.c.b16 %v4260, %v4255
        %v4716 = vpack.c.b16 %v4266, %v4261
        %v4717 = vpack.c.b16 %v4267, %v4262
        %v4718 = vpack.c.b16 %v4268, %v4263
        %v4719 = vpack.c.b16 %v4269, %v4264
        %v4720 = vpack.c.b16 %v4270, %v4265
        %v4721 = vpack.c.b16 %v4276, %v4271
        %v4722 = vpack.c.b16 %v4277, %v4272
        %v4723 = vpack.c.b16 %v4278, %v4273
        %v4724 = vpack.c.b16 %v4279, %v4274
        %v4725 = vpack.c.b16 %v4280, %v4275
        %v4726 = vpack.c.b16 %v4286, %v4281
        %v4727 = vpack.c.b16 %v4287, %v4282
        %v4728 = vpack.c.b16 %v4288, %v4283
        %v4729 = vpack.c.b16 %v4289, %v4284
        %v4730 = vpack.c.b16 %v4290, %v4285
        %v4731 = vpack.c.b16 %v4296, %v4291
        %v4732 = vpack.c.b16 %v4297, %v4292
        %v4733 = vpack.c.b16 %v4298, %v4293
        %v4734 = vpack.c.b16 %v4299, %v4294
        %v4735 = vpack.c.b16 %v4300, %v4295
        %v4736 = vpack.c.b16 %v4306, %v4301
        %v4737 = vpack.c.b16 %v4307, %v4302
        %v4738 = vpack.c.b16 %v4308, %v4303
        %v4739 = vpack.c.b16 %v4309, %v4304
        %v4740 = vpack.c.b16 %v4310, %v4305
        %v4741 = vpack.c.b16 %v4316, %v4311
        %v4742 = vpack.c.b16 %v4317, %v4312
        %v4743 = vpack.c.b16 %v4318, %v4313
        %v4744 = vpack.c.b16 %v4319, %v4314
        %v4745 = vpack.c.b16 %v4320, %v4315
        %v4746 = vpack.c.b16 %v4326, %v4321
        %v4747 = vpack.c.b16 %v4327, %v4322
        %v4748 = vpack.c.b16 %v4328, %v4323
        %v4749 = vpack.c.b16 %v4329, %v4324
        %v4750 = vpack.c.b16 %v4330, %v4325
        %v4751 = vpack.c.b16 %v4336, %v4331
        %v4752 = vpack.c.b16 %v4337, %v4332
        %v4753 = vpack.c.b16 %v4338, %v4333
        %v4754 = vpack.c.b16 %v4339, %v4334
        %v4755 = vpack.c.b16 %v4340, %v4335
        %v4756 = vpack.c.b16 %v4346, %v4341
        %v4757 = vpack.c.b16 %v4347, %v4342
        %v4758 = vpack.c.b16 %v4348, %v4343
        %v4759 = vpack.c.b16 %v4349, %v4344
        %v4760 = vpack.c.b16 %v4350, %v4345
        %v4761 = vpack.c.b16 %v4356, %v4351
        %v4762 = vpack.c.b16 %v4357, %v4352
        %v4763 = vpack.c.b16 %v4358, %v4353
        %v4764 = vpack.c.b16 %v4359, %v4354
        %v4765 = vpack.c.b16 %v4360, %v4355
        %v4766 = vpack.c.b16 %v4366, %v4361
        %v4767 = vpack.c.b16 %v4367, %v4362
        %v4768 = vpack.c.b16 %v4368, %v4363
        %v4769 = vpack.c.b16 %v4369, %v4364
        %v4770 = vpack.c.b16 %v4370, %v4365
        %v4771 = vpack.c.b16 %v4376, %v4371
        %v4772 = vpack.c.b16 %v4377, %v4372
        %v4773 = vpack.c.b16 %v4378, %v4373
        %v4774 = vpack.c.b16 %v4379, %v4374
        %v4775 = vpack.c.b16 %v4380, %v4375
        %v4776 = vpack.c.b16 %v4386, %v4381
        %v4777 = vpack.c.b16 %v4387, %v4382
        %v4778 = vpack.c.b16 %v4388, %v4383
        %v4779 = vpack.c.b16 %v4389, %v4384
        %v4780 = vpack.c.b16 %v4390, %v4385
        %v4781 = vpack.c.b16 %v4396, %v4391
        %v4782 = vpack.c.b16 %v4397, %v4392
        %v4783 = vpack.c.b16 %v4398, %v4393
        %v4784 = vpack.c.b16 %v4399, %v4394
        %v4785 = vpack.c.b16 %v4400, %v4395
        %v4786 = vpack.c.b16 %v4406, %v4401
        %v4787 = vpack.c.b16 %v4407, %v4402
        %v4788 = vpack.c.b16 %v4408, %v4403
        %v4789 = vpack.c.b16 %v4409, %v4404
        %v4790 = vpack.c.b16 %v4410, %v4405
        %v4791 = vpack.c.b16 %v4416, %v4411
        %v4792 = vpack.c.b16 %v4417, %v4412
        %v4793 = vpack.c.b16 %v4418, %v4413
        %v4794 = vpack.c.b16 %v4419, %v4414
        %v4795 = vpack.c.b16 %v4420, %v4415
        %v4796 = vpack.c.b16 %v4426, %v4421
        %v4797 = vpack.c.b16 %v4427, %v4422
        %v4798 = vpack.c.b16 %v4428, %v4423
        %v4799 = vpack.c.b16 %v4429, %v4424
        %v4800 = vpack.c.b16 %v4430, %v4425
        %v4801 = vpack.c.b16 %v4436, %v4431
        %v4802 = vpack.c.b16 %v4437, %v4432
        %v4803 = vpack.c.b16 %v4438, %v4433
        %v4804 = vpack.c.b16 %v4439, %v4434
        %v4805 = vpack.c.b16 %v4440, %v4435
        %v4806 = vpack.c.b16 %v4446, %v4441
        %v4807 = vpack.c.b16 %v4447, %v4442
        %v4808 = vpack.c.b16 %v4448, %v4443
        %v4809 = vpack.c.b16 %v4449, %v4444
        %v4810 = vpack.c.b16 %v4450, %v4445
        %v4811 = vpack.c.b16 %v4456, %v4451
        %v4812 = vpack.c.b16 %v4457, %v4452
        %v4813 = vpack.c.b16 %v4458, %v4453
        %v4814 = vpack.c.b16 %v4459, %v4454
        %v4815 = vpack.c.b16 %v4460, %v4455
        %v4816 = vpack.c.b16 %v4466, %v4461
        %v4817 = vpack.c.b16 %v4467, %v4462
        %v4818 = vpack.c.b16 %v4468, %v4463
        %v4819 = vpack.c.b16 %v4469, %v4464
        %v4820 = vpack.c.b16 %v4470, %v4465
        %v4821 = vpack.c.b16 %v4476, %v4471
        %v4822 = vpack.c.b16 %v4477, %v4472
        %v4823 = vpack.c.b16 %v4478, %v4473
        %v4824 = vpack.c.b16 %v4479, %v4474
        %v4825 = vpack.c.b16 %v4480, %v4475
        %v4826 = vpack.c.b16 %v4486, %v4481
        %v4827 = vpack.c.b16 %v4487, %v4482
        %v4828 = vpack.c.b16 %v4488, %v4483
        %v4829 = vpack.c.b16 %v4489, %v4484
        %v4830 = vpack.c.b16 %v4490, %v4485
        %v4831 = vpack.c.b16 %v4496, %v4491
        %v4832 = vpack.c.b16 %v4497, %v4492
        %v4833 = vpack.c.b16 %v4498, %v4493
        %v4834 = vpack.c.b16 %v4499, %v4494
        %v4835 = vpack.c.b16 %v4500, %v4495
        %v4836 = vpack.c.b16 %v4506, %v4501
        %v4837 = vpack.c.b16 %v4507, %v4502
        %v4838 = vpack.c.b16 %v4508, %v4503
        %v4839 = vpack.c.b16 %v4509, %v4504
        %v4840 = vpack.c.b16 %v4510, %v4505
        %v4841 = vpack.c.b16 %v4516, %v4511
        %v4842 = vpack.c.b16 %v4517, %v4512
        %v4843 = vpack.c.b16 %v4518, %v4513
        %v4844 = vpack.c.b16 %v4519, %v4514
        %v4845 = vpack.c.b16 %v4520, %v4515
        %v4846 = vpack.c.b16 %v4526, %v4521
        %v4847 = vpack.c.b16 %v4527, %v4522
        %v4848 = vpack.c.b16 %v4528, %v4523
        %v4849 = vpack.c.b16 %v4529, %v4524
        %v4850 = vpack.c.b16 %v4530, %v4525
        %5171 = vmatpush.bf16.msra.mxu0 %v4566
        %5172 = vmatpush.bf16.msra.mxu0 %v4561
        %5173 = vmatpush.bf16.msra.mxu0 %v4556
        %5174 = vmatpush.bf16.msra.mxu0 %v4551
        %5175 = vmatpush.bf16.msra.mxu0 %v4546
        %5176 = vmatpush.bf16.msra.mxu0 %v4541
        %5177 = vmatpush.bf16.msra.mxu0 %v4536
        %5178 = vmatpush.bf16.msra.mxu0 %v4531
        %5179 = vmatmul.bf16.gmra.mxu0 %v3103
        %v5180 = vpop.f32.mrf.mxu0
        %v5181 = vadd.f32 %v3497, %v5180
        %v5182 = vpop.f32.mrf.mxu0
        %5183 = vdwg.mxu0
        %5184 = vmatpush.bf16.msra.mxu0 %v4606
        %5185 = vmatpush.bf16.msra.mxu0 %v4601
        %5186 = vmatpush.bf16.msra.mxu0 %v4596
        %5187 = vmatpush.bf16.msra.mxu0 %v4591
        %5188 = vmatpush.bf16.msra.mxu0 %v4586
        %5189 = vmatpush.bf16.msra.mxu0 %v4581
        %5190 = vmatpush.bf16.msra.mxu0 %v4576
        %5191 = vmatpush.bf16.msra.mxu0 %v4571
        %5192 = vmatmul.bf16.gmra.mxu0 %v3104
        %v5193 = vpop.f32.mrf.mxu0
        %v5194 = vadd.f32 %v5181, %v5193
        %v5195 = vpop.f32.mrf.mxu0
        %5196 = vdwg.mxu0
        %5197 = vmatpush.bf16.msra.mxu0 %v4646
        %5198 = vmatpush.bf16.msra.mxu0 %v4641
        %5199 = vmatpush.bf16.msra.mxu0 %v4636
        %5200 = vmatpush.bf16.msra.mxu0 %v4631
        %5201 = vmatpush.bf16.msra.mxu0 %v4626
        %5202 = vmatpush.bf16.msra.mxu0 %v4621
        %5203 = vmatpush.bf16.msra.mxu0 %v4616
        %5204 = vmatpush.bf16.msra.mxu0 %v4611
        %5205 = vmatmul.bf16.gmra.mxu0 %v3105
        %v5206 = vpop.f32.mrf.mxu0
        %v5207 = vadd.f32 %v5194, %v5206
        %v5208 = vpop.f32.mrf.mxu0
        %5209 = vdwg.mxu0
        %5210 = vmatpush.bf16.msra.mxu0 %v4686
        %5211 = vmatpush.bf16.msra.mxu0 %v4681
        %5212 = vmatpush.bf16.msra.mxu0 %v4676
        %5213 = vmatpush.bf16.msra.mxu0 %v4671
        %5214 = vmatpush.bf16.msra.mxu0 %v4666
        %5215 = vmatpush.bf16.msra.mxu0 %v4661
        %5216 = vmatpush.bf16.msra.mxu0 %v4656
        %5217 = vmatpush.bf16.msra.mxu0 %v4651
        %5218 = vmatmul.bf16.gmra.mxu0 %v3106
        %v5219 = vpop.f32.mrf.mxu0
        %v5220 = vadd.f32 %v5207, %v5219
        %v5221 = vpop.f32.mrf.mxu0
        %5222 = vdwg.mxu0
        %5223 = vmatpush.bf16.msra.mxu0 %v4726
        %5224 = vmatpush.bf16.msra.mxu0 %v4721
        %5225 = vmatpush.bf16.msra.mxu0 %v4716
        %5226 = vmatpush.bf16.msra.mxu0 %v4711
        %5227 = vmatpush.bf16.msra.mxu0 %v4706
        %5228 = vmatpush.bf16.msra.mxu0 %v4701
        %5229 = vmatpush.bf16.msra.mxu0 %v4696
        %5230 = vmatpush.bf16.msra.mxu0 %v4691
        %5231 = vmatmul.bf16.gmra.mxu0 %v3107
        %v5232 = vpop.f32.mrf.mxu0
        %v5233 = vadd.f32 %v5220, %v5232
        %v5234 = vpop.f32.mrf.mxu0
        %5235 = vdwg.mxu0
        %5236 = vmatpush.bf16.msra.mxu0 %v4766
        %5237 = vmatpush.bf16.msra.mxu0 %v4761
        %5238 = vmatpush.bf16.msra.mxu0 %v4756
        %5239 = vmatpush.bf16.msra.mxu0 %v4751
        %5240 = vmatpush.bf16.msra.mxu0 %v4746
        %5241 = vmatpush.bf16.msra.mxu0 %v4741
        %5242 = vmatpush.bf16.msra.mxu0 %v4736
        %5243 = vmatpush.bf16.msra.mxu0 %v4731
        %5244 = vmatmul.bf16.gmra.mxu0 %v3108
        %v5245 = vpop.f32.mrf.mxu0
        %v5246 = vadd.f32 %v5233, %v5245
        %v5247 = vpop.f32.mrf.mxu0
        %5248 = vdwg.mxu0
        %5249 = vmatpush.bf16.msra.mxu0 %v4806
        %5250 = vmatpush.bf16.msra.mxu0 %v4801
        %5251 = vmatpush.bf16.msra.mxu0 %v4796
        %5252 = vmatpush.bf16.msra.mxu0 %v4791
        %5253 = vmatpush.bf16.msra.mxu0 %v4786
        %5254 = vmatpush.bf16.msra.mxu0 %v4781
        %5255 = vmatpush.bf16.msra.mxu0 %v4776
        %5256 = vmatpush.bf16.msra.mxu0 %v4771
        %5257 = vmatmul.bf16.gmra.mxu0 %v3109
        %v5258 = vpop.f32.mrf.mxu0
        %v5259 = vadd.f32 %v5246, %v5258
        %v5260 = vpop.f32.mrf.mxu0
        %5261 = vdwg.mxu0
        %5262 = vmatpush.bf16.msra.mxu0 %v4846
        %5263 = vmatpush.bf16.msra.mxu0 %v4841
        %5264 = vmatpush.bf16.msra.mxu0 %v4836
        %5265 = vmatpush.bf16.msra.mxu0 %v4831
        %5266 = vmatpush.bf16.msra.mxu0 %v4826
        %5267 = vmatpush.bf16.msra.mxu0 %v4821
        %5268 = vmatpush.bf16.msra.mxu0 %v4816
        %5269 = vmatpush.bf16.msra.mxu0 %v4811
        %5270 = vmatmul.bf16.gmra.mxu0 %v3110
        %v5271 = vpop.f32.mrf.mxu0
        %v5272 = vadd.f32 %v5259, %v5271
        %v5273 = vpop.f32.mrf.mxu0
        %5274 = vdwg.mxu0
        %5275 = vmatpush.bf16.msra.mxu0 %v4567
        %5276 = vmatpush.bf16.msra.mxu0 %v4562
        %5277 = vmatpush.bf16.msra.mxu0 %v4557
        %5278 = vmatpush.bf16.msra.mxu0 %v4552
        %5279 = vmatpush.bf16.msra.mxu0 %v4547
        %5280 = vmatpush.bf16.msra.mxu0 %v4542
        %5281 = vmatpush.bf16.msra.mxu0 %v4537
        %5282 = vmatpush.bf16.msra.mxu0 %v4532
        %5283 = vmatmul.bf16.gmra.mxu0 %v3103
        %v5284 = vpop.f32.mrf.mxu0
        %v5285 = vadd.f32 %v3498, %v5284
        %v5286 = vpop.f32.mrf.mxu0
        %5287 = vdwg.mxu0
        %5288 = vmatpush.bf16.msra.mxu0 %v4607
        %5289 = vmatpush.bf16.msra.mxu0 %v4602
        %5290 = vmatpush.bf16.msra.mxu0 %v4597
        %5291 = vmatpush.bf16.msra.mxu0 %v4592
        %5292 = vmatpush.bf16.msra.mxu0 %v4587
        %5293 = vmatpush.bf16.msra.mxu0 %v4582
        %5294 = vmatpush.bf16.msra.mxu0 %v4577
        %5295 = vmatpush.bf16.msra.mxu0 %v4572
        %5296 = vmatmul.bf16.gmra.mxu0 %v3104
        %v5297 = vpop.f32.mrf.mxu0
        %v5298 = vadd.f32 %v5285, %v5297
        %v5299 = vpop.f32.mrf.mxu0
        %5300 = vdwg.mxu0
        %5301 = vmatpush.bf16.msra.mxu0 %v4647
        %5302 = vmatpush.bf16.msra.mxu0 %v4642
        %5303 = vmatpush.bf16.msra.mxu0 %v4637
        %5304 = vmatpush.bf16.msra.mxu0 %v4632
        %5305 = vmatpush.bf16.msra.mxu0 %v4627
        %5306 = vmatpush.bf16.msra.mxu0 %v4622
        %5307 = vmatpush.bf16.msra.mxu0 %v4617
        %5308 = vmatpush.bf16.msra.mxu0 %v4612
        %5309 = vmatmul.bf16.gmra.mxu0 %v3105
        %v5310 = vpop.f32.mrf.mxu0
        %v5311 = vadd.f32 %v5298, %v5310
        %v5312 = vpop.f32.mrf.mxu0
        %5313 = vdwg.mxu0
        %5314 = vmatpush.bf16.msra.mxu0 %v4687
        %5315 = vmatpush.bf16.msra.mxu0 %v4682
        %5316 = vmatpush.bf16.msra.mxu0 %v4677
        %5317 = vmatpush.bf16.msra.mxu0 %v4672
        %5318 = vmatpush.bf16.msra.mxu0 %v4667
        %5319 = vmatpush.bf16.msra.mxu0 %v4662
        %5320 = vmatpush.bf16.msra.mxu0 %v4657
        %5321 = vmatpush.bf16.msra.mxu0 %v4652
        %5322 = vmatmul.bf16.gmra.mxu0 %v3106
        %v5323 = vpop.f32.mrf.mxu0
        %v5324 = vadd.f32 %v5311, %v5323
        %v5325 = vpop.f32.mrf.mxu0
        %5326 = vdwg.mxu0
        %5327 = vmatpush.bf16.msra.mxu0 %v4727
        %5328 = vmatpush.bf16.msra.mxu0 %v4722
        %5329 = vmatpush.bf16.msra.mxu0 %v4717
        %5330 = vmatpush.bf16.msra.mxu0 %v4712
        %5331 = vmatpush.bf16.msra.mxu0 %v4707
        %5332 = vmatpush.bf16.msra.mxu0 %v4702
        %5333 = vmatpush.bf16.msra.mxu0 %v4697
        %5334 = vmatpush.bf16.msra.mxu0 %v4692
        %5335 = vmatmul.bf16.gmra.mxu0 %v3107
        %v5336 = vpop.f32.mrf.mxu0
        %v5337 = vadd.f32 %v5324, %v5336
        %v5338 = vpop.f32.mrf.mxu0
        %5339 = vdwg.mxu0
        %5340 = vmatpush.bf16.msra.mxu0 %v4767
        %5341 = vmatpush.bf16.msra.mxu0 %v4762
        %5342 = vmatpush.bf16.msra.mxu0 %v4757
        %5343 = vmatpush.bf16.msra.mxu0 %v4752
        %5344 = vmatpush.bf16.msra.mxu0 %v4747
        %5345 = vmatpush.bf16.msra.mxu0 %v4742
        %5346 = vmatpush.bf16.msra.mxu0 %v4737
        %5347 = vmatpush.bf16.msra.mxu0 %v4732
        %5348 = vmatmul.bf16.gmra.mxu0 %v3108
        %v5349 = vpop.f32.mrf.mxu0
        %v5350 = vadd.f32 %v5337, %v5349
        %v5351 = vpop.f32.mrf.mxu0
        %5352 = vdwg.mxu0
        %5353 = vmatpush.bf16.msra.mxu0 %v4807
        %5354 = vmatpush.bf16.msra.mxu0 %v4802
        %5355 = vmatpush.bf16.msra.mxu0 %v4797
        %5356 = vmatpush.bf16.msra.mxu0 %v4792
        %5357 = vmatpush.bf16.msra.mxu0 %v4787
        %5358 = vmatpush.bf16.msra.mxu0 %v4782
        %5359 = vmatpush.bf16.msra.mxu0 %v4777
        %5360 = vmatpush.bf16.msra.mxu0 %v4772
        %5361 = vmatmul.bf16.gmra.mxu0 %v3109
        %v5362 = vpop.f32.mrf.mxu0
        %v5363 = vadd.f32 %v5350, %v5362
        %v5364 = vpop.f32.mrf.mxu0
        %5365 = vdwg.mxu0
        %5366 = vmatpush.bf16.msra.mxu0 %v4847
        %5367 = vmatpush.bf16.msra.mxu0 %v4842
        %5368 = vmatpush.bf16.msra.mxu0 %v4837
        %5369 = vmatpush.bf16.msra.mxu0 %v4832
        %5370 = vmatpush.bf16.msra.mxu0 %v4827
        %5371 = vmatpush.bf16.msra.mxu0 %v4822
        %5372 = vmatpush.bf16.msra.mxu0 %v4817
        %5373 = vmatpush.bf16.msra.mxu0 %v4812
        %5374 = vmatmul.bf16.gmra.mxu0 %v3110
        %v5375 = vpop.f32.mrf.mxu0
        %v5376 = vadd.f32 %v5363, %v5375
        %v5377 = vpop.f32.mrf.mxu0
        %5378 = vdwg.mxu0
        %5379 = vmatpush.bf16.msra.mxu0 %v4568
        %5380 = vmatpush.bf16.msra.mxu0 %v4563
        %5381 = vmatpush.bf16.msra.mxu0 %v4558
        %5382 = vmatpush.bf16.msra.mxu0 %v4553
        %5383 = vmatpush.bf16.msra.mxu0 %v4548
        %5384 = vmatpush.bf16.msra.mxu0 %v4543
        %5385 = vmatpush.bf16.msra.mxu0 %v4538
        %5386 = vmatpush.bf16.msra.mxu0 %v4533
        %5387 = vmatmul.bf16.gmra.mxu0 %v3103
        %v5388 = vpop.f32.mrf.mxu0
        %v5389 = vadd.f32 %v3499, %v5388
        %v5390 = vpop.f32.mrf.mxu0
        %5391 = vdwg.mxu0
        %5392 = vmatpush.bf16.msra.mxu0 %v4608
        %5393 = vmatpush.bf16.msra.mxu0 %v4603
        %5394 = vmatpush.bf16.msra.mxu0 %v4598
        %5395 = vmatpush.bf16.msra.mxu0 %v4593
        %5396 = vmatpush.bf16.msra.mxu0 %v4588
        %5397 = vmatpush.bf16.msra.mxu0 %v4583
        %5398 = vmatpush.bf16.msra.mxu0 %v4578
        %5399 = vmatpush.bf16.msra.mxu0 %v4573
        %5400 = vmatmul.bf16.gmra.mxu0 %v3104
        %v5401 = vpop.f32.mrf.mxu0
        %v5402 = vadd.f32 %v5389, %v5401
        %v5403 = vpop.f32.mrf.mxu0
        %5404 = vdwg.mxu0
        %5405 = vmatpush.bf16.msra.mxu0 %v4648
        %5406 = vmatpush.bf16.msra.mxu0 %v4643
        %5407 = vmatpush.bf16.msra.mxu0 %v4638
        %5408 = vmatpush.bf16.msra.mxu0 %v4633
        %5409 = vmatpush.bf16.msra.mxu0 %v4628
        %5410 = vmatpush.bf16.msra.mxu0 %v4623
        %5411 = vmatpush.bf16.msra.mxu0 %v4618
        %5412 = vmatpush.bf16.msra.mxu0 %v4613
        %5413 = vmatmul.bf16.gmra.mxu0 %v3105
        %v5414 = vpop.f32.mrf.mxu0
        %v5415 = vadd.f32 %v5402, %v5414
        %v5416 = vpop.f32.mrf.mxu0
        %5417 = vdwg.mxu0
        %5418 = vmatpush.bf16.msra.mxu0 %v4688
        %5419 = vmatpush.bf16.msra.mxu0 %v4683
        %5420 = vmatpush.bf16.msra.mxu0 %v4678
        %5421 = vmatpush.bf16.msra.mxu0 %v4673
        %5422 = vmatpush.bf16.msra.mxu0 %v4668
        %5423 = vmatpush.bf16.msra.mxu0 %v4663
        %5424 = vmatpush.bf16.msra.mxu0 %v4658
        %5425 = vmatpush.bf16.msra.mxu0 %v4653
        %5426 = vmatmul.bf16.gmra.mxu0 %v3106
        %v5427 = vpop.f32.mrf.mxu0
        %v5428 = vadd.f32 %v5415, %v5427
        %v5429 = vpop.f32.mrf.mxu0
        %5430 = vdwg.mxu0
        %5431 = vmatpush.bf16.msra.mxu0 %v4728
        %5432 = vmatpush.bf16.msra.mxu0 %v4723
        %5433 = vmatpush.bf16.msra.mxu0 %v4718
        %5434 = vmatpush.bf16.msra.mxu0 %v4713
        %5435 = vmatpush.bf16.msra.mxu0 %v4708
        %5436 = vmatpush.bf16.msra.mxu0 %v4703
        %5437 = vmatpush.bf16.msra.mxu0 %v4698
        %5438 = vmatpush.bf16.msra.mxu0 %v4693
        %5439 = vmatmul.bf16.gmra.mxu0 %v3107
        %v5440 = vpop.f32.mrf.mxu0
        %v5441 = vadd.f32 %v5428, %v5440
        %v5442 = vpop.f32.mrf.mxu0
        %5443 = vdwg.mxu0
        %5444 = vmatpush.bf16.msra.mxu0 %v4768
        %5445 = vmatpush.bf16.msra.mxu0 %v4763
        %5446 = vmatpush.bf16.msra.mxu0 %v4758
        %5447 = vmatpush.bf16.msra.mxu0 %v4753
        %5448 = vmatpush.bf16.msra.mxu0 %v4748
        %5449 = vmatpush.bf16.msra.mxu0 %v4743
        %5450 = vmatpush.bf16.msra.mxu0 %v4738
        %5451 = vmatpush.bf16.msra.mxu0 %v4733
        %5452 = vmatmul.bf16.gmra.mxu0 %v3108
        %v5453 = vpop.f32.mrf.mxu0
        %v5454 = vadd.f32 %v5441, %v5453
        %v5455 = vpop.f32.mrf.mxu0
        %5456 = vdwg.mxu0
        %5457 = vmatpush.bf16.msra.mxu0 %v4808
        %5458 = vmatpush.bf16.msra.mxu0 %v4803
        %5459 = vmatpush.bf16.msra.mxu0 %v4798
        %5460 = vmatpush.bf16.msra.mxu0 %v4793
        %5461 = vmatpush.bf16.msra.mxu0 %v4788
        %5462 = vmatpush.bf16.msra.mxu0 %v4783
        %5463 = vmatpush.bf16.msra.mxu0 %v4778
        %5464 = vmatpush.bf16.msra.mxu0 %v4773
        %5465 = vmatmul.bf16.gmra.mxu0 %v3109
        %v5466 = vpop.f32.mrf.mxu0
        %v5467 = vadd.f32 %v5454, %v5466
        %v5468 = vpop.f32.mrf.mxu0
        %5469 = vdwg.mxu0
        %5470 = vmatpush.bf16.msra.mxu0 %v4848
        %5471 = vmatpush.bf16.msra.mxu0 %v4843
        %5472 = vmatpush.bf16.msra.mxu0 %v4838
        %5473 = vmatpush.bf16.msra.mxu0 %v4833
        %5474 = vmatpush.bf16.msra.mxu0 %v4828
        %5475 = vmatpush.bf16.msra.mxu0 %v4823
        %5476 = vmatpush.bf16.msra.mxu0 %v4818
        %5477 = vmatpush.bf16.msra.mxu0 %v4813
        %5478 = vmatmul.bf16.gmra.mxu0 %v3110
        %v5479 = vpop.f32.mrf.mxu0
        %v5480 = vadd.f32 %v5467, %v5479
        %v5481 = vpop.f32.mrf.mxu0
        %5482 = vdwg.mxu0
        %5483 = vmatpush.bf16.msra.mxu0 %v4569
        %5484 = vmatpush.bf16.msra.mxu0 %v4564
        %5485 = vmatpush.bf16.msra.mxu0 %v4559
        %5486 = vmatpush.bf16.msra.mxu0 %v4554
        %5487 = vmatpush.bf16.msra.mxu0 %v4549
        %5488 = vmatpush.bf16.msra.mxu0 %v4544
        %5489 = vmatpush.bf16.msra.mxu0 %v4539
        %5490 = vmatpush.bf16.msra.mxu0 %v4534
        %5491 = vmatmul.bf16.gmra.mxu0 %v3103
        %v5492 = vpop.f32.mrf.mxu0
        %v5493 = vadd.f32 %v3500, %v5492
        %v5494 = vpop.f32.mrf.mxu0
        %5495 = vdwg.mxu0
        %5496 = vmatpush.bf16.msra.mxu0 %v4609
        %5497 = vmatpush.bf16.msra.mxu0 %v4604
        %5498 = vmatpush.bf16.msra.mxu0 %v4599
        %5499 = vmatpush.bf16.msra.mxu0 %v4594
        %5500 = vmatpush.bf16.msra.mxu0 %v4589
        %5501 = vmatpush.bf16.msra.mxu0 %v4584
        %5502 = vmatpush.bf16.msra.mxu0 %v4579
        %5503 = vmatpush.bf16.msra.mxu0 %v4574
        %5504 = vmatmul.bf16.gmra.mxu0 %v3104
        %v5505 = vpop.f32.mrf.mxu0
        %v5506 = vadd.f32 %v5493, %v5505
        %v5507 = vpop.f32.mrf.mxu0
        %5508 = vdwg.mxu0
        %5509 = vmatpush.bf16.msra.mxu0 %v4649
        %5510 = vmatpush.bf16.msra.mxu0 %v4644
        %5511 = vmatpush.bf16.msra.mxu0 %v4639
        %5512 = vmatpush.bf16.msra.mxu0 %v4634
        %5513 = vmatpush.bf16.msra.mxu0 %v4629
        %5514 = vmatpush.bf16.msra.mxu0 %v4624
        %5515 = vmatpush.bf16.msra.mxu0 %v4619
        %5516 = vmatpush.bf16.msra.mxu0 %v4614
        %5517 = vmatmul.bf16.gmra.mxu0 %v3105
        %v5518 = vpop.f32.mrf.mxu0
        %v5519 = vadd.f32 %v5506, %v5518
        %v5520 = vpop.f32.mrf.mxu0
        %5521 = vdwg.mxu0
        %5522 = vmatpush.bf16.msra.mxu0 %v4689
        %5523 = vmatpush.bf16.msra.mxu0 %v4684
        %5524 = vmatpush.bf16.msra.mxu0 %v4679
        %5525 = vmatpush.bf16.msra.mxu0 %v4674
        %5526 = vmatpush.bf16.msra.mxu0 %v4669
        %5527 = vmatpush.bf16.msra.mxu0 %v4664
        %5528 = vmatpush.bf16.msra.mxu0 %v4659
        %5529 = vmatpush.bf16.msra.mxu0 %v4654
        %5530 = vmatmul.bf16.gmra.mxu0 %v3106
        %v5531 = vpop.f32.mrf.mxu0
        %v5532 = vadd.f32 %v5519, %v5531
        %v5533 = vpop.f32.mrf.mxu0
        %5534 = vdwg.mxu0
        %5535 = vmatpush.bf16.msra.mxu0 %v4729
        %5536 = vmatpush.bf16.msra.mxu0 %v4724
        %5537 = vmatpush.bf16.msra.mxu0 %v4719
        %5538 = vmatpush.bf16.msra.mxu0 %v4714
        %5539 = vmatpush.bf16.msra.mxu0 %v4709
        %5540 = vmatpush.bf16.msra.mxu0 %v4704
        %5541 = vmatpush.bf16.msra.mxu0 %v4699
        %5542 = vmatpush.bf16.msra.mxu0 %v4694
        %5543 = vmatmul.bf16.gmra.mxu0 %v3107
        %v5544 = vpop.f32.mrf.mxu0
        %v5545 = vadd.f32 %v5532, %v5544
        %v5546 = vpop.f32.mrf.mxu0
        %5547 = vdwg.mxu0
        %5548 = vmatpush.bf16.msra.mxu0 %v4769
        %5549 = vmatpush.bf16.msra.mxu0 %v4764
        %5550 = vmatpush.bf16.msra.mxu0 %v4759
        %5551 = vmatpush.bf16.msra.mxu0 %v4754
        %5552 = vmatpush.bf16.msra.mxu0 %v4749
        %5553 = vmatpush.bf16.msra.mxu0 %v4744
        %5554 = vmatpush.bf16.msra.mxu0 %v4739
        %5555 = vmatpush.bf16.msra.mxu0 %v4734
        %5556 = vmatmul.bf16.gmra.mxu0 %v3108
        %v5557 = vpop.f32.mrf.mxu0
        %v5558 = vadd.f32 %v5545, %v5557
        %v5559 = vpop.f32.mrf.mxu0
        %5560 = vdwg.mxu0
        %5561 = vmatpush.bf16.msra.mxu0 %v4809
        %5562 = vmatpush.bf16.msra.mxu0 %v4804
        %5563 = vmatpush.bf16.msra.mxu0 %v4799
        %5564 = vmatpush.bf16.msra.mxu0 %v4794
        %5565 = vmatpush.bf16.msra.mxu0 %v4789
        %5566 = vmatpush.bf16.msra.mxu0 %v4784
        %5567 = vmatpush.bf16.msra.mxu0 %v4779
        %5568 = vmatpush.bf16.msra.mxu0 %v4774
        %5569 = vmatmul.bf16.gmra.mxu0 %v3109
        %v5570 = vpop.f32.mrf.mxu0
        %v5571 = vadd.f32 %v5558, %v5570
        %v5572 = vpop.f32.mrf.mxu0
        %5573 = vdwg.mxu0
        %5574 = vmatpush.bf16.msra.mxu0 %v4849
        %5575 = vmatpush.bf16.msra.mxu0 %v4844
        %5576 = vmatpush.bf16.msra.mxu0 %v4839
        %5577 = vmatpush.bf16.msra.mxu0 %v4834
        %5578 = vmatpush.bf16.msra.mxu0 %v4829
        %5579 = vmatpush.bf16.msra.mxu0 %v4824
        %5580 = vmatpush.bf16.msra.mxu0 %v4819
        %5581 = vmatpush.bf16.msra.mxu0 %v4814
        %5582 = vmatmul.bf16.gmra.mxu0 %v3110
        %v5583 = vpop.f32.mrf.mxu0
        %v5584 = vadd.f32 %v5571, %v5583
        %v5585 = vpop.f32.mrf.mxu0
        %5586 = vdwg.mxu0
        %5587 = vmatpush.bf16.msra.mxu0 %v4570
        %5588 = vmatpush.bf16.msra.mxu0 %v4565
        %5589 = vmatpush.bf16.msra.mxu0 %v4560
        %5590 = vmatpush.bf16.msra.mxu0 %v4555
        %5591 = vmatpush.bf16.msra.mxu0 %v4550
        %5592 = vmatpush.bf16.msra.mxu0 %v4545
        %5593 = vmatpush.bf16.msra.mxu0 %v4540
        %5594 = vmatpush.bf16.msra.mxu0 %v4535
        %5595 = vmatmul.bf16.gmra.mxu0 %v3103
        %v5596 = vpop.f32.mrf.mxu0
        %v5597 = vadd.f32 %v3501, %v5596
        %v5598 = vpop.f32.mrf.mxu0
        %5599 = vdwg.mxu0
        %5600 = vmatpush.bf16.msra.mxu0 %v4610
        %5601 = vmatpush.bf16.msra.mxu0 %v4605
        %5602 = vmatpush.bf16.msra.mxu0 %v4600
        %5603 = vmatpush.bf16.msra.mxu0 %v4595
        %5604 = vmatpush.bf16.msra.mxu0 %v4590
        %5605 = vmatpush.bf16.msra.mxu0 %v4585
        %5606 = vmatpush.bf16.msra.mxu0 %v4580
        %5607 = vmatpush.bf16.msra.mxu0 %v4575
        %5608 = vmatmul.bf16.gmra.mxu0 %v3104
        %v5609 = vpop.f32.mrf.mxu0
        %v5610 = vadd.f32 %v5597, %v5609
        %v5611 = vpop.f32.mrf.mxu0
        %5612 = vdwg.mxu0
        %5613 = vmatpush.bf16.msra.mxu0 %v4650
        %5614 = vmatpush.bf16.msra.mxu0 %v4645
        %5615 = vmatpush.bf16.msra.mxu0 %v4640
        %5616 = vmatpush.bf16.msra.mxu0 %v4635
        %5617 = vmatpush.bf16.msra.mxu0 %v4630
        %5618 = vmatpush.bf16.msra.mxu0 %v4625
        %5619 = vmatpush.bf16.msra.mxu0 %v4620
        %5620 = vmatpush.bf16.msra.mxu0 %v4615
        %5621 = vmatmul.bf16.gmra.mxu0 %v3105
        %v5622 = vpop.f32.mrf.mxu0
        %v5623 = vadd.f32 %v5610, %v5622
        %v5624 = vpop.f32.mrf.mxu0
        %5625 = vdwg.mxu0
        %5626 = vmatpush.bf16.msra.mxu0 %v4690
        %5627 = vmatpush.bf16.msra.mxu0 %v4685
        %5628 = vmatpush.bf16.msra.mxu0 %v4680
        %5629 = vmatpush.bf16.msra.mxu0 %v4675
        %5630 = vmatpush.bf16.msra.mxu0 %v4670
        %5631 = vmatpush.bf16.msra.mxu0 %v4665
        %5632 = vmatpush.bf16.msra.mxu0 %v4660
        %5633 = vmatpush.bf16.msra.mxu0 %v4655
        %5634 = vmatmul.bf16.gmra.mxu0 %v3106
        %v5635 = vpop.f32.mrf.mxu0
        %v5636 = vadd.f32 %v5623, %v5635
        %v5637 = vpop.f32.mrf.mxu0
        %5638 = vdwg.mxu0
        %5639 = vmatpush.bf16.msra.mxu0 %v4730
        %5640 = vmatpush.bf16.msra.mxu0 %v4725
        %5641 = vmatpush.bf16.msra.mxu0 %v4720
        %5642 = vmatpush.bf16.msra.mxu0 %v4715
        %5643 = vmatpush.bf16.msra.mxu0 %v4710
        %5644 = vmatpush.bf16.msra.mxu0 %v4705
        %5645 = vmatpush.bf16.msra.mxu0 %v4700
        %5646 = vmatpush.bf16.msra.mxu0 %v4695
        %5647 = vmatmul.bf16.gmra.mxu0 %v3107
        %v5648 = vpop.f32.mrf.mxu0
        %v5649 = vadd.f32 %v5636, %v5648
        %v5650 = vpop.f32.mrf.mxu0
        %5651 = vdwg.mxu0
        %5652 = vmatpush.bf16.msra.mxu0 %v4770
        %5653 = vmatpush.bf16.msra.mxu0 %v4765
        %5654 = vmatpush.bf16.msra.mxu0 %v4760
        %5655 = vmatpush.bf16.msra.mxu0 %v4755
        %5656 = vmatpush.bf16.msra.mxu0 %v4750
        %5657 = vmatpush.bf16.msra.mxu0 %v4745
        %5658 = vmatpush.bf16.msra.mxu0 %v4740
        %5659 = vmatpush.bf16.msra.mxu0 %v4735
        %5660 = vmatmul.bf16.gmra.mxu0 %v3108
        %v5661 = vpop.f32.mrf.mxu0
        %v5662 = vadd.f32 %v5649, %v5661
        %v5663 = vpop.f32.mrf.mxu0
        %5664 = vdwg.mxu0
        %5665 = vmatpush.bf16.msra.mxu0 %v4810
        %5666 = vmatpush.bf16.msra.mxu0 %v4805
        %5667 = vmatpush.bf16.msra.mxu0 %v4800
        %5668 = vmatpush.bf16.msra.mxu0 %v4795
        %5669 = vmatpush.bf16.msra.mxu0 %v4790
        %5670 = vmatpush.bf16.msra.mxu0 %v4785
        %5671 = vmatpush.bf16.msra.mxu0 %v4780
        %5672 = vmatpush.bf16.msra.mxu0 %v4775
        %5673 = vmatmul.bf16.gmra.mxu0 %v3109
        %v5674 = vpop.f32.mrf.mxu0
        %v5675 = vadd.f32 %v5662, %v5674
        %v5676 = vpop.f32.mrf.mxu0
        %5677 = vdwg.mxu0
        %5678 = vmatpush.bf16.msra.mxu0 %v4850
        %5679 = vmatpush.bf16.msra.mxu0 %v4845
        %5680 = vmatpush.bf16.msra.mxu0 %v4840
        %5681 = vmatpush.bf16.msra.mxu0 %v4835
        %5682 = vmatpush.bf16.msra.mxu0 %v4830
        %5683 = vmatpush.bf16.msra.mxu0 %v4825
        %5684 = vmatpush.bf16.msra.mxu0 %v4820
        %5685 = vmatpush.bf16.msra.mxu0 %v4815
        %5686 = vmatmul.bf16.gmra.mxu0 %v3110
        %v5687 = vpop.f32.mrf.mxu0
        %v5688 = vadd.f32 %v5675, %v5687
        %v5689 = vpop.f32.mrf.mxu0
        %5690 = vdwg.mxu0
        %v5691 = vtanh.pop %v5272
        %v5692 = vtanh.pop %v5376
        %v5693 = vtanh.pop %v5480
        %v5694 = vtanh.pop %v5584
        %v5695 = vtanh.pop %v5688
        %5696 = vst [vmem:[%s483] sm:$0xff] %v5691
        %5697 = vst [vmem:[%s483 + $0x8] sm:$0xff] %v5692
        %5698 = vst [vmem:[%s483 + $0x10] sm:$0xff] %v5693
        %5699 = vst [vmem:[%s483 + $0x18] sm:$0xff] %v5694
        %5700 = vst [vmem:[%s483 + $0x20] sm:$0xff] %v5695
        %s5701 = smul.u32 5, %s24
        %p5702 = scmp.lt.s32.totalorder %s5701, 24
        %s5703 = scalar_select %p5702, %s5701, 24
        %s5704 = smul.addr %s5703, 8
        %s5705 = scalar_lea.vmem %s9, %s5704
        // Predicated region
        $region89: #{generator_forward.1} parent=55 // pred_check
          %p5706 = pneg %p241
        $region90: #{generator_forward.1} parent=55 // pred_check_branch
          %5708 = sbr.rel (%p5706) target = $region92
        $region91: #{generator_forward.1} parent=55 // pred_region
          %s5709 = smul.u32 5, %s24
        $region92: #{generator_forward.1} parent=55 // pred_fallthru
          _
      $region56: #{generator_forward.1} parent=5 // pred_fallthru
        _
      %p5710 = scmp.le.s32.totalorder 2, %s19
      // Predicated region
      $region93: #{generator_forward.1} parent=5 // pred_check
        %p5711 = pneg %p5710
      $region94: #{generator_forward.1} parent=5 // pred_check_branch
        %5713 = sbr.rel (%p5711) target = $region96
      $region95: #{generator_forward.1} parent=5 // pred_region
        %s5714 = ssub.s32 %s19, 2
        // Predicated region
        $region97: #{generator_forward.1} parent=95 // pred_check
          %p5715 = pneg %p247
        $region98: #{generator_forward.1} parent=95 // pred_check_branch
          %5717 = sbr.rel (%p5715) target = $region100
        $region99: #{generator_forward.1} parent=95 // pred_region
          %s5718 = smul.u32 5, %s25
          %p5719 = scmp.lt.s32.totalorder %s5718, 24
          %s5720 = scalar_select %p5719, %s5718, 24
          %s5721 = smul.addr %s5720, 8
          %s5722 = scalar_lea.vmem %s9, %s5721
        $region100: #{generator_forward.1} parent=95 // pred_fallthru
          _
      $region96: #{generator_forward.1} parent=5 // pred_fallthru
        _
    $region6: #{generator_forward.1} parent=1 // loop_footer
      %s23 = sadd.s32 1, %s19
    $region7: #{generator_forward.1} parent=1 // loop_footer_branch
      %18 = sbr.rel target = $region3
    $region8: #{generator_forward.1} parent=1 // loop_exit
      _
    %5723 = vsyncpa [#allocation3], 1
    %s5724 = scalar_lea.sflag [#allocation3], 1
    %5725 = vsyncpa %s5724, 1
    %5726 = vsyncpa [#allocation5], 1
    %5727 = vsyncpa [#allocation8], 1
    %5728 = vsyncpa [#allocation11], 1

</llo_original>
